<compile_context>
chip_gen: v7x
topology: tpu7x:2x2x1
jax: 0.10.0
libtpu: 0.0.40
codegen_flags: <defaults>
</compile_context>

<pallas_src>
import functools

import jax
import jax.numpy as jnp
import numpy as np
from jax.experimental import pallas as pl
from jax.experimental.pallas import tpu as pltpu

LANE = 128
SUBLANE = 8
_I32 = 4


def _silu(x):
    return x * jax.nn.sigmoid(x)


def _round_up(x, m):
    return ((x + m - 1) // m) * m


def _pad2d(x, rows, cols, fill=0):
    r, c = x.shape
    return jnp.pad(x, ((0, rows - r), (0, cols - c)), constant_values=fill)


# --------------------------------------------------------------------------- #
# Kernels
# --------------------------------------------------------------------------- #
def _edge_kernel(row_s_ref, row_c_ref, col_c_ref, attr_ref, h_ref,
                 w1s_ref, w1t_ref, w1a_ref, b1_ref, w2_ref, b2_ref,
                 aggp_ref, lane_iota_ref, sub_iota_ref, acc_ref):
    """One edge tile: in-kernel gather -> edge MLP -> segment-sum accumulate."""
    s = pl.program_id(1)
    cdt = h_ref.dtype                       # MXU operand dtype; accumulate in f32

    @pl.when(s == 0)
    def _init():
        acc_ref[...] = jnp.zeros_like(acc_ref)
        lane_iota_ref[...] = jax.lax.broadcasted_iota(jnp.int32, lane_iota_ref.shape, 1)
        sub_iota_ref[...] = jax.lax.broadcasted_iota(jnp.int32, sub_iota_ref.shape, 0)

    # ---- gather h[row], h[col] on the MXU via one-hot matmuls ----
    # Padded edges carry row/col = -1 -> all-zero one-hot rows -> gathered h = 0.
    oh_rowT = (lane_iota_ref[...] == row_c_ref[...]).astype(cdt)      # [TE, Np]
    oh_colT = (lane_iota_ref[...] == col_c_ref[...]).astype(cdt)      # [TE, Np]
    h_all = h_ref[...]
    h_row = jnp.dot(oh_rowT, h_all, preferred_element_type=jnp.float32)   # [TE, Fp]
    h_col = jnp.dot(oh_colT, h_all, preferred_element_type=jnp.float32)   # [TE, Fp]

    # ---- edge MLP: concat([h_row, h_col, attr]) @ W1 split into 3 matmuls ----
    x = (jnp.dot(h_row.astype(cdt), w1s_ref[...], preferred_element_type=jnp.float32)
         + jnp.dot(h_col.astype(cdt), w1t_ref[...], preferred_element_type=jnp.float32)
         + jnp.dot(attr_ref[...], w1a_ref[...], preferred_element_type=jnp.float32)
         + b1_ref[...])
    x = _silu(x)
    x = jnp.dot(x.astype(cdt), w2_ref[...], preferred_element_type=jnp.float32) + b2_ref[...]
    edge_feat = _silu(x)                                              # [TE, Hp] f32

    # ---- unsorted_segment_sum(edge_feat, row) via one-hot matmul ----
    oh_row = (sub_iota_ref[...] == row_s_ref[...]).astype(cdt)        # [Np, TE]
    acc_ref[...] += jnp.dot(oh_row, edge_feat.astype(cdt),
                            preferred_element_type=jnp.float32)

    @pl.when(s == pl.num_programs(1) - 1)
    def _store():
        aggp_ref[...] = acc_ref[...]        # per-chunk partial aggregation


def _node_kernel(aggp_ref, h_ref, w3h_ref, w3a_ref, b3_ref, w4_ref, b4_ref,
                 out_ref, *, num_chunks, n_rows):
    """Sum per-chunk partial aggregations, then run the node MLP."""
    cdt = h_ref.dtype
    agg = aggp_ref[pl.ds(0, n_rows), :]
    for c in range(1, num_chunks):
        agg = agg + aggp_ref[pl.ds(c * n_rows, n_rows), :]
    # concat([h, agg], 1) @ W3 == h @ W3[:F] + agg @ W3[F:]
    y = (jnp.dot(h_ref[...], w3h_ref[...], preferred_element_type=jnp.float32)
         + jnp.dot(agg.astype(cdt), w3a_ref[...], preferred_element_type=jnp.float32)
         + b3_ref[...])
    y = _silu(y)
    y = jnp.dot(y.astype(cdt), w4_ref[...], preferred_element_type=jnp.float32) + b4_ref[...]
    out_ref[...] = y.astype(out_ref.dtype)


# --------------------------------------------------------------------------- #
# VMEM sizing helpers
# --------------------------------------------------------------------------- #
def _edge_vmem_bytes(te, n_p, f_p, h_p, d_p, cbytes):
    """Rough per-call VMEM footprint of the edge kernel (buffers+scratch+temps)."""
    streamed = 2 * (3 * te * _I32 + te * d_p * cbytes)                    # double-buffered streams
    resident = 2 * cbytes * (n_p * f_p + 2 * f_p * h_p + d_p * h_p + h_p * h_p) \
        + 2 * 4 * 2 * h_p                                                 # weights/h (+biases f32)
    out_blk = 2 * n_p * h_p * 4
    scratch = 2 * te * n_p * _I32 + n_p * h_p * 4
    temps = te * (3 * n_p * cbytes + 2 * f_p * 4 + 3 * h_p * 4)
    return streamed + resident + out_blk + scratch + temps


# --------------------------------------------------------------------------- #
# Wrapper
# --------------------------------------------------------------------------- #
def gn_layer_forward(h, edge_index, edge_attr, params, *,
                     max_edge_tile=2048, num_edge_chunks=2,
                     compute_dtype=jnp.bfloat16):
    """Pallas implementation of GNLayer.forward(h, edge_index, edge_attr)."""
    row = edge_index[0].astype(jnp.int32)
    col = edge_index[1].astype(jnp.int32)
    n, f = h.shape
    e = int(row.shape[0])
    d = edge_attr.shape[1]
    hidden = params["w2"].shape[0]
    out_nf = params["w4"].shape[1]

    # ---- lane-aligned padded sizes (node dim is a contraction dim -> 128) ----
    f_p = _round_up(f, LANE)
    h_p = _round_up(hidden, LANE)
    o_p = _round_up(out_nf, LANE)
    d_p = _round_up(d, LANE)
    n_p = _round_up(n, LANE)
    cbytes = jnp.dtype(compute_dtype).itemsize

    # ---- VMEM-aware edge-tile selection (v7x: 64 MiB/TC, v5e/v6e: 128 MiB) ----
    try:
        vmem_cap = int(pltpu.get_tpu_info().vmem_capacity_bytes)
    except Exception:
        vmem_cap = 64 * 1024 * 1024                      # conservative (v7x)
    budget = vmem_cap // 2
    te = max(256, (min(max_edge_tile, _round_up(e, 256)) // 256) * 256)
    while te > 256 and _edge_vmem_bytes(te, n_p, f_p, h_p, d_p, cbytes) > budget:
        te -= 256
    n_tiles = max(1, -(-e // te))
    n_chunks = max(1, min(num_edge_chunks, n_tiles))     # >1 -> both TCs on v7x
    steps = -(-n_tiles // n_chunks)
    e_pad = n_chunks * steps * te
    vmem_limit = int(min(
        max(1.4 * _edge_vmem_bytes(te, n_p, f_p, h_p, d_p, cbytes) + (4 << 20),
            32 * 1024 * 1024),
        0.85 * vmem_cap))

    # ---- wrapper glue: padded index streams, edge attrs, params ----
    row_full = jnp.pad(row, (0, e_pad - e), constant_values=-1)
    col_full = jnp.pad(col, (0, e_pad - e), constant_values=-1)
    row_s = row_full.reshape(1, e_pad)                   # segment-sum layout
    row_c = row_full.reshape(e_pad, 1)                   # gather layout
    col_c = col_full.reshape(e_pad, 1)
    attr_p = _pad2d(edge_attr.astype(compute_dtype), e_pad, d_p)
    h_pad = _pad2d(h.astype(compute_dtype), n_p, f_p)

    w1, w3 = params["w1"], params["w3"]
    wpad = lambda w, r, c: _pad2d(w.astype(compute_dtype), r, c)
    w1s = wpad(w1[:f], f_p, h_p)                         # multiplies h[row]
    w1t = wpad(w1[f:2 * f], f_p, h_p)                    # multiplies h[col]
    w1a = wpad(w1[2 * f:], d_p, h_p)                     # multiplies edge_attr
    w2 = wpad(params["w2"], h_p, h_p)
    w3h = wpad(w3[:f], f_p, h_p)                         # multiplies h
    w3a = wpad(w3[f:], h_p, h_p)                         # multiplies agg
    w4 = wpad(params["w4"], h_p, o_p)
    bpad = lambda b, c: _pad2d(b.reshape(1, -1).astype(jnp.float32), 1, c)
    b1 = bpad(params["b1"], h_p)
    b2 = bpad(params["b2"], h_p)
    b3 = bpad(params["b3"], h_p)
    b4 = bpad(params["b4"], o_p)

    # ---- edge kernel: gridded over (chunk, edge tile) ----
    resident = lambda shape: pl.BlockSpec(shape, lambda c, s: (0, 0))
    tile_i = lambda c, s: (c * steps + s, 0)

    grid_spec = pltpu.PrefetchScalarGridSpec(
        num_scalar_prefetch=0,
        grid=(n_chunks, steps),
        in_specs=[
            pl.BlockSpec((1, te), lambda c, s: (0, c * steps + s)),  # row (seg-sum layout)
            pl.BlockSpec((te, 1), tile_i),                           # row (gather layout)
            pl.BlockSpec((te, 1), tile_i),                           # col (gather layout)
            pl.BlockSpec((te, d_p), tile_i),                         # edge_attr tile
            resident((n_p, f_p)),                                    # h
            resident((f_p, h_p)), resident((f_p, h_p)),              # w1 source / target
            resident((d_p, h_p)),                                    # w1 attr
            resident((1, h_p)),                                      # b1
            resident((h_p, h_p)), resident((1, h_p)),                # w2, b2
        ],
        out_specs=pl.BlockSpec((n_p, h_p), lambda c, s: (c, 0)),     # per-chunk partial agg
        scratch_shapes=[
            pltpu.VMEM((te, n_p), jnp.int32),                        # lane iota (hoisted)
            pltpu.VMEM((n_p, te), jnp.int32),                        # sublane iota (hoisted)
            pltpu.VMEM((n_p, h_p), jnp.float32),                     # agg accumulator
        ],
    )
    agg_partials = pl.pallas_call(
        _edge_kernel,
        out_shape=jax.ShapeDtypeStruct((n_chunks * n_p, h_p), jnp.float32),
        grid_spec=grid_spec,
        compiler_params=pltpu.CompilerParams(
            dimension_semantics=("parallel", "arbitrary"),
            vmem_limit_bytes=vmem_limit),
    )(row_s, row_c, col_c, attr_p, h_pad, w1s, w1t, w1a, b1, w2, b2)

    # ---- node kernel: sum partials + node MLP (tiny) ----
    full = lambda shape: pl.BlockSpec(shape, lambda i: (0, 0))
    node_kernel = functools.partial(_node_kernel, num_chunks=n_chunks, n_rows=n_p)
    out = pl.pallas_call(
        node_kernel,
        out_shape=jax.ShapeDtypeStruct((n_p, o_p), h.dtype),
        grid_spec=pltpu.PrefetchScalarGridSpec(
            num_scalar_prefetch=0,
            grid=(1,),
            in_specs=[full((n_chunks * n_p, h_p)), full((n_p, f_p)),
                      full((f_p, h_p)), full((h_p, h_p)), full((1, h_p)),
                      full((h_p, o_p)), full((1, o_p))],
            out_specs=full((n_p, o_p)),
        ),
        compiler_params=pltpu.CompilerParams(dimension_semantics=("arbitrary",)),
    )(agg_partials, h_pad, w3h, w3a, b3, w4, b4)

    return out[:n, :out_nf]


# --------------------------------------------------------------------------- #
# Reference + parameters
# --------------------------------------------------------------------------- #
def init_params(key, input_nf, output_nf, hidden_nf, edges_in_d):
    """Deterministic synthetic parameters (Linear weights stored as [in, out])."""
    ks = jax.random.split(key, 8)
    input_edge = 2 * input_nf + edges_in_d
    s = 0.1
    rnd = lambda k, shp: s * jax.random.normal(k, shp, jnp.float32)
    return dict(
        w1=rnd(ks[0], (input_edge, hidden_nf)), b1=rnd(ks[1], (hidden_nf,)),
        w2=rnd(ks[2], (hidden_nf, hidden_nf)), b2=rnd(ks[3], (hidden_nf,)),
        w3=rnd(ks[4], (input_nf + hidden_nf, hidden_nf)), b3=rnd(ks[5], (hidden_nf,)),
        w4=rnd(ks[6], (hidden_nf, output_nf)), b4=rnd(ks[7], (output_nf,)),
    )


def reference_forward(h, edge_index, edge_attr, params):
    """Pure-JAX reference mirroring the PyTorch module exactly (f32)."""
    row, col = edge_index[0], edge_index[1]
    edge_in = jnp.concatenate([h[row], h[col], edge_attr], axis=1)
    x = _silu(edge_in @ params["w1"] + params["b1"])
    edge_feat = _silu(x @ params["w2"] + params["b2"])
    agg = jax.ops.segment_sum(edge_feat, row, num_segments=h.shape[0])
    node_in = jnp.concatenate([h, agg], axis=1)
    y = _silu(node_in @ params["w3"] + params["b3"])
    return y @ params["w4"] + params["b4"]


if __name__ == "__main__":
    # Small shapes consistent with the module's forward.
    N = 24            # number of nodes
    E = 800           # number of edges
    input_nf = 8
    output_nf = 8
    hidden_nf = 32
    edges_in_d = 1

    key = jax.random.PRNGKey(0)
    k_h, k_ei, k_ea, k_p = jax.random.split(key, 4)

    h = jax.random.normal(k_h, (N, input_nf), jnp.float32)
    edge_index = jax.random.randint(k_ei, (2, E), 0, N, dtype=jnp.int32)
    edge_attr = jax.random.normal(k_ea, (E, edges_in_d), jnp.float32)
    params = init_params(k_p, input_nf, output_nf, hidden_nf, edges_in_d)

    ref = reference_forward(h, edge_index, edge_attr, params)

    # Exact-structure check: f32 compute path, small tiles -> 2 chunks x 2 steps.
    out_f32 = gn_layer_forward(h, edge_index, edge_attr, params,
                               max_edge_tile=256, num_edge_chunks=2,
                               compute_dtype=jnp.float32)
    out_f32 = jax.block_until_ready(out_f32)
    np.testing.assert_allclose(np.asarray(out_f32), np.asarray(ref),
                               rtol=5e-4, atol=5e-4)

    # Performance path: defaults (auto tile size, bf16 MXU operands, f32 accum).
    out_bf16 = gn_layer_forward(h, edge_index, edge_attr, params)
    out_bf16 = jax.block_until_ready(out_bf16)
    np.testing.assert_allclose(np.asarray(out_bf16), np.asarray(ref),
                               rtol=5e-2, atol=2e-1)

    print("KERNEL_OK")
</pallas_src>

<mosaic_0001>
module attributes {stable_mosaic.version = 11 : i64} {
  func.func @_edge_kernel(%arg0: i32, %arg1: i32, %arg2: memref<1x256xi32, #tpu.memory_space<vmem>>, %arg3: memref<256x1xi32, #tpu.memory_space<vmem>>, %arg4: memref<256x1xi32, #tpu.memory_space<vmem>>, %arg5: memref<256x128xf32, #tpu.memory_space<vmem>>, %arg6: memref<128x128xf32, #tpu.memory_space<vmem>>, %arg7: memref<128x128xf32, #tpu.memory_space<vmem>>, %arg8: memref<128x128xf32, #tpu.memory_space<vmem>>, %arg9: memref<128x128xf32, #tpu.memory_space<vmem>>, %arg10: memref<1x128xf32, #tpu.memory_space<vmem>>, %arg11: memref<128x128xf32, #tpu.memory_space<vmem>>, %arg12: memref<1x128xf32, #tpu.memory_space<vmem>>, %arg13: memref<128x128xf32, #tpu.memory_space<vmem>>, %arg14: memref<256x128xi32, #tpu.memory_space<vmem>>, %arg15: memref<128x256xi32, #tpu.memory_space<vmem>>, %arg16: memref<128x128xf32, #tpu.memory_space<vmem>>) attributes {dimension_semantics = [#tpu.dimension_semantics<parallel>, #tpu.dimension_semantics<arbitrary>], iteration_bounds = array<i64: 2, 2>, scalar_prefetch = 0 : i64, scratch_operands = 3 : i64, tpu.core_type = #tpu.core_type<tc>, window_params = [{transform_indices = @transform_0, window_bounds = array<i64: 1, 256>}, {transform_indices = @transform_1, window_bounds = array<i64: 256, 1>}, {transform_indices = @transform_2, window_bounds = array<i64: 256, 1>}, {transform_indices = @transform_3, window_bounds = array<i64: 256, 128>}, {pipeline_mode = #tpu.pipeline_mode<synchronous>, transform_indices = @transform_4, window_bounds = array<i64: 128, 128>}, {pipeline_mode = #tpu.pipeline_mode<synchronous>, transform_indices = @transform_5, window_bounds = array<i64: 128, 128>}, {pipeline_mode = #tpu.pipeline_mode<synchronous>, transform_indices = @transform_6, window_bounds = array<i64: 128, 128>}, {pipeline_mode = #tpu.pipeline_mode<synchronous>, transform_indices = @transform_7, window_bounds = array<i64: 128, 128>}, {pipeline_mode = #tpu.pipeline_mode<synchronous>, transform_indices = @transform_8, window_bounds = array<i64: 1, 128>}, {pipeline_mode = #tpu.pipeline_mode<synchronous>, transform_indices = @transform_9, window_bounds = array<i64: 128, 128>}, {pipeline_mode = #tpu.pipeline_mode<synchronous>, transform_indices = @transform_10, window_bounds = array<i64: 1, 128>}, {transform_indices = @transform_11, window_bounds = array<i64: 128, 128>}]} {
    %c0_i32 = arith.constant 0 : i32
    %0 = arith.cmpi eq, %arg1, %c0_i32 : i32
    %1 = arith.extui %0 : i1 to i32
    %c0_i32_0 = arith.constant 0 : i32
    %2 = arith.cmpi ne, %1, %c0_i32_0 : i32
    scf.if %2 {
      %cst_41 = arith.constant 0.000000e+00 : f32
      %60 = vector.broadcast %cst_41 : f32 to vector<128x128xf32>
      %c0_42 = arith.constant 0 : index
      %c0_43 = arith.constant 0 : index
      %61 = vector.load %arg16[%c0_42, %c0_43] : memref<128x128xf32, #tpu.memory_space<vmem>>, vector<128x128xf32>
      tpu.vector_store %arg16[%c0_42, %c0_43], %60 {strides = array<i32>} : memref<128x128xf32, #tpu.memory_space<vmem>>, vector<128x128xf32>,
      %62 = tpu.iota {dimensions = array<i32: 1>} : vector<256x128xi32>
      %c0_44 = arith.constant 0 : index
      %c0_45 = arith.constant 0 : index
      %63 = vector.load %arg14[%c0_44, %c0_45] : memref<256x128xi32, #tpu.memory_space<vmem>>, vector<256x128xi32>
      tpu.vector_store %arg14[%c0_44, %c0_45], %62 {strides = array<i32>} : memref<256x128xi32, #tpu.memory_space<vmem>>, vector<256x128xi32>,
      %64 = tpu.iota {dimensions = array<i32: 0>} : vector<128x256xi32>
      %c0_46 = arith.constant 0 : index
      %c0_47 = arith.constant 0 : index
      %65 = vector.load %arg15[%c0_46, %c0_47] : memref<128x256xi32, #tpu.memory_space<vmem>>, vector<128x256xi32>
      tpu.vector_store %arg15[%c0_46, %c0_47], %64 {strides = array<i32>} : memref<128x256xi32, #tpu.memory_space<vmem>>, vector<128x256xi32>,
    } else {
    }
    %c0 = arith.constant 0 : index
    %c0_1 = arith.constant 0 : index
    %3 = vector.load %arg14[%c0, %c0_1] : memref<256x128xi32, #tpu.memory_space<vmem>>, vector<256x128xi32>
    %c0_2 = arith.constant 0 : index
    %c0_3 = arith.constant 0 : index
    %4 = vector.load %arg3[%c0_2, %c0_3] : memref<256x1xi32, #tpu.memory_space<vmem>>, vector<256x1xi32>
    %5 = vector.broadcast %4 : vector<256x1xi32> to vector<256x128xi32>
    %6 = arith.cmpi eq, %3, %5 : vector<256x128xi32>
    %7 = arith.extui %6 : vector<256x128xi1> to vector<256x128xi32>
    %8 = arith.sitofp %7 : vector<256x128xi32> to vector<256x128xf32>
    %c0_4 = arith.constant 0 : index
    %c0_5 = arith.constant 0 : index
    %9 = vector.load %arg14[%c0_4, %c0_5] : memref<256x128xi32, #tpu.memory_space<vmem>>, vector<256x128xi32>
    %c0_6 = arith.constant 0 : index
    %c0_7 = arith.constant 0 : index
    %10 = vector.load %arg4[%c0_6, %c0_7] : memref<256x1xi32, #tpu.memory_space<vmem>>, vector<256x1xi32>
    %11 = vector.broadcast %10 : vector<256x1xi32> to vector<256x128xi32>
    %12 = arith.cmpi eq, %9, %11 : vector<256x128xi32>
    %13 = arith.extui %12 : vector<256x128xi1> to vector<256x128xi32>
    %14 = arith.sitofp %13 : vector<256x128xi32> to vector<256x128xf32>
    %c0_8 = arith.constant 0 : index
    %c0_9 = arith.constant 0 : index
    %15 = vector.load %arg6[%c0_8, %c0_9] : memref<128x128xf32, #tpu.memory_space<vmem>>, vector<128x128xf32>
    %cst = arith.constant dense<0.000000e+00> : vector<256x128xf32>
    %16 = tpu.matmul %8, %15, %cst {dimension_numbers = #tpu.dot_dimension_numbers<[1], [0], [0], [1], [0, 0, 1, 1], [], []>} : vector<256x128xf32>, vector<128x128xf32>, vector<256x128xf32> -> vector<256x128xf32>
    %cst_10 = arith.constant dense<0.000000e+00> : vector<256x128xf32>
    %17 = tpu.matmul %14, %15, %cst_10 {dimension_numbers = #tpu.dot_dimension_numbers<[1], [0], [0], [1], [0, 0, 1, 1], [], []>} : vector<256x128xf32>, vector<128x128xf32>, vector<256x128xf32> -> vector<256x128xf32>
    %c0_11 = arith.constant 0 : index
    %c0_12 = arith.constant 0 : index
    %18 = vector.load %arg7[%c0_11, %c0_12] : memref<128x128xf32, #tpu.memory_space<vmem>>, vector<128x128xf32>
    %cst_13 = arith.constant dense<0.000000e+00> : vector<256x128xf32>
    %19 = tpu.matmul %16, %18, %cst_13 {dimension_numbers = #tpu.dot_dimension_numbers<[1], [0], [0], [1], [0, 0, 1, 1], [], []>} : vector<256x128xf32>, vector<128x128xf32>, vector<256x128xf32> -> vector<256x128xf32>
    %c0_14 = arith.constant 0 : index
    %c0_15 = arith.constant 0 : index
    %20 = vector.load %arg8[%c0_14, %c0_15] : memref<128x128xf32, #tpu.memory_space<vmem>>, vector<128x128xf32>
    %cst_16 = arith.constant dense<0.000000e+00> : vector<256x128xf32>
    %21 = tpu.matmul %17, %20, %cst_16 {dimension_numbers = #tpu.dot_dimension_numbers<[1], [0], [0], [1], [0, 0, 1, 1], [], []>} : vector<256x128xf32>, vector<128x128xf32>, vector<256x128xf32> -> vector<256x128xf32>
    %22 = arith.addf %19, %21 : vector<256x128xf32>
    %c0_17 = arith.constant 0 : index
    %c0_18 = arith.constant 0 : index
    %23 = vector.load %arg5[%c0_17, %c0_18] : memref<256x128xf32, #tpu.memory_space<vmem>>, vector<256x128xf32>
    %c0_19 = arith.constant 0 : index
    %c0_20 = arith.constant 0 : index
    %24 = vector.load %arg9[%c0_19, %c0_20] : memref<128x128xf32, #tpu.memory_space<vmem>>, vector<128x128xf32>
    %cst_21 = arith.constant dense<0.000000e+00> : vector<256x128xf32>
    %25 = tpu.matmul %23, %24, %cst_21 {dimension_numbers = #tpu.dot_dimension_numbers<[1], [0], [0], [1], [0, 0, 1, 1], [], []>} : vector<256x128xf32>, vector<128x128xf32>, vector<256x128xf32> -> vector<256x128xf32>
    %26 = arith.addf %22, %25 : vector<256x128xf32>
    %c0_22 = arith.constant 0 : index
    %c0_23 = arith.constant 0 : index
    %27 = vector.load %arg10[%c0_22, %c0_23] : memref<1x128xf32, #tpu.memory_space<vmem>>, vector<1x128xf32>
    %28 = vector.broadcast %27 : vector<1x128xf32> to vector<256x128xf32>
    %29 = arith.addf %26, %28 : vector<256x128xf32>
    %30 = arith.negf %29 : vector<256x128xf32>
    %31 = math.exp %30 : vector<256x128xf32>
    %cst_24 = arith.constant 1.000000e+00 : f32
    %32 = vector.broadcast %cst_24 : f32 to vector<256x128xf32>
    %33 = arith.addf %32, %31 : vector<256x128xf32>
    %34 = arith.divf %32, %33 : vector<256x128xf32>
    %35 = arith.mulf %29, %34 : vector<256x128xf32>
    %c0_25 = arith.constant 0 : index
    %c0_26 = arith.constant 0 : index
    %36 = vector.load %arg11[%c0_25, %c0_26] : memref<128x128xf32, #tpu.memory_space<vmem>>, vector<128x128xf32>
    %cst_27 = arith.constant dense<0.000000e+00> : vector<256x128xf32>
    %37 = tpu.matmul %35, %36, %cst_27 {dimension_numbers = #tpu.dot_dimension_numbers<[1], [0], [0], [1], [0, 0, 1, 1], [], []>} : vector<256x128xf32>, vector<128x128xf32>, vector<256x128xf32> -> vector<256x128xf32>
    %c0_28 = arith.constant 0 : index
    %c0_29 = arith.constant 0 : index
    %38 = vector.load %arg12[%c0_28, %c0_29] : memref<1x128xf32, #tpu.memory_space<vmem>>, vector<1x128xf32>
    %39 = vector.broadcast %38 : vector<1x128xf32> to vector<256x128xf32>
    %40 = arith.addf %37, %39 : vector<256x128xf32>
    %41 = arith.negf %40 : vector<256x128xf32>
    %42 = math.exp %41 : vector<256x128xf32>
    %cst_30 = arith.constant 1.000000e+00 : f32
    %43 = vector.broadcast %cst_30 : f32 to vector<256x128xf32>
    %44 = arith.addf %43, %42 : vector<256x128xf32>
    %45 = arith.divf %43, %44 : vector<256x128xf32>
    %46 = arith.mulf %40, %45 : vector<256x128xf32>
    %c0_31 = arith.constant 0 : index
    %c0_32 = arith.constant 0 : index
    %47 = vector.load %arg15[%c0_31, %c0_32] : memref<128x256xi32, #tpu.memory_space<vmem>>, vector<128x256xi32>
    %c0_33 = arith.constant 0 : index
    %c0_34 = arith.constant 0 : index
    %48 = vector.load %arg2[%c0_33, %c0_34] : memref<1x256xi32, #tpu.memory_space<vmem>>, vector<1x256xi32>
    %49 = vector.broadcast %48 : vector<1x256xi32> to vector<128x256xi32>
    %50 = arith.cmpi eq, %47, %49 : vector<128x256xi32>
    %51 = arith.extui %50 : vector<128x256xi1> to vector<128x256xi32>
    %52 = arith.sitofp %51 : vector<128x256xi32> to vector<128x256xf32>
    %c0_35 = arith.constant 0 : index
    %c0_36 = arith.constant 0 : index
    %53 = vector.load %arg16[%c0_35, %c0_36] : memref<128x128xf32, #tpu.memory_space<vmem>>, vector<128x128xf32>
    %cst_37 = arith.constant dense<0.000000e+00> : vector<128x128xf32>
    %54 = tpu.matmul %52, %46, %cst_37 {dimension_numbers = #tpu.dot_dimension_numbers<[1], [0], [0], [1], [0, 0, 1, 1], [], []>} : vector<128x256xf32>, vector<256x128xf32>, vector<128x128xf32> -> vector<128x128xf32>
    %55 = arith.addf %53, %54 : vector<128x128xf32>
    %c0_38 = arith.constant 0 : index
    %c0_39 = arith.constant 0 : index
    %56 = vector.load %arg16[%c0_38, %c0_39] : memref<128x128xf32, #tpu.memory_space<vmem>>, vector<128x128xf32>
    tpu.vector_store %arg16[%c0_38, %c0_39], %55 {strides = array<i32>} : memref<128x128xf32, #tpu.memory_space<vmem>>, vector<128x128xf32>,
    %c1_i32 = arith.constant 1 : i32
    %57 = arith.cmpi eq, %arg1, %c1_i32 : i32
    %58 = arith.extui %57 : i1 to i32
    %c0_i32_40 = arith.constant 0 : i32
    %59 = arith.cmpi ne, %58, %c0_i32_40 : i32
    scf.if %59 {
      %c0_41 = arith.constant 0 : index
      %c0_42 = arith.constant 0 : index
      %60 = vector.load %arg16[%c0_41, %c0_42] : memref<128x128xf32, #tpu.memory_space<vmem>>, vector<128x128xf32>
      %c0_43 = arith.constant 0 : index
      %c0_44 = arith.constant 0 : index
      %61 = vector.load %arg13[%c0_43, %c0_44] : memref<128x128xf32, #tpu.memory_space<vmem>>, vector<128x128xf32>
      tpu.vector_store %arg13[%c0_43, %c0_44], %60 {strides = array<i32>} : memref<128x128xf32, #tpu.memory_space<vmem>>, vector<128x128xf32>,
    } else {
    }
    return
  }
  func.func @transform_0(%arg0: i32, %arg1: i32) -> (i32, i32) {
    %c2_i32 = arith.constant 2 : i32
    %0 = arith.muli %arg0, %c2_i32 : i32
    %1 = arith.addi %0, %arg1 : i32
    %c0_i32 = arith.constant 0 : i32
    %c0_i32_0 = arith.constant 0 : i32
    return %c0_i32, %1 : i32, i32
  }
  func.func @transform_1(%arg0: i32, %arg1: i32) -> (i32, i32) {
    %c2_i32 = arith.constant 2 : i32
    %0 = arith.muli %arg0, %c2_i32 : i32
    %1 = arith.addi %0, %arg1 : i32
    %c0_i32 = arith.constant 0 : i32
    %c0_i32_0 = arith.constant 0 : i32
    return %1, %c0_i32 : i32, i32
  }
  func.func @transform_2(%arg0: i32, %arg1: i32) -> (i32, i32) {
    %c2_i32 = arith.constant 2 : i32
    %0 = arith.muli %arg0, %c2_i32 : i32
    %1 = arith.addi %0, %arg1 : i32
    %c0_i32 = arith.constant 0 : i32
    %c0_i32_0 = arith.constant 0 : i32
    return %1, %c0_i32 : i32, i32
  }
  func.func @transform_3(%arg0: i32, %arg1: i32) -> (i32, i32) {
    %c2_i32 = arith.constant 2 : i32
    %0 = arith.muli %arg0, %c2_i32 : i32
    %1 = arith.addi %0, %arg1 : i32
    %c0_i32 = arith.constant 0 : i32
    %c0_i32_0 = arith.constant 0 : i32
    return %1, %c0_i32 : i32, i32
  }
  func.func @transform_4(%arg0: i32, %arg1: i32) -> (i32, i32) {
    %c0_i32 = arith.constant 0 : i32
    %c0_i32_0 = arith.constant 0 : i32
    %c0_i32_1 = arith.constant 0 : i32
    return %c0_i32, %c0_i32_0 : i32, i32
  }
  func.func @transform_5(%arg0: i32, %arg1: i32) -> (i32, i32) {
    %c0_i32 = arith.constant 0 : i32
    %c0_i32_0 = arith.constant 0 : i32
    %c0_i32_1 = arith.constant 0 : i32
    return %c0_i32, %c0_i32_0 : i32, i32
  }
  func.func @transform_6(%arg0: i32, %arg1: i32) -> (i32, i32) {
    %c0_i32 = arith.constant 0 : i32
    %c0_i32_0 = arith.constant 0 : i32
    %c0_i32_1 = arith.constant 0 : i32
    return %c0_i32, %c0_i32_0 : i32, i32
  }
  func.func @transform_7(%arg0: i32, %arg1: i32) -> (i32, i32) {
    %c0_i32 = arith.constant 0 : i32
    %c0_i32_0 = arith.constant 0 : i32
    %c0_i32_1 = arith.constant 0 : i32
    return %c0_i32, %c0_i32_0 : i32, i32
  }
  func.func @transform_8(%arg0: i32, %arg1: i32) -> (i32, i32) {
    %c0_i32 = arith.constant 0 : i32
    %c0_i32_0 = arith.constant 0 : i32
    %c0_i32_1 = arith.constant 0 : i32
    return %c0_i32, %c0_i32_0 : i32, i32
  }
  func.func @transform_9(%arg0: i32, %arg1: i32) -> (i32, i32) {
    %c0_i32 = arith.constant 0 : i32
    %c0_i32_0 = arith.constant 0 : i32
    %c0_i32_1 = arith.constant 0 : i32
    return %c0_i32, %c0_i32_0 : i32, i32
  }
  func.func @transform_10(%arg0: i32, %arg1: i32) -> (i32, i32) {
    %c0_i32 = arith.constant 0 : i32
    %c0_i32_0 = arith.constant 0 : i32
    %c0_i32_1 = arith.constant 0 : i32
    return %c0_i32, %c0_i32_0 : i32, i32
  }
  func.func @transform_11(%arg0: i32, %arg1: i32) -> (i32, i32) {
    %c0_i32 = arith.constant 0 : i32
    %c0_i32_0 = arith.constant 0 : i32
    return %arg0, %c0_i32 : i32, i32
  }
}

</mosaic_0001>

<llo_original>
// kernel: tpu_custom_call.1
$region0: #{tpu_custom_call.1}
  #allocation0 [shape = 'u32[]', space=smem, size = 0x4, offset = 0x4, fixed_abs, tag = 'smem constant byte address 0x4 - core index']
  #allocation1 [shape = 'u32[144,128]{1,0:T(1,128)}', space=vmem, size = 0x12000, scoped, tag = 'internal scratch']
  #allocation2 [shape = 's32[256,128]{1,0:T(8,128)}', space=vmem, size = 0x20000, scoped, tag = 'scratch operand']
  #allocation3 [shape = 's32[128,256]{1,0:T(8,128)}', space=vmem, size = 0x20000, scoped, tag = 'scratch operand']
  #allocation4 [shape = 'f32[128,128]{1,0:T(8,128)}', space=vmem, size = 0x10000, scoped, tag = 'scratch operand']
  %s0 = inlined_call_operand.vmem [shape: s32[1,1024], index: 0, kind: input, shape index: {}]
  %s1 = inlined_call_operand.vmem [shape: s32[1024,1], index: 1, kind: input, shape index: {}]
  %s2 = inlined_call_operand.vmem [shape: s32[1024,1], index: 2, kind: input, shape index: {}]
  %s3 = inlined_call_operand.vmem [shape: f32[1024,128], index: 3, kind: input, shape index: {}]
  %s4 = inlined_call_operand.vmem [shape: f32[128,128], index: 4, kind: input, shape index: {}]
  %s5 = inlined_call_operand.vmem [shape: f32[128,128], index: 5, kind: input, shape index: {}]
  %s6 = inlined_call_operand.vmem [shape: f32[128,128], index: 6, kind: input, shape index: {}]
  %s7 = inlined_call_operand.vmem [shape: f32[128,128], index: 7, kind: input, shape index: {}]
  %s8 = inlined_call_operand.vmem [shape: f32[1,128], index: 8, kind: input, shape index: {}]
  %s9 = inlined_call_operand.vmem [shape: f32[128,128], index: 9, kind: input, shape index: {}]
  %s10 = inlined_call_operand.vmem [shape: f32[1,128], index: 10, kind: input, shape index: {}]
  %s11 = inlined_call_operand.hbm [shape: f32[256,128], index: 11, kind: output, shape index: {}]
  %s12 = sld [smem:[#allocation0]]
  $region85: #{tpu_custom_call.1} parent=0
    _
  %s14 = ssub.s32 1, %s12
  %s15 = scalar_select 0, %s14, %s12
  $region1: #{tpu_custom_call.1} parent=0
    #allocation5 [shape = 'u8[131072]{0}', space=vmem, size = 0x20000, scoped, tag = 'output window, operand 0']
    #allocation6 [shape = 's32[2]{0}', space=sflag, size = 0x8, scoped, tag = 'scoped memory for tpu_custom_call.1']
    %16 = vsyncpa [#allocation6], 0
    %s17 = scalar_lea.sflag [#allocation6], 1
    %18 = vsyncpa %s17, 0
    loop: start=0, step=1, limit=6
    $region2: #{tpu_custom_call.1} parent=1 // loop_pre_header
      _
    $region3: #{tpu_custom_call.1} parent=1 // loop_header
      %s20 = sphi 0, %s24
      %p21 = scmp.ge.s32.totalorder %s20, 6
      %s27 = sphi 0, %s39
      %s28 = sphi 0, %s35
      %s29 = sphi 0, %s27
      %s30 = sphi 0, %s28
      %s31 = sphi 0, %s29
      %s32 = sphi 0, %s30
      %s46 = sphi 0, %s48
      %s49 = sphi 0, %s46
      %s50 = sphi 0, %s49
      %s66 = sphi 0, %s50
      %s76 = sphi 0, %s78
      %s79 = sphi 0, %s76
      %s80 = sphi 0, %s79
      %s96 = sphi 0, %s80
      %s106 = sphi 0, %s108
      %s109 = sphi 0, %s106
      %s110 = sphi 0, %s109
      %s126 = sphi 0, %s110
      %s136 = sphi 0, %s138
      %s139 = sphi 0, %s136
      %s140 = sphi 0, %s139
      %s156 = sphi 0, %s140
      %s160 = sphi 0, %s160
      %s162 = sphi 0, %s160
      %s163 = sphi 0, %s162
      %s177 = sphi 0, %s163
      %s181 = sphi 0, %s181
      %s183 = sphi 0, %s181
      %s184 = sphi 0, %s183
      %s198 = sphi 0, %s184
      %s202 = sphi 0, %s202
      %s204 = sphi 0, %s202
      %s205 = sphi 0, %s204
      %s219 = sphi 0, %s205
      %s223 = sphi 0, %s223
      %s225 = sphi 0, %s223
      %s226 = sphi 0, %s225
      %s240 = sphi 0, %s226
      %s244 = sphi 0, %s244
      %s246 = sphi 0, %s244
      %s247 = sphi 0, %s246
      %s261 = sphi 0, %s247
      %s265 = sphi 0, %s265
      %s267 = sphi 0, %s265
      %s268 = sphi 0, %s267
      %s282 = sphi 0, %s268
      %s286 = sphi 0, %s286
      %s288 = sphi 0, %s286
      %s289 = sphi 0, %s288
      %s303 = sphi 0, %s289
      %s309 = sphi 0, %s311
      %s312 = sphi 0, %s309
      %s313 = sphi 0, %s312
      %s329 = sphi 0, %s313
    $region4: #{tpu_custom_call.1} parent=1 // loop_header_branch
      %23 = sbr.rel (%p21) target = $region8
    $region5: #{tpu_custom_call.1} parent=1 // loop_body
      %s25 = ssub.s32 %s20, 1
      %s26 = ssub.s32 %s20, 2
      %s33 = sadd.s32 1, %s28
      %p34 = scmp.ge.s32.totalorder %s33, 2
      %s35 = scalar_select %p34, 0, %s33
      %s36 = sadd.s32 1, %s27
      %s37 = scalar_select %p34, %s36, %s27
      %p38 = scmp.ge.s32.totalorder %s37, 2
      %s39 = scalar_select %p38, 0, %s37
      %s40 = smul.u32 %s27, 2
      %s41 = sadd.s32 %s40, %s28
      %s42 = smul.u32 %s39, 2
      %s43 = sadd.s32 %s42, %s35
      %s44 = ssub.s32 %s41, %s43
      %p45 = scmp.eq.s32.totalorder %s44, 0
      %s47 = sadd.s32 %s46, 1
      %s48 = scalar_select %p45, %s46, %s47
      %p51 = pneg %p45
      %p52 = scmp.eq.s32.totalorder %s20, 3
      %p53 = por %p51, %p52
      %p54 = scmp.ne.s32.totalorder %s46, %s49
      %p55 = scmp.eq.s32.totalorder %s20, 0
      %p56 = por %p54, %p55
      %p57 = scmp.ne.s32.totalorder %s46, %s49
      %p58 = scmp.eq.s32.totalorder %s25, 3
      %p59 = por %p57, %p58
      %p60 = scmp.ne.s32.totalorder %s49, %s50
      %p61 = scmp.eq.s32.totalorder %s25, 0
      %p62 = por %p60, %p61
      %p63 = scmp.ne.s32.totalorder %s49, %s50
      %p64 = scmp.eq.s32.totalorder %s26, 3
      %p65 = por %p63, %p64
      %p67 = scmp.ne.s32.totalorder %s50, %s66
      %p68 = scmp.eq.s32.totalorder %s26, 0
      %p69 = por %p67, %p68
      %s70 = smul.u32 %s27, 2
      %s71 = sadd.s32 %s70, %s28
      %s72 = smul.u32 %s39, 2
      %s73 = sadd.s32 %s72, %s35
      %s74 = ssub.s32 %s71, %s73
      %p75 = scmp.eq.s32.totalorder %s74, 0
      %s77 = sadd.s32 %s76, 1
      %s78 = scalar_select %p75, %s76, %s77
      %p81 = pneg %p75
      %p82 = scmp.eq.s32.totalorder %s20, 3
      %p83 = por %p81, %p82
      %p84 = scmp.ne.s32.totalorder %s76, %s79
      %p85 = scmp.eq.s32.totalorder %s20, 0
      %p86 = por %p84, %p85
      %p87 = scmp.ne.s32.totalorder %s76, %s79
      %p88 = scmp.eq.s32.totalorder %s25, 3
      %p89 = por %p87, %p88
      %p90 = scmp.ne.s32.totalorder %s79, %s80
      %p91 = scmp.eq.s32.totalorder %s25, 0
      %p92 = por %p90, %p91
      %p93 = scmp.ne.s32.totalorder %s79, %s80
      %p94 = scmp.eq.s32.totalorder %s26, 3
      %p95 = por %p93, %p94
      %p97 = scmp.ne.s32.totalorder %s80, %s96
      %p98 = scmp.eq.s32.totalorder %s26, 0
      %p99 = por %p97, %p98
      %s100 = smul.u32 %s27, 2
      %s101 = sadd.s32 %s100, %s28
      %s102 = smul.u32 %s39, 2
      %s103 = sadd.s32 %s102, %s35
      %s104 = ssub.s32 %s101, %s103
      %p105 = scmp.eq.s32.totalorder %s104, 0
      %s107 = sadd.s32 %s106, 1
      %s108 = scalar_select %p105, %s106, %s107
      %p111 = pneg %p105
      %p112 = scmp.eq.s32.totalorder %s20, 3
      %p113 = por %p111, %p112
      %p114 = scmp.ne.s32.totalorder %s106, %s109
      %p115 = scmp.eq.s32.totalorder %s20, 0
      %p116 = por %p114, %p115
      %p117 = scmp.ne.s32.totalorder %s106, %s109
      %p118 = scmp.eq.s32.totalorder %s25, 3
      %p119 = por %p117, %p118
      %p120 = scmp.ne.s32.totalorder %s109, %s110
      %p121 = scmp.eq.s32.totalorder %s25, 0
      %p122 = por %p120, %p121
      %p123 = scmp.ne.s32.totalorder %s109, %s110
      %p124 = scmp.eq.s32.totalorder %s26, 3
      %p125 = por %p123, %p124
      %p127 = scmp.ne.s32.totalorder %s110, %s126
      %p128 = scmp.eq.s32.totalorder %s26, 0
      %p129 = por %p127, %p128
      %s130 = smul.u32 %s27, 2
      %s131 = sadd.s32 %s130, %s28
      %s132 = smul.u32 %s39, 2
      %s133 = sadd.s32 %s132, %s35
      %s134 = ssub.s32 %s131, %s133
      %p135 = scmp.eq.s32.totalorder %s134, 0
      %s137 = sadd.s32 %s136, 1
      %s138 = scalar_select %p135, %s136, %s137
      %p141 = pneg %p135
      %p142 = scmp.eq.s32.totalorder %s20, 3
      %p143 = por %p141, %p142
      %p144 = scmp.ne.s32.totalorder %s136, %s139
      %p145 = scmp.eq.s32.totalorder %s20, 0
      %p146 = por %p144, %p145
      %p147 = scmp.ne.s32.totalorder %s136, %s139
      %p148 = scmp.eq.s32.totalorder %s25, 3
      %p149 = por %p147, %p148
      %p150 = scmp.ne.s32.totalorder %s139, %s140
      %p151 = scmp.eq.s32.totalorder %s25, 0
      %p152 = por %p150, %p151
      %p153 = scmp.ne.s32.totalorder %s139, %s140
      %p154 = scmp.eq.s32.totalorder %s26, 3
      %p155 = por %p153, %p154
      %p157 = scmp.ne.s32.totalorder %s140, %s156
      %p158 = scmp.eq.s32.totalorder %s26, 0
      %p159 = por %p157, %p158
      %s161 = sadd.s32 %s160, 1
      %p164 = scmp.eq.s32.totalorder %s20, 3
      %p165 = scmp.ne.s32.totalorder %s160, %s162
      %p166 = scmp.eq.s32.totalorder %s20, 0
      %p167 = por %p165, %p166
      %p168 = scmp.ne.s32.totalorder %s160, %s162
      %p169 = scmp.eq.s32.totalorder %s25, 3
      %p170 = por %p168, %p169
      %p171 = scmp.ne.s32.totalorder %s162, %s163
      %p172 = scmp.eq.s32.totalorder %s25, 0
      %p173 = por %p171, %p172
      %p174 = scmp.ne.s32.totalorder %s162, %s163
      %p175 = scmp.eq.s32.totalorder %s26, 3
      %p176 = por %p174, %p175
      %p178 = scmp.ne.s32.totalorder %s163, %s177
      %p179 = scmp.eq.s32.totalorder %s26, 0
      %p180 = por %p178, %p179
      %s182 = sadd.s32 %s181, 1
      %p185 = scmp.eq.s32.totalorder %s20, 3
      %p186 = scmp.ne.s32.totalorder %s181, %s183
      %p187 = scmp.eq.s32.totalorder %s20, 0
      %p188 = por %p186, %p187
      %p189 = scmp.ne.s32.totalorder %s181, %s183
      %p190 = scmp.eq.s32.totalorder %s25, 3
      %p191 = por %p189, %p190
      %p192 = scmp.ne.s32.totalorder %s183, %s184
      %p193 = scmp.eq.s32.totalorder %s25, 0
      %p194 = por %p192, %p193
      %p195 = scmp.ne.s32.totalorder %s183, %s184
      %p196 = scmp.eq.s32.totalorder %s26, 3
      %p197 = por %p195, %p196
      %p199 = scmp.ne.s32.totalorder %s184, %s198
      %p200 = scmp.eq.s32.totalorder %s26, 0
      %p201 = por %p199, %p200
      %s203 = sadd.s32 %s202, 1
      %p206 = scmp.eq.s32.totalorder %s20, 3
      %p207 = scmp.ne.s32.totalorder %s202, %s204
      %p208 = scmp.eq.s32.totalorder %s20, 0
      %p209 = por %p207, %p208
      %p210 = scmp.ne.s32.totalorder %s202, %s204
      %p211 = scmp.eq.s32.totalorder %s25, 3
      %p212 = por %p210, %p211
      %p213 = scmp.ne.s32.totalorder %s204, %s205
      %p214 = scmp.eq.s32.totalorder %s25, 0
      %p215 = por %p213, %p214
      %p216 = scmp.ne.s32.totalorder %s204, %s205
      %p217 = scmp.eq.s32.totalorder %s26, 3
      %p218 = por %p216, %p217
      %p220 = scmp.ne.s32.totalorder %s205, %s219
      %p221 = scmp.eq.s32.totalorder %s26, 0
      %p222 = por %p220, %p221
      %s224 = sadd.s32 %s223, 1
      %p227 = scmp.eq.s32.totalorder %s20, 3
      %p228 = scmp.ne.s32.totalorder %s223, %s225
      %p229 = scmp.eq.s32.totalorder %s20, 0
      %p230 = por %p228, %p229
      %p231 = scmp.ne.s32.totalorder %s223, %s225
      %p232 = scmp.eq.s32.totalorder %s25, 3
      %p233 = por %p231, %p232
      %p234 = scmp.ne.s32.totalorder %s225, %s226
      %p235 = scmp.eq.s32.totalorder %s25, 0
      %p236 = por %p234, %p235
      %p237 = scmp.ne.s32.totalorder %s225, %s226
      %p238 = scmp.eq.s32.totalorder %s26, 3
      %p239 = por %p237, %p238
      %p241 = scmp.ne.s32.totalorder %s226, %s240
      %p242 = scmp.eq.s32.totalorder %s26, 0
      %p243 = por %p241, %p242
      %s245 = sadd.s32 %s244, 1
      %p248 = scmp.eq.s32.totalorder %s20, 3
      %p249 = scmp.ne.s32.totalorder %s244, %s246
      %p250 = scmp.eq.s32.totalorder %s20, 0
      %p251 = por %p249, %p250
      %p252 = scmp.ne.s32.totalorder %s244, %s246
      %p253 = scmp.eq.s32.totalorder %s25, 3
      %p254 = por %p252, %p253
      %p255 = scmp.ne.s32.totalorder %s246, %s247
      %p256 = scmp.eq.s32.totalorder %s25, 0
      %p257 = por %p255, %p256
      %p258 = scmp.ne.s32.totalorder %s246, %s247
      %p259 = scmp.eq.s32.totalorder %s26, 3
      %p260 = por %p258, %p259
      %p262 = scmp.ne.s32.totalorder %s247, %s261
      %p263 = scmp.eq.s32.totalorder %s26, 0
      %p264 = por %p262, %p263
      %s266 = sadd.s32 %s265, 1
      %p269 = scmp.eq.s32.totalorder %s20, 3
      %p270 = scmp.ne.s32.totalorder %s265, %s267
      %p271 = scmp.eq.s32.totalorder %s20, 0
      %p272 = por %p270, %p271
      %p273 = scmp.ne.s32.totalorder %s265, %s267
      %p274 = scmp.eq.s32.totalorder %s25, 3
      %p275 = por %p273, %p274
      %p276 = scmp.ne.s32.totalorder %s267, %s268
      %p277 = scmp.eq.s32.totalorder %s25, 0
      %p278 = por %p276, %p277
      %p279 = scmp.ne.s32.totalorder %s267, %s268
      %p280 = scmp.eq.s32.totalorder %s26, 3
      %p281 = por %p279, %p280
      %p283 = scmp.ne.s32.totalorder %s268, %s282
      %p284 = scmp.eq.s32.totalorder %s26, 0
      %p285 = por %p283, %p284
      %s287 = sadd.s32 %s286, 1
      %p290 = scmp.eq.s32.totalorder %s20, 3
      %p291 = scmp.ne.s32.totalorder %s286, %s288
      %p292 = scmp.eq.s32.totalorder %s20, 0
      %p293 = por %p291, %p292
      %p294 = scmp.ne.s32.totalorder %s286, %s288
      %p295 = scmp.eq.s32.totalorder %s25, 3
      %p296 = por %p294, %p295
      %p297 = scmp.ne.s32.totalorder %s288, %s289
      %p298 = scmp.eq.s32.totalorder %s25, 0
      %p299 = por %p297, %p298
      %p300 = scmp.ne.s32.totalorder %s288, %s289
      %p301 = scmp.eq.s32.totalorder %s26, 3
      %p302 = por %p300, %p301
      %p304 = scmp.ne.s32.totalorder %s289, %s303
      %p305 = scmp.eq.s32.totalorder %s26, 0
      %p306 = por %p304, %p305
      %s307 = ssub.s32 %s27, %s39
      %p308 = scmp.eq.s32.totalorder %s307, 0
      %s310 = sadd.s32 %s309, 1
      %s311 = scalar_select %p308, %s309, %s310
      %p314 = pneg %p308
      %p315 = scmp.eq.s32.totalorder %s20, 3
      %p316 = por %p314, %p315
      %p317 = scmp.ne.s32.totalorder %s309, %s312
      %p318 = scmp.eq.s32.totalorder %s20, 0
      %p319 = por %p317, %p318
      %p320 = scmp.ne.s32.totalorder %s309, %s312
      %p321 = scmp.eq.s32.totalorder %s25, 3
      %p322 = por %p320, %p321
      %p323 = scmp.ne.s32.totalorder %s312, %s313
      %p324 = scmp.eq.s32.totalorder %s25, 0
      %p325 = por %p323, %p324
      %p326 = scmp.ne.s32.totalorder %s312, %s313
      %p327 = scmp.eq.s32.totalorder %s26, 3
      %p328 = por %p326, %p327
      %p330 = scmp.ne.s32.totalorder %s313, %s329
      %p331 = scmp.eq.s32.totalorder %s26, 0
      %p332 = por %p330, %p331
      %p333 = scmp.le.s32.totalorder 1, %s20
      %p334 = scmp.lt.s32.totalorder %s20, 5
      %p335 = pnand %p333, %p334
      %p336 = pneg %p335
      // Predicated region
      $region9: #{tpu_custom_call.1} parent=5 // pred_check
        _
      $region10: #{tpu_custom_call.1} parent=5 // pred_check_branch
        %338 = sbr.rel (%p335) target = $region12
      $region11: #{tpu_custom_call.1} parent=5 // pred_region
        %s339 = ssub.s32 %s20, 1
        // Predicated region
        $region13: #{tpu_custom_call.1} parent=11 // pred_check
          %p340 = pneg %p173
        $region14: #{tpu_custom_call.1} parent=11 // pred_check_branch
          %342 = sbr.rel (%p340) target = $region16
        $region15: #{tpu_custom_call.1} parent=11 // pred_region
          _
        $region16: #{tpu_custom_call.1} parent=11 // pred_fallthru
          _
        // Predicated region
        $region17: #{tpu_custom_call.1} parent=11 // pred_check
          %p343 = pneg %p194
        $region18: #{tpu_custom_call.1} parent=11 // pred_check_branch
          %345 = sbr.rel (%p343) target = $region20
        $region19: #{tpu_custom_call.1} parent=11 // pred_region
          _
        $region20: #{tpu_custom_call.1} parent=11 // pred_fallthru
          _
        // Predicated region
        $region21: #{tpu_custom_call.1} parent=11 // pred_check
          %p346 = pneg %p215
        $region22: #{tpu_custom_call.1} parent=11 // pred_check_branch
          %348 = sbr.rel (%p346) target = $region24
        $region23: #{tpu_custom_call.1} parent=11 // pred_region
          _
        $region24: #{tpu_custom_call.1} parent=11 // pred_fallthru
          _
        // Predicated region
        $region25: #{tpu_custom_call.1} parent=11 // pred_check
          %p349 = pneg %p236
        $region26: #{tpu_custom_call.1} parent=11 // pred_check_branch
          %351 = sbr.rel (%p349) target = $region28
        $region27: #{tpu_custom_call.1} parent=11 // pred_region
          _
        $region28: #{tpu_custom_call.1} parent=11 // pred_fallthru
          _
        // Predicated region
        $region29: #{tpu_custom_call.1} parent=11 // pred_check
          %p352 = pneg %p257
        $region30: #{tpu_custom_call.1} parent=11 // pred_check_branch
          %354 = sbr.rel (%p352) target = $region32
        $region31: #{tpu_custom_call.1} parent=11 // pred_region
          _
        $region32: #{tpu_custom_call.1} parent=11 // pred_fallthru
          _
        // Predicated region
        $region33: #{tpu_custom_call.1} parent=11 // pred_check
          %p355 = pneg %p278
        $region34: #{tpu_custom_call.1} parent=11 // pred_check_branch
          %357 = sbr.rel (%p355) target = $region36
        $region35: #{tpu_custom_call.1} parent=11 // pred_region
          _
        $region36: #{tpu_custom_call.1} parent=11 // pred_fallthru
          _
        // Predicated region
        $region37: #{tpu_custom_call.1} parent=11 // pred_check
          %p358 = pneg %p299
        $region38: #{tpu_custom_call.1} parent=11 // pred_check_branch
          %360 = sbr.rel (%p358) target = $region40
        $region39: #{tpu_custom_call.1} parent=11 // pred_region
          _
        $region40: #{tpu_custom_call.1} parent=11 // pred_fallthru
          _
      $region12: #{tpu_custom_call.1} parent=5 // pred_fallthru
        _
      %p361 = scmp.lt.s32.totalorder %s20, 4
      // Predicated region
      $region41: #{tpu_custom_call.1} parent=5 // pred_check
        %p362 = pneg %p361
      $region42: #{tpu_custom_call.1} parent=5 // pred_check_branch
        %364 = sbr.rel (%p362) target = $region44
      $region43: #{tpu_custom_call.1} parent=5 // pred_region
        // Predicated region
        $region45: #{tpu_custom_call.1} parent=43 // pred_check
          %p365 = pneg %p56
        $region46: #{tpu_custom_call.1} parent=43 // pred_check_branch
          %367 = sbr.rel (%p365) target = $region48
        $region47: #{tpu_custom_call.1} parent=43 // pred_region
          %s368 = smul.u32 %s27, 2
          %s369 = sadd.s32 %s368, %s28
          %s370 = smul.u32 2, %s369
          %p371 = scmp.lt.s32.totalorder %s370, 7
          %s372 = scalar_select %p371, %s370, 7
          %s373 = scalar_lea.vmem %s0, %s372
          %s374 = smul.u32 %s27, 2
          %s375 = sadd.s32 %s374, %s28
          %s376 = smul.u32 2, %s375
        $region48: #{tpu_custom_call.1} parent=43 // pred_fallthru
          _
        // Predicated region
        $region49: #{tpu_custom_call.1} parent=43 // pred_check
          %p377 = pneg %p86
        $region50: #{tpu_custom_call.1} parent=43 // pred_check_branch
          %379 = sbr.rel (%p377) target = $region52
        $region51: #{tpu_custom_call.1} parent=43 // pred_region
          %s380 = smul.u32 %s27, 2
          %s381 = sadd.s32 %s380, %s28
          %s382 = smul.u32 32, %s381
          %p383 = scmp.lt.s32.totalorder %s382, 127
          %s384 = scalar_select %p383, %s382, 127
          %s385 = smul.addr %s384, 8
          %s386 = scalar_lea.vmem %s1, %s385
          %s387 = smul.u32 %s27, 2
          %s388 = sadd.s32 %s387, %s28
          %s389 = smul.u32 32, %s388
        $region52: #{tpu_custom_call.1} parent=43 // pred_fallthru
          _
        // Predicated region
        $region53: #{tpu_custom_call.1} parent=43 // pred_check
          %p390 = pneg %p116
        $region54: #{tpu_custom_call.1} parent=43 // pred_check_branch
          %392 = sbr.rel (%p390) target = $region56
        $region55: #{tpu_custom_call.1} parent=43 // pred_region
          %s393 = smul.u32 %s27, 2
          %s394 = sadd.s32 %s393, %s28
          %s395 = smul.u32 32, %s394
          %p396 = scmp.lt.s32.totalorder %s395, 127
          %s397 = scalar_select %p396, %s395, 127
          %s398 = smul.addr %s397, 8
          %s399 = scalar_lea.vmem %s2, %s398
          %s400 = smul.u32 %s27, 2
          %s401 = sadd.s32 %s400, %s28
          %s402 = smul.u32 32, %s401
        $region56: #{tpu_custom_call.1} parent=43 // pred_fallthru
          _
        // Predicated region
        $region57: #{tpu_custom_call.1} parent=43 // pred_check
          %p403 = pneg %p146
        $region58: #{tpu_custom_call.1} parent=43 // pred_check_branch
          %405 = sbr.rel (%p403) target = $region60
        $region59: #{tpu_custom_call.1} parent=43 // pred_region
          %s406 = smul.u32 %s27, 2
          %s407 = sadd.s32 %s406, %s28
          %s408 = smul.u32 32, %s407
          %p409 = scmp.lt.s32.totalorder %s408, 127
          %s410 = scalar_select %p409, %s408, 127
          %s411 = smul.addr %s410, 8
          %s412 = scalar_lea.vmem %s3, %s411
          %s413 = smul.u32 %s27, 2
          %s414 = sadd.s32 %s413, %s28
          %s415 = smul.u32 32, %s414
        $region60: #{tpu_custom_call.1} parent=43 // pred_fallthru
          _
      $region44: #{tpu_custom_call.1} parent=5 // pred_fallthru
        _
      %p416 = scmp.le.s32.totalorder 1, %s20
      %p417 = scmp.lt.s32.totalorder %s20, 5
      %p418 = pnand %p416, %p417
      %p419 = pneg %p418
      // Predicated region
      $region61: #{tpu_custom_call.1} parent=5 // pred_check
        _
      $region62: #{tpu_custom_call.1} parent=5 // pred_check_branch
        %421 = sbr.rel (%p418) target = $region64
      $region63: #{tpu_custom_call.1} parent=5 // pred_region
        %s422 = ssub.s32 %s20, 1
        %s423 = smul.u32 %s29, 2
        %s424 = sadd.s32 %s423, %s30
        %s425 = smul.u32 2, %s424
        %p426 = scmp.lt.s32.totalorder %s425, 7
        %s427 = scalar_select %p426, %s425, 7
        %s428 = scalar_lea.vmem %s0, %s427
        %p429 = pneg %p62
        %p430 = pneg %p59
        %s431 = smul.u32 %s29, 2
        %s432 = sadd.s32 %s431, %s30
        %s433 = smul.u32 32, %s432
        %p434 = scmp.lt.s32.totalorder %s433, 127
        %s435 = scalar_select %p434, %s433, 127
        %s436 = smul.addr %s435, 8
        %s437 = scalar_lea.vmem %s1, %s436
        %p438 = pneg %p92
        %p439 = pneg %p89
        %s440 = smul.u32 %s29, 2
        %s441 = sadd.s32 %s440, %s30
        %s442 = smul.u32 32, %s441
        %p443 = scmp.lt.s32.totalorder %s442, 127
        %s444 = scalar_select %p443, %s442, 127
        %s445 = smul.addr %s444, 8
        %s446 = scalar_lea.vmem %s2, %s445
        %p447 = pneg %p122
        %p448 = pneg %p119
        %s449 = smul.u32 %s29, 2
        %s450 = sadd.s32 %s449, %s30
        %s451 = smul.u32 32, %s450
        %p452 = scmp.lt.s32.totalorder %s451, 127
        %s453 = scalar_select %p452, %s451, 127
        %s454 = smul.addr %s453, 8
        %s455 = scalar_lea.vmem %s3, %s454
        %p456 = pneg %p152
        %p457 = pneg %p149
        %p458 = pneg %p173
        %p459 = pneg %p170
        %p460 = pneg %p194
        %p461 = pneg %p191
        %p462 = pneg %p215
        %p463 = pneg %p212
        %p464 = pneg %p236
        %p465 = pneg %p233
        %p466 = pneg %p257
        %p467 = pneg %p254
        %p468 = pneg %p278
        %p469 = pneg %p275
        %p470 = pneg %p299
        %p471 = pneg %p296
        %p472 = pneg %p325
        %p473 = pneg %p322
        %s474 = sand.u32 %s312, 1
        %s475 = scalar_lea.sflag [#allocation6], %s474
        %s476 = sand.u32 %s312, 1
        %s477 = smul.addr %s476, 128
        %s478 = scalar_lea.vmem [#allocation5], %s477
        %s479 = smul.u32 %s29, 2
        %s480 = sadd.s32 %s479, %s30
        %s481 = smul.u32 2, %s480
        %p482 = scmp.lt.s32.totalorder %s481, 7
        %s483 = scalar_select %p482, %s481, 7
        %s484 = scalar_lea.vmem %s0, %s483
        %s485 = smul.u32 %s29, 2
        %s486 = sadd.s32 %s485, %s30
        %s487 = smul.u32 2, %s486
        %s488 = smul.u32 %s29, 2
        %s489 = sadd.s32 %s488, %s30
        %s490 = smul.u32 32, %s489
        %p491 = scmp.lt.s32.totalorder %s490, 127
        %s492 = scalar_select %p491, %s490, 127
        %s493 = smul.addr %s492, 8
        %s494 = scalar_lea.vmem %s1, %s493
        %s495 = smul.u32 %s29, 2
        %s496 = sadd.s32 %s495, %s30
        %s497 = smul.u32 32, %s496
        %s498 = smul.u32 %s29, 2
        %s499 = sadd.s32 %s498, %s30
        %s500 = smul.u32 32, %s499
        %p501 = scmp.lt.s32.totalorder %s500, 127
        %s502 = scalar_select %p501, %s500, 127
        %s503 = smul.addr %s502, 8
        %s504 = scalar_lea.vmem %s2, %s503
        %s505 = smul.u32 %s29, 2
        %s506 = sadd.s32 %s505, %s30
        %s507 = smul.u32 32, %s506
        %s508 = smul.u32 %s29, 2
        %s509 = sadd.s32 %s508, %s30
        %s510 = smul.u32 32, %s509
        %p511 = scmp.lt.s32.totalorder %s510, 127
        %s512 = scalar_select %p511, %s510, 127
        %s513 = smul.addr %s512, 8
        %s514 = scalar_lea.vmem %s3, %s513
        %s515 = smul.u32 %s29, 2
        %s516 = sadd.s32 %s515, %s30
        %s517 = smul.u32 32, %s516
        %s518 = smul.u32 16, %s29
        %p519 = scmp.eq.s32.totalorder %s30, 0
        // Predicated region
        $region65: #{tpu_custom_call.1} parent=63 // pred_check
          %p520 = pneg %p519
        $region66: #{tpu_custom_call.1} parent=63 // pred_check_branch
          %522 = sbr.rel (%p520) target = $region68
        $region67: #{tpu_custom_call.1} parent=63 // pred_region
          %523 = vst [vmem:[#allocation4] sm:$0xff] 0.0
          %524 = vst [vmem:[#allocation4 + $0x8] sm:$0xff] 0.0
          %525 = vst [vmem:[#allocation4 + $0x10] sm:$0xff] 0.0
          %526 = vst [vmem:[#allocation4 + $0x18] sm:$0xff] 0.0
          %527 = vst [vmem:[#allocation4 + $0x20] sm:$0xff] 0.0
          %528 = vst [vmem:[#allocation4 + $0x28] sm:$0xff] 0.0
          %529 = vst [vmem:[#allocation4 + $0x30] sm:$0xff] 0.0
          %530 = vst [vmem:[#allocation4 + $0x38] sm:$0xff] 0.0
          %531 = vst [vmem:[#allocation4 + $0x40] sm:$0xff] 0.0
          %532 = vst [vmem:[#allocation4 + $0x48] sm:$0xff] 0.0
          %533 = vst [vmem:[#allocation4 + $0x50] sm:$0xff] 0.0
          %534 = vst [vmem:[#allocation4 + $0x58] sm:$0xff] 0.0
          %535 = vst [vmem:[#allocation4 + $0x60] sm:$0xff] 0.0
          %536 = vst [vmem:[#allocation4 + $0x68] sm:$0xff] 0.0
          %537 = vst [vmem:[#allocation4 + $0x70] sm:$0xff] 0.0
          %538 = vst [vmem:[#allocation4 + $0x78] sm:$0xff] 0.0
          %v539 = vlaneseq
          %v540 = vand.u32 %v539, 127
          %541 = vst [vmem:[#allocation2] sm:$0xff] %v540
          %542 = vst [vmem:[#allocation2 + $0x8] sm:$0xff] %v540
          %543 = vst [vmem:[#allocation2 + $0x10] sm:$0xff] %v540
          %544 = vst [vmem:[#allocation2 + $0x18] sm:$0xff] %v540
          %545 = vst [vmem:[#allocation2 + $0x20] sm:$0xff] %v540
          %546 = vst [vmem:[#allocation2 + $0x28] sm:$0xff] %v540
          %547 = vst [vmem:[#allocation2 + $0x30] sm:$0xff] %v540
          %548 = vst [vmem:[#allocation2 + $0x38] sm:$0xff] %v540
          %549 = vst [vmem:[#allocation2 + $0x40] sm:$0xff] %v540
          %550 = vst [vmem:[#allocation2 + $0x48] sm:$0xff] %v540
          %551 = vst [vmem:[#allocation2 + $0x50] sm:$0xff] %v540
          %552 = vst [vmem:[#allocation2 + $0x58] sm:$0xff] %v540
          %553 = vst [vmem:[#allocation2 + $0x60] sm:$0xff] %v540
          %554 = vst [vmem:[#allocation2 + $0x68] sm:$0xff] %v540
          %555 = vst [vmem:[#allocation2 + $0x70] sm:$0xff] %v540
          %556 = vst [vmem:[#allocation2 + $0x78] sm:$0xff] %v540
          %557 = vst [vmem:[#allocation2 + $0x80] sm:$0xff] %v540
          %558 = vst [vmem:[#allocation2 + $0x88] sm:$0xff] %v540
          %559 = vst [vmem:[#allocation2 + $0x90] sm:$0xff] %v540
          %560 = vst [vmem:[#allocation2 + $0x98] sm:$0xff] %v540
          %561 = vst [vmem:[#allocation2 + $0xa0] sm:$0xff] %v540
          %562 = vst [vmem:[#allocation2 + $0xa8] sm:$0xff] %v540
          %563 = vst [vmem:[#allocation2 + $0xb0] sm:$0xff] %v540
          %564 = vst [vmem:[#allocation2 + $0xb8] sm:$0xff] %v540
          %565 = vst [vmem:[#allocation2 + $0xc0] sm:$0xff] %v540
          %566 = vst [vmem:[#allocation2 + $0xc8] sm:$0xff] %v540
          %567 = vst [vmem:[#allocation2 + $0xd0] sm:$0xff] %v540
          %568 = vst [vmem:[#allocation2 + $0xd8] sm:$0xff] %v540
          %569 = vst [vmem:[#allocation2 + $0xe0] sm:$0xff] %v540
          %570 = vst [vmem:[#allocation2 + $0xe8] sm:$0xff] %v540
          %571 = vst [vmem:[#allocation2 + $0xf0] sm:$0xff] %v540
          %572 = vst [vmem:[#allocation2 + $0xf8] sm:$0xff] %v540
          %v573 = vlaneseq
          %v574 = vshrl.u32 %v573, 7
          %v575 = vadd.s32 %v574, 8
          %v576 = vadd.s32 %v574, 16
          %v577 = vadd.s32 %v574, 24
          %v578 = vadd.s32 %v574, 32
          %v579 = vadd.s32 %v574, 40
          %v580 = vadd.s32 %v574, 48
          %v581 = vadd.s32 %v574, 56
          %v582 = vadd.s32 %v574, 64
          %v583 = vadd.s32 %v574, 72
          %v584 = vadd.s32 %v574, 80
          %v585 = vadd.s32 %v574, 88
          %v586 = vadd.s32 %v574, 96
          %v587 = vadd.s32 %v574, 104
          %v588 = vadd.s32 %v574, 112
          %v589 = vadd.s32 %v574, 120
          %590 = vst [vmem:[#allocation3] sm:$0xff] %v574
          %591 = vst [vmem:[#allocation3 + $0x8] sm:$0xff] %v574
          %592 = vst [vmem:[#allocation3 + $0x10] sm:$0xff] %v575
          %593 = vst [vmem:[#allocation3 + $0x18] sm:$0xff] %v575
          %594 = vst [vmem:[#allocation3 + $0x20] sm:$0xff] %v576
          %595 = vst [vmem:[#allocation3 + $0x28] sm:$0xff] %v576
          %596 = vst [vmem:[#allocation3 + $0x30] sm:$0xff] %v577
          %597 = vst [vmem:[#allocation3 + $0x38] sm:$0xff] %v577
          %598 = vst [vmem:[#allocation3 + $0x40] sm:$0xff] %v578
          %599 = vst [vmem:[#allocation3 + $0x48] sm:$0xff] %v578
          %600 = vst [vmem:[#allocation3 + $0x50] sm:$0xff] %v579
          %601 = vst [vmem:[#allocation3 + $0x58] sm:$0xff] %v579
          %602 = vst [vmem:[#allocation3 + $0x60] sm:$0xff] %v580
          %603 = vst [vmem:[#allocation3 + $0x68] sm:$0xff] %v580
          %604 = vst [vmem:[#allocation3 + $0x70] sm:$0xff] %v581
          %605 = vst [vmem:[#allocation3 + $0x78] sm:$0xff] %v581
          %606 = vst [vmem:[#allocation3 + $0x80] sm:$0xff] %v582
          %607 = vst [vmem:[#allocation3 + $0x88] sm:$0xff] %v582
          %608 = vst [vmem:[#allocation3 + $0x90] sm:$0xff] %v583
          %609 = vst [vmem:[#allocation3 + $0x98] sm:$0xff] %v583
          %610 = vst [vmem:[#allocation3 + $0xa0] sm:$0xff] %v584
          %611 = vst [vmem:[#allocation3 + $0xa8] sm:$0xff] %v584
          %612 = vst [vmem:[#allocation3 + $0xb0] sm:$0xff] %v585
          %613 = vst [vmem:[#allocation3 + $0xb8] sm:$0xff] %v585
          %614 = vst [vmem:[#allocation3 + $0xc0] sm:$0xff] %v586
          %615 = vst [vmem:[#allocation3 + $0xc8] sm:$0xff] %v586
          %616 = vst [vmem:[#allocation3 + $0xd0] sm:$0xff] %v587
          %617 = vst [vmem:[#allocation3 + $0xd8] sm:$0xff] %v587
          %618 = vst [vmem:[#allocation3 + $0xe0] sm:$0xff] %v588
          %619 = vst [vmem:[#allocation3 + $0xe8] sm:$0xff] %v588
          %620 = vst [vmem:[#allocation3 + $0xf0] sm:$0xff] %v589
          %621 = vst [vmem:[#allocation3 + $0xf8] sm:$0xff] %v589
        $region68: #{tpu_custom_call.1} parent=63 // pred_fallthru
          _
        %v622 = vld [vmem:[#allocation2] sm:$0xff]
        %v623 = vld [vmem:[#allocation2 + $0x8] sm:$0xff]
        %v624 = vld [vmem:[#allocation2 + $0x10] sm:$0xff]
        %v625 = vld [vmem:[#allocation2 + $0x18] sm:$0xff]
        %v626 = vld [vmem:[#allocation2 + $0x20] sm:$0xff]
        %v627 = vld [vmem:[#allocation2 + $0x28] sm:$0xff]
        %v628 = vld [vmem:[#allocation2 + $0x30] sm:$0xff]
        %v629 = vld [vmem:[#allocation2 + $0x38] sm:$0xff]
        %v630 = vld [vmem:[#allocation2 + $0x40] sm:$0xff]
        %v631 = vld [vmem:[#allocation2 + $0x48] sm:$0xff]
        %v632 = vld [vmem:[#allocation2 + $0x50] sm:$0xff]
        %v633 = vld [vmem:[#allocation2 + $0x58] sm:$0xff]
        %v634 = vld [vmem:[#allocation2 + $0x60] sm:$0xff]
        %v635 = vld [vmem:[#allocation2 + $0x68] sm:$0xff]
        %v636 = vld [vmem:[#allocation2 + $0x70] sm:$0xff]
        %v637 = vld [vmem:[#allocation2 + $0x78] sm:$0xff]
        %v638 = vld [vmem:[#allocation2 + $0x80] sm:$0xff]
        %v639 = vld [vmem:[#allocation2 + $0x88] sm:$0xff]
        %v640 = vld [vmem:[#allocation2 + $0x90] sm:$0xff]
        %v641 = vld [vmem:[#allocation2 + $0x98] sm:$0xff]
        %v642 = vld [vmem:[#allocation2 + $0xa0] sm:$0xff]
        %v643 = vld [vmem:[#allocation2 + $0xa8] sm:$0xff]
        %v644 = vld [vmem:[#allocation2 + $0xb0] sm:$0xff]
        %v645 = vld [vmem:[#allocation2 + $0xb8] sm:$0xff]
        %v646 = vld [vmem:[#allocation2 + $0xc0] sm:$0xff]
        %v647 = vld [vmem:[#allocation2 + $0xc8] sm:$0xff]
        %v648 = vld [vmem:[#allocation2 + $0xd0] sm:$0xff]
        %v649 = vld [vmem:[#allocation2 + $0xd8] sm:$0xff]
        %v650 = vld [vmem:[#allocation2 + $0xe0] sm:$0xff]
        %v651 = vld [vmem:[#allocation2 + $0xe8] sm:$0xff]
        %v652 = vld [vmem:[#allocation2 + $0xf0] sm:$0xff]
        %v653 = vld [vmem:[#allocation2 + $0xf8] sm:$0xff]
        %v654 = vld [vmem:[%s494] sm:$0xff]
        %v655 = vld [vmem:[%s494 + $0x8] sm:$0xff]
        %v656 = vld [vmem:[%s494 + $0x10] sm:$0xff]
        %v657 = vld [vmem:[%s494 + $0x18] sm:$0xff]
        %v658 = vld [vmem:[%s494 + $0x20] sm:$0xff]
        %v659 = vld [vmem:[%s494 + $0x28] sm:$0xff]
        %v660 = vld [vmem:[%s494 + $0x30] sm:$0xff]
        %v661 = vld [vmem:[%s494 + $0x38] sm:$0xff]
        %v662 = vld [vmem:[%s494 + $0x40] sm:$0xff]
        %v663 = vld [vmem:[%s494 + $0x48] sm:$0xff]
        %v664 = vld [vmem:[%s494 + $0x50] sm:$0xff]
        %v665 = vld [vmem:[%s494 + $0x58] sm:$0xff]
        %v666 = vld [vmem:[%s494 + $0x60] sm:$0xff]
        %v667 = vld [vmem:[%s494 + $0x68] sm:$0xff]
        %v668 = vld [vmem:[%s494 + $0x70] sm:$0xff]
        %v669 = vld [vmem:[%s494 + $0x78] sm:$0xff]
        %v670 = vld [vmem:[%s494 + $0x80] sm:$0xff]
        %v671 = vld [vmem:[%s494 + $0x88] sm:$0xff]
        %v672 = vld [vmem:[%s494 + $0x90] sm:$0xff]
        %v673 = vld [vmem:[%s494 + $0x98] sm:$0xff]
        %v674 = vld [vmem:[%s494 + $0xa0] sm:$0xff]
        %v675 = vld [vmem:[%s494 + $0xa8] sm:$0xff]
        %v676 = vld [vmem:[%s494 + $0xb0] sm:$0xff]
        %v677 = vld [vmem:[%s494 + $0xb8] sm:$0xff]
        %v678 = vld [vmem:[%s494 + $0xc0] sm:$0xff]
        %v679 = vld [vmem:[%s494 + $0xc8] sm:$0xff]
        %v680 = vld [vmem:[%s494 + $0xd0] sm:$0xff]
        %v681 = vld [vmem:[%s494 + $0xd8] sm:$0xff]
        %v682 = vld [vmem:[%s494 + $0xe0] sm:$0xff]
        %v683 = vld [vmem:[%s494 + $0xe8] sm:$0xff]
        %v684 = vld [vmem:[%s494 + $0xf0] sm:$0xff]
        %v685 = vld [vmem:[%s494 + $0xf8] sm:$0xff]
        %686 = vset.pattern.permute.xlu0 0
        %687 = vperm.xlu0 %686, %v654
        %v688 = vpop.permute.xlu0 %687
        %689 = vset.pattern.permute.xlu0 0
        %690 = vperm.xlu0 %689, %v655
        %v691 = vpop.permute.xlu0 %690
        %692 = vset.pattern.permute.xlu0 0
        %693 = vperm.xlu0 %692, %v656
        %v694 = vpop.permute.xlu0 %693
        %695 = vset.pattern.permute.xlu0 0
        %696 = vperm.xlu0 %695, %v657
        %v697 = vpop.permute.xlu0 %696
        %698 = vset.pattern.permute.xlu0 0
        %699 = vperm.xlu0 %698, %v658
        %v700 = vpop.permute.xlu0 %699
        %701 = vset.pattern.permute.xlu0 0
        %702 = vperm.xlu0 %701, %v659
        %v703 = vpop.permute.xlu0 %702
        %704 = vset.pattern.permute.xlu0 0
        %705 = vperm.xlu0 %704, %v660
        %v706 = vpop.permute.xlu0 %705
        %707 = vset.pattern.permute.xlu0 0
        %708 = vperm.xlu0 %707, %v661
        %v709 = vpop.permute.xlu0 %708
        %710 = vset.pattern.permute.xlu0 0
        %711 = vperm.xlu0 %710, %v662
        %v712 = vpop.permute.xlu0 %711
        %713 = vset.pattern.permute.xlu0 0
        %714 = vperm.xlu0 %713, %v663
        %v715 = vpop.permute.xlu0 %714
        %716 = vset.pattern.permute.xlu0 0
        %717 = vperm.xlu0 %716, %v664
        %v718 = vpop.permute.xlu0 %717
        %719 = vset.pattern.permute.xlu0 0
        %720 = vperm.xlu0 %719, %v665
        %v721 = vpop.permute.xlu0 %720
        %722 = vset.pattern.permute.xlu0 0
        %723 = vperm.xlu0 %722, %v666
        %v724 = vpop.permute.xlu0 %723
        %725 = vset.pattern.permute.xlu0 0
        %726 = vperm.xlu0 %725, %v667
        %v727 = vpop.permute.xlu0 %726
        %728 = vset.pattern.permute.xlu0 0
        %729 = vperm.xlu0 %728, %v668
        %v730 = vpop.permute.xlu0 %729
        %731 = vset.pattern.permute.xlu0 0
        %732 = vperm.xlu0 %731, %v669
        %v733 = vpop.permute.xlu0 %732
        %734 = vset.pattern.permute.xlu0 0
        %735 = vperm.xlu0 %734, %v670
        %v736 = vpop.permute.xlu0 %735
        %737 = vset.pattern.permute.xlu0 0
        %738 = vperm.xlu0 %737, %v671
        %v739 = vpop.permute.xlu0 %738
        %740 = vset.pattern.permute.xlu0 0
        %741 = vperm.xlu0 %740, %v672
        %v742 = vpop.permute.xlu0 %741
        %743 = vset.pattern.permute.xlu0 0
        %744 = vperm.xlu0 %743, %v673
        %v745 = vpop.permute.xlu0 %744
        %746 = vset.pattern.permute.xlu0 0
        %747 = vperm.xlu0 %746, %v674
        %v748 = vpop.permute.xlu0 %747
        %749 = vset.pattern.permute.xlu0 0
        %750 = vperm.xlu0 %749, %v675
        %v751 = vpop.permute.xlu0 %750
        %752 = vset.pattern.permute.xlu0 0
        %753 = vperm.xlu0 %752, %v676
        %v754 = vpop.permute.xlu0 %753
        %755 = vset.pattern.permute.xlu0 0
        %756 = vperm.xlu0 %755, %v677
        %v757 = vpop.permute.xlu0 %756
        %758 = vset.pattern.permute.xlu0 0
        %759 = vperm.xlu0 %758, %v678
        %v760 = vpop.permute.xlu0 %759
        %761 = vset.pattern.permute.xlu0 0
        %762 = vperm.xlu0 %761, %v679
        %v763 = vpop.permute.xlu0 %762
        %764 = vset.pattern.permute.xlu0 0
        %765 = vperm.xlu0 %764, %v680
        %v766 = vpop.permute.xlu0 %765
        %767 = vset.pattern.permute.xlu0 0
        %768 = vperm.xlu0 %767, %v681
        %v769 = vpop.permute.xlu0 %768
        %770 = vset.pattern.permute.xlu0 0
        %771 = vperm.xlu0 %770, %v682
        %v772 = vpop.permute.xlu0 %771
        %773 = vset.pattern.permute.xlu0 0
        %774 = vperm.xlu0 %773, %v683
        %v775 = vpop.permute.xlu0 %774
        %776 = vset.pattern.permute.xlu0 0
        %777 = vperm.xlu0 %776, %v684
        %v778 = vpop.permute.xlu0 %777
        %779 = vset.pattern.permute.xlu0 0
        %780 = vperm.xlu0 %779, %v685
        %v781 = vpop.permute.xlu0 %780
        %vm782 = vcmp.eq.s32.totalorder %v622, %v688
        %vm783 = vcmp.eq.s32.totalorder %v623, %v691
        %vm784 = vcmp.eq.s32.totalorder %v624, %v694
        %vm785 = vcmp.eq.s32.totalorder %v625, %v697
        %vm786 = vcmp.eq.s32.totalorder %v626, %v700
        %vm787 = vcmp.eq.s32.totalorder %v627, %v703
        %vm788 = vcmp.eq.s32.totalorder %v628, %v706
        %vm789 = vcmp.eq.s32.totalorder %v629, %v709
        %vm790 = vcmp.eq.s32.totalorder %v630, %v712
        %vm791 = vcmp.eq.s32.totalorder %v631, %v715
        %vm792 = vcmp.eq.s32.totalorder %v632, %v718
        %vm793 = vcmp.eq.s32.totalorder %v633, %v721
        %vm794 = vcmp.eq.s32.totalorder %v634, %v724
        %vm795 = vcmp.eq.s32.totalorder %v635, %v727
        %vm796 = vcmp.eq.s32.totalorder %v636, %v730
        %vm797 = vcmp.eq.s32.totalorder %v637, %v733
        %vm798 = vcmp.eq.s32.totalorder %v638, %v736
        %vm799 = vcmp.eq.s32.totalorder %v639, %v739
        %vm800 = vcmp.eq.s32.totalorder %v640, %v742
        %vm801 = vcmp.eq.s32.totalorder %v641, %v745
        %vm802 = vcmp.eq.s32.totalorder %v642, %v748
        %vm803 = vcmp.eq.s32.totalorder %v643, %v751
        %vm804 = vcmp.eq.s32.totalorder %v644, %v754
        %vm805 = vcmp.eq.s32.totalorder %v645, %v757
        %vm806 = vcmp.eq.s32.totalorder %v646, %v760
        %vm807 = vcmp.eq.s32.totalorder %v647, %v763
        %vm808 = vcmp.eq.s32.totalorder %v648, %v766
        %vm809 = vcmp.eq.s32.totalorder %v649, %v769
        %vm810 = vcmp.eq.s32.totalorder %v650, %v772
        %vm811 = vcmp.eq.s32.totalorder %v651, %v775
        %vm812 = vcmp.eq.s32.totalorder %v652, %v778
        %vm813 = vcmp.eq.s32.totalorder %v653, %v781
        %v814 = vsel %vm782, 1, 0
        %v815 = vsel %vm783, 1, 0
        %v816 = vsel %vm784, 1, 0
        %v817 = vsel %vm785, 1, 0
        %v818 = vsel %vm786, 1, 0
        %v819 = vsel %vm787, 1, 0
        %v820 = vsel %vm788, 1, 0
        %v821 = vsel %vm789, 1, 0
        %v822 = vsel %vm790, 1, 0
        %v823 = vsel %vm791, 1, 0
        %v824 = vsel %vm792, 1, 0
        %v825 = vsel %vm793, 1, 0
        %v826 = vsel %vm794, 1, 0
        %v827 = vsel %vm795, 1, 0
        %v828 = vsel %vm796, 1, 0
        %v829 = vsel %vm797, 1, 0
        %v830 = vsel %vm798, 1, 0
        %v831 = vsel %vm799, 1, 0
        %v832 = vsel %vm800, 1, 0
        %v833 = vsel %vm801, 1, 0
        %v834 = vsel %vm802, 1, 0
        %v835 = vsel %vm803, 1, 0
        %v836 = vsel %vm804, 1, 0
        %v837 = vsel %vm805, 1, 0
        %v838 = vsel %vm806, 1, 0
        %v839 = vsel %vm807, 1, 0
        %v840 = vsel %vm808, 1, 0
        %v841 = vsel %vm809, 1, 0
        %v842 = vsel %vm810, 1, 0
        %v843 = vsel %vm811, 1, 0
        %v844 = vsel %vm812, 1, 0
        %v845 = vsel %vm813, 1, 0
        %v846 = vcvt.s32.f32 %v814
        %v847 = vcvt.s32.f32 %v815
        %v848 = vcvt.s32.f32 %v816
        %v849 = vcvt.s32.f32 %v817
        %v850 = vcvt.s32.f32 %v818
        %v851 = vcvt.s32.f32 %v819
        %v852 = vcvt.s32.f32 %v820
        %v853 = vcvt.s32.f32 %v821
        %v854 = vcvt.s32.f32 %v822
        %v855 = vcvt.s32.f32 %v823
        %v856 = vcvt.s32.f32 %v824
        %v857 = vcvt.s32.f32 %v825
        %v858 = vcvt.s32.f32 %v826
        %v859 = vcvt.s32.f32 %v827
        %v860 = vcvt.s32.f32 %v828
        %v861 = vcvt.s32.f32 %v829
        %v862 = vcvt.s32.f32 %v830
        %v863 = vcvt.s32.f32 %v831
        %v864 = vcvt.s32.f32 %v832
        %v865 = vcvt.s32.f32 %v833
        %v866 = vcvt.s32.f32 %v834
        %v867 = vcvt.s32.f32 %v835
        %v868 = vcvt.s32.f32 %v836
        %v869 = vcvt.s32.f32 %v837
        %v870 = vcvt.s32.f32 %v838
        %v871 = vcvt.s32.f32 %v839
        %v872 = vcvt.s32.f32 %v840
        %v873 = vcvt.s32.f32 %v841
        %v874 = vcvt.s32.f32 %v842
        %v875 = vcvt.s32.f32 %v843
        %v876 = vcvt.s32.f32 %v844
        %v877 = vcvt.s32.f32 %v845
        %v878 = vld [vmem:[%s504] sm:$0xff]
        %v879 = vld [vmem:[%s504 + $0x8] sm:$0xff]
        %v880 = vld [vmem:[%s504 + $0x10] sm:$0xff]
        %v881 = vld [vmem:[%s504 + $0x18] sm:$0xff]
        %v882 = vld [vmem:[%s504 + $0x20] sm:$0xff]
        %v883 = vld [vmem:[%s504 + $0x28] sm:$0xff]
        %v884 = vld [vmem:[%s504 + $0x30] sm:$0xff]
        %v885 = vld [vmem:[%s504 + $0x38] sm:$0xff]
        %v886 = vld [vmem:[%s504 + $0x40] sm:$0xff]
        %v887 = vld [vmem:[%s504 + $0x48] sm:$0xff]
        %v888 = vld [vmem:[%s504 + $0x50] sm:$0xff]
        %v889 = vld [vmem:[%s504 + $0x58] sm:$0xff]
        %v890 = vld [vmem:[%s504 + $0x60] sm:$0xff]
        %v891 = vld [vmem:[%s504 + $0x68] sm:$0xff]
        %v892 = vld [vmem:[%s504 + $0x70] sm:$0xff]
        %v893 = vld [vmem:[%s504 + $0x78] sm:$0xff]
        %v894 = vld [vmem:[%s504 + $0x80] sm:$0xff]
        %v895 = vld [vmem:[%s504 + $0x88] sm:$0xff]
        %v896 = vld [vmem:[%s504 + $0x90] sm:$0xff]
        %v897 = vld [vmem:[%s504 + $0x98] sm:$0xff]
        %v898 = vld [vmem:[%s504 + $0xa0] sm:$0xff]
        %v899 = vld [vmem:[%s504 + $0xa8] sm:$0xff]
        %v900 = vld [vmem:[%s504 + $0xb0] sm:$0xff]
        %v901 = vld [vmem:[%s504 + $0xb8] sm:$0xff]
        %v902 = vld [vmem:[%s504 + $0xc0] sm:$0xff]
        %v903 = vld [vmem:[%s504 + $0xc8] sm:$0xff]
        %v904 = vld [vmem:[%s504 + $0xd0] sm:$0xff]
        %v905 = vld [vmem:[%s504 + $0xd8] sm:$0xff]
        %v906 = vld [vmem:[%s504 + $0xe0] sm:$0xff]
        %v907 = vld [vmem:[%s504 + $0xe8] sm:$0xff]
        %v908 = vld [vmem:[%s504 + $0xf0] sm:$0xff]
        %v909 = vld [vmem:[%s504 + $0xf8] sm:$0xff]
        %910 = vset.pattern.permute.xlu0 0
        %911 = vperm.xlu0 %910, %v878
        %v912 = vpop.permute.xlu0 %911
        %913 = vset.pattern.permute.xlu0 0
        %914 = vperm.xlu0 %913, %v879
        %v915 = vpop.permute.xlu0 %914
        %916 = vset.pattern.permute.xlu0 0
        %917 = vperm.xlu0 %916, %v880
        %v918 = vpop.permute.xlu0 %917
        %919 = vset.pattern.permute.xlu0 0
        %920 = vperm.xlu0 %919, %v881
        %v921 = vpop.permute.xlu0 %920
        %922 = vset.pattern.permute.xlu0 0
        %923 = vperm.xlu0 %922, %v882
        %v924 = vpop.permute.xlu0 %923
        %925 = vset.pattern.permute.xlu0 0
        %926 = vperm.xlu0 %925, %v883
        %v927 = vpop.permute.xlu0 %926
        %928 = vset.pattern.permute.xlu0 0
        %929 = vperm.xlu0 %928, %v884
        %v930 = vpop.permute.xlu0 %929
        %931 = vset.pattern.permute.xlu0 0
        %932 = vperm.xlu0 %931, %v885
        %v933 = vpop.permute.xlu0 %932
        %934 = vset.pattern.permute.xlu0 0
        %935 = vperm.xlu0 %934, %v886
        %v936 = vpop.permute.xlu0 %935
        %937 = vset.pattern.permute.xlu0 0
        %938 = vperm.xlu0 %937, %v887
        %v939 = vpop.permute.xlu0 %938
        %940 = vset.pattern.permute.xlu0 0
        %941 = vperm.xlu0 %940, %v888
        %v942 = vpop.permute.xlu0 %941
        %943 = vset.pattern.permute.xlu0 0
        %944 = vperm.xlu0 %943, %v889
        %v945 = vpop.permute.xlu0 %944
        %946 = vset.pattern.permute.xlu0 0
        %947 = vperm.xlu0 %946, %v890
        %v948 = vpop.permute.xlu0 %947
        %949 = vset.pattern.permute.xlu0 0
        %950 = vperm.xlu0 %949, %v891
        %v951 = vpop.permute.xlu0 %950
        %952 = vset.pattern.permute.xlu0 0
        %953 = vperm.xlu0 %952, %v892
        %v954 = vpop.permute.xlu0 %953
        %955 = vset.pattern.permute.xlu0 0
        %956 = vperm.xlu0 %955, %v893
        %v957 = vpop.permute.xlu0 %956
        %958 = vset.pattern.permute.xlu0 0
        %959 = vperm.xlu0 %958, %v894
        %v960 = vpop.permute.xlu0 %959
        %961 = vset.pattern.permute.xlu0 0
        %962 = vperm.xlu0 %961, %v895
        %v963 = vpop.permute.xlu0 %962
        %964 = vset.pattern.permute.xlu0 0
        %965 = vperm.xlu0 %964, %v896
        %v966 = vpop.permute.xlu0 %965
        %967 = vset.pattern.permute.xlu0 0
        %968 = vperm.xlu0 %967, %v897
        %v969 = vpop.permute.xlu0 %968
        %970 = vset.pattern.permute.xlu0 0
        %971 = vperm.xlu0 %970, %v898
        %v972 = vpop.permute.xlu0 %971
        %973 = vset.pattern.permute.xlu0 0
        %974 = vperm.xlu0 %973, %v899
        %v975 = vpop.permute.xlu0 %974
        %976 = vset.pattern.permute.xlu0 0
        %977 = vperm.xlu0 %976, %v900
        %v978 = vpop.permute.xlu0 %977
        %979 = vset.pattern.permute.xlu0 0
        %980 = vperm.xlu0 %979, %v901
        %v981 = vpop.permute.xlu0 %980
        %982 = vset.pattern.permute.xlu0 0
        %983 = vperm.xlu0 %982, %v902
        %v984 = vpop.permute.xlu0 %983
        %985 = vset.pattern.permute.xlu0 0
        %986 = vperm.xlu0 %985, %v903
        %v987 = vpop.permute.xlu0 %986
        %988 = vset.pattern.permute.xlu0 0
        %989 = vperm.xlu0 %988, %v904
        %v990 = vpop.permute.xlu0 %989
        %991 = vset.pattern.permute.xlu0 0
        %992 = vperm.xlu0 %991, %v905
        %v993 = vpop.permute.xlu0 %992
        %994 = vset.pattern.permute.xlu0 0
        %995 = vperm.xlu0 %994, %v906
        %v996 = vpop.permute.xlu0 %995
        %997 = vset.pattern.permute.xlu0 0
        %998 = vperm.xlu0 %997, %v907
        %v999 = vpop.permute.xlu0 %998
        %1000 = vset.pattern.permute.xlu0 0
        %1001 = vperm.xlu0 %1000, %v908
        %v1002 = vpop.permute.xlu0 %1001
        %1003 = vset.pattern.permute.xlu0 0
        %1004 = vperm.xlu0 %1003, %v909
        %v1005 = vpop.permute.xlu0 %1004
        %vm1006 = vcmp.eq.s32.totalorder %v622, %v912
        %vm1007 = vcmp.eq.s32.totalorder %v623, %v915
        %vm1008 = vcmp.eq.s32.totalorder %v624, %v918
        %vm1009 = vcmp.eq.s32.totalorder %v625, %v921
        %vm1010 = vcmp.eq.s32.totalorder %v626, %v924
        %vm1011 = vcmp.eq.s32.totalorder %v627, %v927
        %vm1012 = vcmp.eq.s32.totalorder %v628, %v930
        %vm1013 = vcmp.eq.s32.totalorder %v629, %v933
        %vm1014 = vcmp.eq.s32.totalorder %v630, %v936
        %vm1015 = vcmp.eq.s32.totalorder %v631, %v939
        %vm1016 = vcmp.eq.s32.totalorder %v632, %v942
        %vm1017 = vcmp.eq.s32.totalorder %v633, %v945
        %vm1018 = vcmp.eq.s32.totalorder %v634, %v948
        %vm1019 = vcmp.eq.s32.totalorder %v635, %v951
        %vm1020 = vcmp.eq.s32.totalorder %v636, %v954
        %vm1021 = vcmp.eq.s32.totalorder %v637, %v957
        %vm1022 = vcmp.eq.s32.totalorder %v638, %v960
        %vm1023 = vcmp.eq.s32.totalorder %v639, %v963
        %vm1024 = vcmp.eq.s32.totalorder %v640, %v966
        %vm1025 = vcmp.eq.s32.totalorder %v641, %v969
        %vm1026 = vcmp.eq.s32.totalorder %v642, %v972
        %vm1027 = vcmp.eq.s32.totalorder %v643, %v975
        %vm1028 = vcmp.eq.s32.totalorder %v644, %v978
        %vm1029 = vcmp.eq.s32.totalorder %v645, %v981
        %vm1030 = vcmp.eq.s32.totalorder %v646, %v984
        %vm1031 = vcmp.eq.s32.totalorder %v647, %v987
        %vm1032 = vcmp.eq.s32.totalorder %v648, %v990
        %vm1033 = vcmp.eq.s32.totalorder %v649, %v993
        %vm1034 = vcmp.eq.s32.totalorder %v650, %v996
        %vm1035 = vcmp.eq.s32.totalorder %v651, %v999
        %vm1036 = vcmp.eq.s32.totalorder %v652, %v1002
        %vm1037 = vcmp.eq.s32.totalorder %v653, %v1005
        %v1038 = vsel %vm1006, 1, 0
        %v1039 = vsel %vm1007, 1, 0
        %v1040 = vsel %vm1008, 1, 0
        %v1041 = vsel %vm1009, 1, 0
        %v1042 = vsel %vm1010, 1, 0
        %v1043 = vsel %vm1011, 1, 0
        %v1044 = vsel %vm1012, 1, 0
        %v1045 = vsel %vm1013, 1, 0
        %v1046 = vsel %vm1014, 1, 0
        %v1047 = vsel %vm1015, 1, 0
        %v1048 = vsel %vm1016, 1, 0
        %v1049 = vsel %vm1017, 1, 0
        %v1050 = vsel %vm1018, 1, 0
        %v1051 = vsel %vm1019, 1, 0
        %v1052 = vsel %vm1020, 1, 0
        %v1053 = vsel %vm1021, 1, 0
        %v1054 = vsel %vm1022, 1, 0
        %v1055 = vsel %vm1023, 1, 0
        %v1056 = vsel %vm1024, 1, 0
        %v1057 = vsel %vm1025, 1, 0
        %v1058 = vsel %vm1026, 1, 0
        %v1059 = vsel %vm1027, 1, 0
        %v1060 = vsel %vm1028, 1, 0
        %v1061 = vsel %vm1029, 1, 0
        %v1062 = vsel %vm1030, 1, 0
        %v1063 = vsel %vm1031, 1, 0
        %v1064 = vsel %vm1032, 1, 0
        %v1065 = vsel %vm1033, 1, 0
        %v1066 = vsel %vm1034, 1, 0
        %v1067 = vsel %vm1035, 1, 0
        %v1068 = vsel %vm1036, 1, 0
        %v1069 = vsel %vm1037, 1, 0
        %v1070 = vcvt.s32.f32 %v1038
        %v1071 = vcvt.s32.f32 %v1039
        %v1072 = vcvt.s32.f32 %v1040
        %v1073 = vcvt.s32.f32 %v1041
        %v1074 = vcvt.s32.f32 %v1042
        %v1075 = vcvt.s32.f32 %v1043
        %v1076 = vcvt.s32.f32 %v1044
        %v1077 = vcvt.s32.f32 %v1045
        %v1078 = vcvt.s32.f32 %v1046
        %v1079 = vcvt.s32.f32 %v1047
        %v1080 = vcvt.s32.f32 %v1048
        %v1081 = vcvt.s32.f32 %v1049
        %v1082 = vcvt.s32.f32 %v1050
        %v1083 = vcvt.s32.f32 %v1051
        %v1084 = vcvt.s32.f32 %v1052
        %v1085 = vcvt.s32.f32 %v1053
        %v1086 = vcvt.s32.f32 %v1054
        %v1087 = vcvt.s32.f32 %v1055
        %v1088 = vcvt.s32.f32 %v1056
        %v1089 = vcvt.s32.f32 %v1057
        %v1090 = vcvt.s32.f32 %v1058
        %v1091 = vcvt.s32.f32 %v1059
        %v1092 = vcvt.s32.f32 %v1060
        %v1093 = vcvt.s32.f32 %v1061
        %v1094 = vcvt.s32.f32 %v1062
        %v1095 = vcvt.s32.f32 %v1063
        %v1096 = vcvt.s32.f32 %v1064
        %v1097 = vcvt.s32.f32 %v1065
        %v1098 = vcvt.s32.f32 %v1066
        %v1099 = vcvt.s32.f32 %v1067
        %v1100 = vcvt.s32.f32 %v1068
        %v1101 = vcvt.s32.f32 %v1069
        %v1102 = vld [vmem:[%s4] sm:$0xff]
        %v1103 = vld [vmem:[%s4 + $0x8] sm:$0xff]
        %v1104 = vld [vmem:[%s4 + $0x10] sm:$0xff]
        %v1105 = vld [vmem:[%s4 + $0x18] sm:$0xff]
        %v1106 = vld [vmem:[%s4 + $0x20] sm:$0xff]
        %v1107 = vld [vmem:[%s4 + $0x28] sm:$0xff]
        %v1108 = vld [vmem:[%s4 + $0x30] sm:$0xff]
        %v1109 = vld [vmem:[%s4 + $0x38] sm:$0xff]
        %v1110 = vld [vmem:[%s4 + $0x40] sm:$0xff]
        %v1111 = vld [vmem:[%s4 + $0x48] sm:$0xff]
        %v1112 = vld [vmem:[%s4 + $0x50] sm:$0xff]
        %v1113 = vld [vmem:[%s4 + $0x58] sm:$0xff]
        %v1114 = vld [vmem:[%s4 + $0x60] sm:$0xff]
        %v1115 = vld [vmem:[%s4 + $0x68] sm:$0xff]
        %v1116 = vld [vmem:[%s4 + $0x70] sm:$0xff]
        %v1117 = vld [vmem:[%s4 + $0x78] sm:$0xff]
        %1118 = vmatprep.subr.mxu0 0.0
        %1119 = vmatpush1.msra.mxu0 %v1102
        %1120 = vmatprep.subr.mxu0 0.0
        %1121 = vmatpush1.msra.mxu0 %v1103
        %1122 = vmatprep.subr.mxu0 0.0
        %1123 = vmatpush1.msra.mxu0 %v1104
        %1124 = vmatprep.subr.mxu0 0.0
        %1125 = vmatpush1.msra.mxu0 %v1105
        %1126 = vmatprep.subr.mxu0 0.0
        %1127 = vmatpush1.msra.mxu0 %v1106
        %1128 = vmatprep.subr.mxu0 0.0
        %1129 = vmatpush1.msra.mxu0 %v1107
        %1130 = vmatprep.subr.mxu0 0.0
        %1131 = vmatpush1.msra.mxu0 %v1108
        %1132 = vmatprep.subr.mxu0 0.0
        %1133 = vmatpush1.msra.mxu0 %v1109
        %1134 = vmatprep.subr.mxu0 0.0
        %1135 = vmatpush1.msra.mxu0 %v1110
        %1136 = vmatprep.subr.mxu0 0.0
        %1137 = vmatpush1.msra.mxu0 %v1111
        %1138 = vmatprep.subr.mxu0 0.0
        %1139 = vmatpush1.msra.mxu0 %v1112
        %1140 = vmatprep.subr.mxu0 0.0
        %1141 = vmatpush1.msra.mxu0 %v1113
        %1142 = vmatprep.subr.mxu0 0.0
        %1143 = vmatpush1.msra.mxu0 %v1114
        %1144 = vmatprep.subr.mxu0 0.0
        %1145 = vmatpush1.msra.mxu0 %v1115
        %1146 = vmatprep.subr.mxu0 0.0
        %1147 = vmatpush1.msra.mxu0 %v1116
        %1148 = vmatprep.subr.mxu0 0.0
        %1149 = vmatpush1.msra.mxu0 %v1117
        %1150 = vmatprep.subr.mxu0 0.0
        %1151 = vmatpush1.msra.mxu0 0.0
        %1152 = vmatprep.subr.mxu0 0.0
        %1153 = vmatpush1.msra.mxu0 0.0
        %1154 = vmatprep.subr.mxu0 0.0
        %1155 = vmatpush1.msra.mxu0 0.0
        %1156 = vmatprep.subr.mxu0 0.0
        %1157 = vmatpush1.msra.mxu0 0.0
        %1158 = vmatprep.subr.mxu0 0.0
        %1159 = vmatpush1.msra.mxu0 0.0
        %1160 = vmatprep.subr.mxu0 0.0
        %1161 = vmatpush1.msra.mxu0 0.0
        %1162 = vmatprep.subr.mxu0 0.0
        %1163 = vmatpush1.msra.mxu0 0.0
        %1164 = vmatprep.subr.mxu0 0.0
        %1165 = vmatpush1.msra.mxu0 0.0
        %1166 = vmatprep.subr.mxu0 0.0
        %1167 = vmatpush1.msra.mxu0 0.0
        %1168 = vmatprep.subr.mxu0 0.0
        %1169 = vmatpush1.msra.mxu0 0.0
        %1170 = vmatprep.subr.mxu0 0.0
        %1171 = vmatpush1.msra.mxu0 0.0
        %1172 = vmatprep.subr.mxu0 0.0
        %1173 = vmatpush1.msra.mxu0 0.0
        %1174 = vmatprep.subr.mxu0 0.0
        %1175 = vmatpush1.msra.mxu0 0.0
        %1176 = vmatprep.subr.mxu0 0.0
        %1177 = vmatpush1.msra.mxu0 0.0
        %1178 = vmatprep.subr.mxu0 0.0
        %1179 = vmatpush1.msra.mxu0 0.0
        %1180 = vmatprep.subr.mxu0 0.0
        %1181 = vmatpush1.msra.mxu0 0.0
        %1182 = vmatprep.mubr.f32.mxu0 0.0
        %1183 = vmatmul.mubr.f32.gmra.mrb[0].mxu0 %v846
        %v1184 = vpop.f32.mrb[0].mxu0
        %v1185 = vadd.f32 0.0, %v1184
        %v1186 = vpop.f32.mrb[0].mxu0
        %1187 = vmatprep.mubr.f32.mxu0 0.0
        %1188 = vmatmul.mubr.f32.gmra.mrb[0].mxu0 %v847
        %v1189 = vpop.f32.mrb[0].mxu0
        %v1190 = vadd.f32 0.0, %v1189
        %v1191 = vpop.f32.mrb[0].mxu0
        %1192 = vmatprep.mubr.f32.mxu0 0.0
        %1193 = vmatmul.mubr.f32.gmra.mrb[0].mxu0 %v848
        %v1194 = vpop.f32.mrb[0].mxu0
        %v1195 = vadd.f32 0.0, %v1194
        %v1196 = vpop.f32.mrb[0].mxu0
        %1197 = vmatprep.mubr.f32.mxu0 0.0
        %1198 = vmatmul.mubr.f32.gmra.mrb[0].mxu0 %v849
        %v1199 = vpop.f32.mrb[0].mxu0
        %v1200 = vadd.f32 0.0, %v1199
        %v1201 = vpop.f32.mrb[0].mxu0
        %1202 = vmatprep.mubr.f32.mxu0 0.0
        %1203 = vmatmul.mubr.f32.gmra.mrb[0].mxu0 %v850
        %v1204 = vpop.f32.mrb[0].mxu0
        %v1205 = vadd.f32 0.0, %v1204
        %v1206 = vpop.f32.mrb[0].mxu0
        %1207 = vmatprep.mubr.f32.mxu0 0.0
        %1208 = vmatmul.mubr.f32.gmra.mrb[0].mxu0 %v851
        %v1209 = vpop.f32.mrb[0].mxu0
        %v1210 = vadd.f32 0.0, %v1209
        %v1211 = vpop.f32.mrb[0].mxu0
        %1212 = vmatprep.mubr.f32.mxu0 0.0
        %1213 = vmatmul.mubr.f32.gmra.mrb[0].mxu0 %v852
        %v1214 = vpop.f32.mrb[0].mxu0
        %v1215 = vadd.f32 0.0, %v1214
        %v1216 = vpop.f32.mrb[0].mxu0
        %1217 = vmatprep.mubr.f32.mxu0 0.0
        %1218 = vmatmul.mubr.f32.gmra.mrb[0].mxu0 %v853
        %v1219 = vpop.f32.mrb[0].mxu0
        %v1220 = vadd.f32 0.0, %v1219
        %v1221 = vpop.f32.mrb[0].mxu0
        %1222 = vmatprep.mubr.f32.mxu0 0.0
        %1223 = vmatmul.mubr.f32.gmra.mrb[0].mxu0 %v854
        %v1224 = vpop.f32.mrb[0].mxu0
        %v1225 = vadd.f32 0.0, %v1224
        %v1226 = vpop.f32.mrb[0].mxu0
        %1227 = vmatprep.mubr.f32.mxu0 0.0
        %1228 = vmatmul.mubr.f32.gmra.mrb[0].mxu0 %v855
        %v1229 = vpop.f32.mrb[0].mxu0
        %v1230 = vadd.f32 0.0, %v1229
        %v1231 = vpop.f32.mrb[0].mxu0
        %1232 = vmatprep.mubr.f32.mxu0 0.0
        %1233 = vmatmul.mubr.f32.gmra.mrb[0].mxu0 %v856
        %v1234 = vpop.f32.mrb[0].mxu0
        %v1235 = vadd.f32 0.0, %v1234
        %v1236 = vpop.f32.mrb[0].mxu0
        %1237 = vmatprep.mubr.f32.mxu0 0.0
        %1238 = vmatmul.mubr.f32.gmra.mrb[0].mxu0 %v857
        %v1239 = vpop.f32.mrb[0].mxu0
        %v1240 = vadd.f32 0.0, %v1239
        %v1241 = vpop.f32.mrb[0].mxu0
        %1242 = vmatprep.mubr.f32.mxu0 0.0
        %1243 = vmatmul.mubr.f32.gmra.mrb[0].mxu0 %v858
        %v1244 = vpop.f32.mrb[0].mxu0
        %v1245 = vadd.f32 0.0, %v1244
        %v1246 = vpop.f32.mrb[0].mxu0
        %1247 = vmatprep.mubr.f32.mxu0 0.0
        %1248 = vmatmul.mubr.f32.gmra.mrb[0].mxu0 %v859
        %v1249 = vpop.f32.mrb[0].mxu0
        %v1250 = vadd.f32 0.0, %v1249
        %v1251 = vpop.f32.mrb[0].mxu0
        %1252 = vmatprep.mubr.f32.mxu0 0.0
        %1253 = vmatmul.mubr.f32.gmra.mrb[0].mxu0 %v860
        %v1254 = vpop.f32.mrb[0].mxu0
        %v1255 = vadd.f32 0.0, %v1254
        %v1256 = vpop.f32.mrb[0].mxu0
        %1257 = vmatprep.mubr.f32.mxu0 0.0
        %1258 = vmatmul.mubr.f32.gmra.mrb[0].mxu0 %v861
        %v1259 = vpop.f32.mrb[0].mxu0
        %v1260 = vadd.f32 0.0, %v1259
        %v1261 = vpop.f32.mrb[0].mxu0
        %1262 = vmatprep.mubr.f32.mxu0 0.0
        %1263 = vmatmul.mubr.f32.gmra.mrb[0].mxu0 %v862
        %v1264 = vpop.f32.mrb[0].mxu0
        %v1265 = vadd.f32 0.0, %v1264
        %v1266 = vpop.f32.mrb[0].mxu0
        %1267 = vmatprep.mubr.f32.mxu0 0.0
        %1268 = vmatmul.mubr.f32.gmra.mrb[0].mxu0 %v863
        %v1269 = vpop.f32.mrb[0].mxu0
        %v1270 = vadd.f32 0.0, %v1269
        %v1271 = vpop.f32.mrb[0].mxu0
        %1272 = vmatprep.mubr.f32.mxu0 0.0
        %1273 = vmatmul.mubr.f32.gmra.mrb[0].mxu0 %v864
        %v1274 = vpop.f32.mrb[0].mxu0
        %v1275 = vadd.f32 0.0, %v1274
        %v1276 = vpop.f32.mrb[0].mxu0
        %1277 = vmatprep.mubr.f32.mxu0 0.0
        %1278 = vmatmul.mubr.f32.gmra.mrb[0].mxu0 %v865
        %v1279 = vpop.f32.mrb[0].mxu0
        %v1280 = vadd.f32 0.0, %v1279
        %v1281 = vpop.f32.mrb[0].mxu0
        %1282 = vmatprep.mubr.f32.mxu0 0.0
        %1283 = vmatmul.mubr.f32.gmra.mrb[0].mxu0 %v866
        %v1284 = vpop.f32.mrb[0].mxu0
        %v1285 = vadd.f32 0.0, %v1284
        %v1286 = vpop.f32.mrb[0].mxu0
        %1287 = vmatprep.mubr.f32.mxu0 0.0
        %1288 = vmatmul.mubr.f32.gmra.mrb[0].mxu0 %v867
        %v1289 = vpop.f32.mrb[0].mxu0
        %v1290 = vadd.f32 0.0, %v1289
        %v1291 = vpop.f32.mrb[0].mxu0
        %1292 = vmatprep.mubr.f32.mxu0 0.0
        %1293 = vmatmul.mubr.f32.gmra.mrb[0].mxu0 %v868
        %v1294 = vpop.f32.mrb[0].mxu0
        %v1295 = vadd.f32 0.0, %v1294
        %v1296 = vpop.f32.mrb[0].mxu0
        %1297 = vmatprep.mubr.f32.mxu0 0.0
        %1298 = vmatmul.mubr.f32.gmra.mrb[0].mxu0 %v869
        %v1299 = vpop.f32.mrb[0].mxu0
        %v1300 = vadd.f32 0.0, %v1299
        %v1301 = vpop.f32.mrb[0].mxu0
        %1302 = vmatprep.mubr.f32.mxu0 0.0
        %1303 = vmatmul.mubr.f32.gmra.mrb[0].mxu0 %v870
        %v1304 = vpop.f32.mrb[0].mxu0
        %v1305 = vadd.f32 0.0, %v1304
        %v1306 = vpop.f32.mrb[0].mxu0
        %1307 = vmatprep.mubr.f32.mxu0 0.0
        %1308 = vmatmul.mubr.f32.gmra.mrb[0].mxu0 %v871
        %v1309 = vpop.f32.mrb[0].mxu0
        %v1310 = vadd.f32 0.0, %v1309
        %v1311 = vpop.f32.mrb[0].mxu0
        %1312 = vmatprep.mubr.f32.mxu0 0.0
        %1313 = vmatmul.mubr.f32.gmra.mrb[0].mxu0 %v872
        %v1314 = vpop.f32.mrb[0].mxu0
        %v1315 = vadd.f32 0.0, %v1314
        %v1316 = vpop.f32.mrb[0].mxu0
        %1317 = vmatprep.mubr.f32.mxu0 0.0
        %1318 = vmatmul.mubr.f32.gmra.mrb[0].mxu0 %v873
        %v1319 = vpop.f32.mrb[0].mxu0
        %v1320 = vadd.f32 0.0, %v1319
        %v1321 = vpop.f32.mrb[0].mxu0
        %1322 = vmatprep.mubr.f32.mxu0 0.0
        %1323 = vmatmul.mubr.f32.gmra.mrb[0].mxu0 %v874
        %v1324 = vpop.f32.mrb[0].mxu0
        %v1325 = vadd.f32 0.0, %v1324
        %v1326 = vpop.f32.mrb[0].mxu0
        %1327 = vmatprep.mubr.f32.mxu0 0.0
        %1328 = vmatmul.mubr.f32.gmra.mrb[0].mxu0 %v875
        %v1329 = vpop.f32.mrb[0].mxu0
        %v1330 = vadd.f32 0.0, %v1329
        %v1331 = vpop.f32.mrb[0].mxu0
        %1332 = vmatprep.mubr.f32.mxu0 0.0
        %1333 = vmatmul.mubr.f32.gmra.mrb[0].mxu0 %v876
        %v1334 = vpop.f32.mrb[0].mxu0
        %v1335 = vadd.f32 0.0, %v1334
        %v1336 = vpop.f32.mrb[0].mxu0
        %1337 = vmatprep.mubr.f32.mxu0 0.0
        %1338 = vmatmul.mubr.f32.gmra.mrb[0].mxu0 %v877
        %v1339 = vpop.f32.mrb[0].mxu0
        %v1340 = vadd.f32 0.0, %v1339
        %v1341 = vpop.f32.mrb[0].mxu0
        %1342 = vdwg.mxu0
        %1343 = vmatprep.subr.mxu0 0.0
        %1344 = vmatpush1.msra.mxu0 %v1102
        %1345 = vmatprep.subr.mxu0 0.0
        %1346 = vmatpush1.msra.mxu0 %v1103
        %1347 = vmatprep.subr.mxu0 0.0
        %1348 = vmatpush1.msra.mxu0 %v1104
        %1349 = vmatprep.subr.mxu0 0.0
        %1350 = vmatpush1.msra.mxu0 %v1105
        %1351 = vmatprep.subr.mxu0 0.0
        %1352 = vmatpush1.msra.mxu0 %v1106
        %1353 = vmatprep.subr.mxu0 0.0
        %1354 = vmatpush1.msra.mxu0 %v1107
        %1355 = vmatprep.subr.mxu0 0.0
        %1356 = vmatpush1.msra.mxu0 %v1108
        %1357 = vmatprep.subr.mxu0 0.0
        %1358 = vmatpush1.msra.mxu0 %v1109
        %1359 = vmatprep.subr.mxu0 0.0
        %1360 = vmatpush1.msra.mxu0 %v1110
        %1361 = vmatprep.subr.mxu0 0.0
        %1362 = vmatpush1.msra.mxu0 %v1111
        %1363 = vmatprep.subr.mxu0 0.0
        %1364 = vmatpush1.msra.mxu0 %v1112
        %1365 = vmatprep.subr.mxu0 0.0
        %1366 = vmatpush1.msra.mxu0 %v1113
        %1367 = vmatprep.subr.mxu0 0.0
        %1368 = vmatpush1.msra.mxu0 %v1114
        %1369 = vmatprep.subr.mxu0 0.0
        %1370 = vmatpush1.msra.mxu0 %v1115
        %1371 = vmatprep.subr.mxu0 0.0
        %1372 = vmatpush1.msra.mxu0 %v1116
        %1373 = vmatprep.subr.mxu0 0.0
        %1374 = vmatpush1.msra.mxu0 %v1117
        %1375 = vmatprep.subr.mxu0 0.0
        %1376 = vmatpush1.msra.mxu0 0.0
        %1377 = vmatprep.subr.mxu0 0.0
        %1378 = vmatpush1.msra.mxu0 0.0
        %1379 = vmatprep.subr.mxu0 0.0
        %1380 = vmatpush1.msra.mxu0 0.0
        %1381 = vmatprep.subr.mxu0 0.0
        %1382 = vmatpush1.msra.mxu0 0.0
        %1383 = vmatprep.subr.mxu0 0.0
        %1384 = vmatpush1.msra.mxu0 0.0
        %1385 = vmatprep.subr.mxu0 0.0
        %1386 = vmatpush1.msra.mxu0 0.0
        %1387 = vmatprep.subr.mxu0 0.0
        %1388 = vmatpush1.msra.mxu0 0.0
        %1389 = vmatprep.subr.mxu0 0.0
        %1390 = vmatpush1.msra.mxu0 0.0
        %1391 = vmatprep.subr.mxu0 0.0
        %1392 = vmatpush1.msra.mxu0 0.0
        %1393 = vmatprep.subr.mxu0 0.0
        %1394 = vmatpush1.msra.mxu0 0.0
        %1395 = vmatprep.subr.mxu0 0.0
        %1396 = vmatpush1.msra.mxu0 0.0
        %1397 = vmatprep.subr.mxu0 0.0
        %1398 = vmatpush1.msra.mxu0 0.0
        %1399 = vmatprep.subr.mxu0 0.0
        %1400 = vmatpush1.msra.mxu0 0.0
        %1401 = vmatprep.subr.mxu0 0.0
        %1402 = vmatpush1.msra.mxu0 0.0
        %1403 = vmatprep.subr.mxu0 0.0
        %1404 = vmatpush1.msra.mxu0 0.0
        %1405 = vmatprep.subr.mxu0 0.0
        %1406 = vmatpush1.msra.mxu0 0.0
        %1407 = vmatprep.mubr.f32.mxu0 0.0
        %1408 = vmatmul.mubr.f32.gmra.mrb[0].mxu0 %v1070
        %v1409 = vpop.f32.mrb[0].mxu0
        %v1410 = vadd.f32 0.0, %v1409
        %v1411 = vpop.f32.mrb[0].mxu0
        %1412 = vmatprep.mubr.f32.mxu0 0.0
        %1413 = vmatmul.mubr.f32.gmra.mrb[0].mxu0 %v1071
        %v1414 = vpop.f32.mrb[0].mxu0
        %v1415 = vadd.f32 0.0, %v1414
        %v1416 = vpop.f32.mrb[0].mxu0
        %1417 = vmatprep.mubr.f32.mxu0 0.0
        %1418 = vmatmul.mubr.f32.gmra.mrb[0].mxu0 %v1072
        %v1419 = vpop.f32.mrb[0].mxu0
        %v1420 = vadd.f32 0.0, %v1419
        %v1421 = vpop.f32.mrb[0].mxu0
        %1422 = vmatprep.mubr.f32.mxu0 0.0
        %1423 = vmatmul.mubr.f32.gmra.mrb[0].mxu0 %v1073
        %v1424 = vpop.f32.mrb[0].mxu0
        %v1425 = vadd.f32 0.0, %v1424
        %v1426 = vpop.f32.mrb[0].mxu0
        %1427 = vmatprep.mubr.f32.mxu0 0.0
        %1428 = vmatmul.mubr.f32.gmra.mrb[0].mxu0 %v1074
        %v1429 = vpop.f32.mrb[0].mxu0
        %v1430 = vadd.f32 0.0, %v1429
        %v1431 = vpop.f32.mrb[0].mxu0
        %1432 = vmatprep.mubr.f32.mxu0 0.0
        %1433 = vmatmul.mubr.f32.gmra.mrb[0].mxu0 %v1075
        %v1434 = vpop.f32.mrb[0].mxu0
        %v1435 = vadd.f32 0.0, %v1434
        %v1436 = vpop.f32.mrb[0].mxu0
        %1437 = vmatprep.mubr.f32.mxu0 0.0
        %1438 = vmatmul.mubr.f32.gmra.mrb[0].mxu0 %v1076
        %v1439 = vpop.f32.mrb[0].mxu0
        %v1440 = vadd.f32 0.0, %v1439
        %v1441 = vpop.f32.mrb[0].mxu0
        %1442 = vmatprep.mubr.f32.mxu0 0.0
        %1443 = vmatmul.mubr.f32.gmra.mrb[0].mxu0 %v1077
        %v1444 = vpop.f32.mrb[0].mxu0
        %v1445 = vadd.f32 0.0, %v1444
        %v1446 = vpop.f32.mrb[0].mxu0
        %1447 = vmatprep.mubr.f32.mxu0 0.0
        %1448 = vmatmul.mubr.f32.gmra.mrb[0].mxu0 %v1078
        %v1449 = vpop.f32.mrb[0].mxu0
        %v1450 = vadd.f32 0.0, %v1449
        %v1451 = vpop.f32.mrb[0].mxu0
        %1452 = vmatprep.mubr.f32.mxu0 0.0
        %1453 = vmatmul.mubr.f32.gmra.mrb[0].mxu0 %v1079
        %v1454 = vpop.f32.mrb[0].mxu0
        %v1455 = vadd.f32 0.0, %v1454
        %v1456 = vpop.f32.mrb[0].mxu0
        %1457 = vmatprep.mubr.f32.mxu0 0.0
        %1458 = vmatmul.mubr.f32.gmra.mrb[0].mxu0 %v1080
        %v1459 = vpop.f32.mrb[0].mxu0
        %v1460 = vadd.f32 0.0, %v1459
        %v1461 = vpop.f32.mrb[0].mxu0
        %1462 = vmatprep.mubr.f32.mxu0 0.0
        %1463 = vmatmul.mubr.f32.gmra.mrb[0].mxu0 %v1081
        %v1464 = vpop.f32.mrb[0].mxu0
        %v1465 = vadd.f32 0.0, %v1464
        %v1466 = vpop.f32.mrb[0].mxu0
        %1467 = vmatprep.mubr.f32.mxu0 0.0
        %1468 = vmatmul.mubr.f32.gmra.mrb[0].mxu0 %v1082
        %v1469 = vpop.f32.mrb[0].mxu0
        %v1470 = vadd.f32 0.0, %v1469
        %v1471 = vpop.f32.mrb[0].mxu0
        %1472 = vmatprep.mubr.f32.mxu0 0.0
        %1473 = vmatmul.mubr.f32.gmra.mrb[0].mxu0 %v1083
        %v1474 = vpop.f32.mrb[0].mxu0
        %v1475 = vadd.f32 0.0, %v1474
        %v1476 = vpop.f32.mrb[0].mxu0
        %1477 = vmatprep.mubr.f32.mxu0 0.0
        %1478 = vmatmul.mubr.f32.gmra.mrb[0].mxu0 %v1084
        %v1479 = vpop.f32.mrb[0].mxu0
        %v1480 = vadd.f32 0.0, %v1479
        %v1481 = vpop.f32.mrb[0].mxu0
        %1482 = vmatprep.mubr.f32.mxu0 0.0
        %1483 = vmatmul.mubr.f32.gmra.mrb[0].mxu0 %v1085
        %v1484 = vpop.f32.mrb[0].mxu0
        %v1485 = vadd.f32 0.0, %v1484
        %v1486 = vpop.f32.mrb[0].mxu0
        %1487 = vmatprep.mubr.f32.mxu0 0.0
        %1488 = vmatmul.mubr.f32.gmra.mrb[0].mxu0 %v1086
        %v1489 = vpop.f32.mrb[0].mxu0
        %v1490 = vadd.f32 0.0, %v1489
        %v1491 = vpop.f32.mrb[0].mxu0
        %1492 = vmatprep.mubr.f32.mxu0 0.0
        %1493 = vmatmul.mubr.f32.gmra.mrb[0].mxu0 %v1087
        %v1494 = vpop.f32.mrb[0].mxu0
        %v1495 = vadd.f32 0.0, %v1494
        %v1496 = vpop.f32.mrb[0].mxu0
        %1497 = vmatprep.mubr.f32.mxu0 0.0
        %1498 = vmatmul.mubr.f32.gmra.mrb[0].mxu0 %v1088
        %v1499 = vpop.f32.mrb[0].mxu0
        %v1500 = vadd.f32 0.0, %v1499
        %v1501 = vpop.f32.mrb[0].mxu0
        %1502 = vmatprep.mubr.f32.mxu0 0.0
        %1503 = vmatmul.mubr.f32.gmra.mrb[0].mxu0 %v1089
        %v1504 = vpop.f32.mrb[0].mxu0
        %v1505 = vadd.f32 0.0, %v1504
        %v1506 = vpop.f32.mrb[0].mxu0
        %1507 = vmatprep.mubr.f32.mxu0 0.0
        %1508 = vmatmul.mubr.f32.gmra.mrb[0].mxu0 %v1090
        %v1509 = vpop.f32.mrb[0].mxu0
        %v1510 = vadd.f32 0.0, %v1509
        %v1511 = vpop.f32.mrb[0].mxu0
        %1512 = vmatprep.mubr.f32.mxu0 0.0
        %1513 = vmatmul.mubr.f32.gmra.mrb[0].mxu0 %v1091
        %v1514 = vpop.f32.mrb[0].mxu0
        %v1515 = vadd.f32 0.0, %v1514
        %v1516 = vpop.f32.mrb[0].mxu0
        %1517 = vmatprep.mubr.f32.mxu0 0.0
        %1518 = vmatmul.mubr.f32.gmra.mrb[0].mxu0 %v1092
        %v1519 = vpop.f32.mrb[0].mxu0
        %v1520 = vadd.f32 0.0, %v1519
        %v1521 = vpop.f32.mrb[0].mxu0
        %1522 = vmatprep.mubr.f32.mxu0 0.0
        %1523 = vmatmul.mubr.f32.gmra.mrb[0].mxu0 %v1093
        %v1524 = vpop.f32.mrb[0].mxu0
        %v1525 = vadd.f32 0.0, %v1524
        %v1526 = vpop.f32.mrb[0].mxu0
        %1527 = vmatprep.mubr.f32.mxu0 0.0
        %1528 = vmatmul.mubr.f32.gmra.mrb[0].mxu0 %v1094
        %v1529 = vpop.f32.mrb[0].mxu0
        %v1530 = vadd.f32 0.0, %v1529
        %v1531 = vpop.f32.mrb[0].mxu0
        %1532 = vmatprep.mubr.f32.mxu0 0.0
        %1533 = vmatmul.mubr.f32.gmra.mrb[0].mxu0 %v1095
        %v1534 = vpop.f32.mrb[0].mxu0
        %v1535 = vadd.f32 0.0, %v1534
        %v1536 = vpop.f32.mrb[0].mxu0
        %1537 = vmatprep.mubr.f32.mxu0 0.0
        %1538 = vmatmul.mubr.f32.gmra.mrb[0].mxu0 %v1096
        %v1539 = vpop.f32.mrb[0].mxu0
        %v1540 = vadd.f32 0.0, %v1539
        %v1541 = vpop.f32.mrb[0].mxu0
        %1542 = vmatprep.mubr.f32.mxu0 0.0
        %1543 = vmatmul.mubr.f32.gmra.mrb[0].mxu0 %v1097
        %v1544 = vpop.f32.mrb[0].mxu0
        %v1545 = vadd.f32 0.0, %v1544
        %v1546 = vpop.f32.mrb[0].mxu0
        %1547 = vmatprep.mubr.f32.mxu0 0.0
        %1548 = vmatmul.mubr.f32.gmra.mrb[0].mxu0 %v1098
        %v1549 = vpop.f32.mrb[0].mxu0
        %v1550 = vadd.f32 0.0, %v1549
        %v1551 = vpop.f32.mrb[0].mxu0
        %1552 = vmatprep.mubr.f32.mxu0 0.0
        %1553 = vmatmul.mubr.f32.gmra.mrb[0].mxu0 %v1099
        %v1554 = vpop.f32.mrb[0].mxu0
        %v1555 = vadd.f32 0.0, %v1554
        %v1556 = vpop.f32.mrb[0].mxu0
        %1557 = vmatprep.mubr.f32.mxu0 0.0
        %1558 = vmatmul.mubr.f32.gmra.mrb[0].mxu0 %v1100
        %v1559 = vpop.f32.mrb[0].mxu0
        %v1560 = vadd.f32 0.0, %v1559
        %v1561 = vpop.f32.mrb[0].mxu0
        %1562 = vmatprep.mubr.f32.mxu0 0.0
        %1563 = vmatmul.mubr.f32.gmra.mrb[0].mxu0 %v1101
        %v1564 = vpop.f32.mrb[0].mxu0
        %v1565 = vadd.f32 0.0, %v1564
        %v1566 = vpop.f32.mrb[0].mxu0
        %1567 = vdwg.mxu0
        %v1568 = vld [vmem:[%s5] sm:$0xff]
        %v1569 = vld [vmem:[%s5 + $0x8] sm:$0xff]
        %v1570 = vld [vmem:[%s5 + $0x10] sm:$0xff]
        %v1571 = vld [vmem:[%s5 + $0x18] sm:$0xff]
        %v1572 = vld [vmem:[%s5 + $0x20] sm:$0xff]
        %v1573 = vld [vmem:[%s5 + $0x28] sm:$0xff]
        %v1574 = vld [vmem:[%s5 + $0x30] sm:$0xff]
        %v1575 = vld [vmem:[%s5 + $0x38] sm:$0xff]
        %v1576 = vld [vmem:[%s5 + $0x40] sm:$0xff]
        %v1577 = vld [vmem:[%s5 + $0x48] sm:$0xff]
        %v1578 = vld [vmem:[%s5 + $0x50] sm:$0xff]
        %v1579 = vld [vmem:[%s5 + $0x58] sm:$0xff]
        %v1580 = vld [vmem:[%s5 + $0x60] sm:$0xff]
        %v1581 = vld [vmem:[%s5 + $0x68] sm:$0xff]
        %v1582 = vld [vmem:[%s5 + $0x70] sm:$0xff]
        %v1583 = vld [vmem:[%s5 + $0x78] sm:$0xff]
        %v1584 = vld [vmem:[%s6] sm:$0xff]
        %v1585 = vld [vmem:[%s6 + $0x8] sm:$0xff]
        %v1586 = vld [vmem:[%s6 + $0x10] sm:$0xff]
        %v1587 = vld [vmem:[%s6 + $0x18] sm:$0xff]
        %v1588 = vld [vmem:[%s6 + $0x20] sm:$0xff]
        %v1589 = vld [vmem:[%s6 + $0x28] sm:$0xff]
        %v1590 = vld [vmem:[%s6 + $0x30] sm:$0xff]
        %v1591 = vld [vmem:[%s6 + $0x38] sm:$0xff]
        %v1592 = vld [vmem:[%s6 + $0x40] sm:$0xff]
        %v1593 = vld [vmem:[%s6 + $0x48] sm:$0xff]
        %v1594 = vld [vmem:[%s6 + $0x50] sm:$0xff]
        %v1595 = vld [vmem:[%s6 + $0x58] sm:$0xff]
        %v1596 = vld [vmem:[%s6 + $0x60] sm:$0xff]
        %v1597 = vld [vmem:[%s6 + $0x68] sm:$0xff]
        %v1598 = vld [vmem:[%s6 + $0x70] sm:$0xff]
        %v1599 = vld [vmem:[%s6 + $0x78] sm:$0xff]
        %1600 = vmatprep.subr.mxu0 0.0
        %1601 = vmatpush1.msra.mxu0 %v1584
        %1602 = vmatprep.subr.mxu0 0.0
        %1603 = vmatpush1.msra.mxu0 %v1585
        %1604 = vmatprep.subr.mxu0 0.0
        %1605 = vmatpush1.msra.mxu0 %v1586
        %1606 = vmatprep.subr.mxu0 0.0
        %1607 = vmatpush1.msra.mxu0 %v1587
        %1608 = vmatprep.subr.mxu0 0.0
        %1609 = vmatpush1.msra.mxu0 %v1588
        %1610 = vmatprep.subr.mxu0 0.0
        %1611 = vmatpush1.msra.mxu0 %v1589
        %1612 = vmatprep.subr.mxu0 0.0
        %1613 = vmatpush1.msra.mxu0 %v1590
        %1614 = vmatprep.subr.mxu0 0.0
        %1615 = vmatpush1.msra.mxu0 %v1591
        %1616 = vmatprep.subr.mxu0 0.0
        %1617 = vmatpush1.msra.mxu0 %v1592
        %1618 = vmatprep.subr.mxu0 0.0
        %1619 = vmatpush1.msra.mxu0 %v1593
        %1620 = vmatprep.subr.mxu0 0.0
        %1621 = vmatpush1.msra.mxu0 %v1594
        %1622 = vmatprep.subr.mxu0 0.0
        %1623 = vmatpush1.msra.mxu0 %v1595
        %1624 = vmatprep.subr.mxu0 0.0
        %1625 = vmatpush1.msra.mxu0 %v1596
        %1626 = vmatprep.subr.mxu0 0.0
        %1627 = vmatpush1.msra.mxu0 %v1597
        %1628 = vmatprep.subr.mxu0 0.0
        %1629 = vmatpush1.msra.mxu0 %v1598
        %1630 = vmatprep.subr.mxu0 0.0
        %1631 = vmatpush1.msra.mxu0 %v1599
        %1632 = vmatprep.subr.mxu0 0.0
        %1633 = vmatpush1.msra.mxu0 0.0
        %1634 = vmatprep.subr.mxu0 0.0
        %1635 = vmatpush1.msra.mxu0 0.0
        %1636 = vmatprep.subr.mxu0 0.0
        %1637 = vmatpush1.msra.mxu0 0.0
        %1638 = vmatprep.subr.mxu0 0.0
        %1639 = vmatpush1.msra.mxu0 0.0
        %1640 = vmatprep.subr.mxu0 0.0
        %1641 = vmatpush1.msra.mxu0 0.0
        %1642 = vmatprep.subr.mxu0 0.0
        %1643 = vmatpush1.msra.mxu0 0.0
        %1644 = vmatprep.subr.mxu0 0.0
        %1645 = vmatpush1.msra.mxu0 0.0
        %1646 = vmatprep.subr.mxu0 0.0
        %1647 = vmatpush1.msra.mxu0 0.0
        %1648 = vmatprep.subr.mxu0 0.0
        %1649 = vmatpush1.msra.mxu0 0.0
        %1650 = vmatprep.subr.mxu0 0.0
        %1651 = vmatpush1.msra.mxu0 0.0
        %1652 = vmatprep.subr.mxu0 0.0
        %1653 = vmatpush1.msra.mxu0 0.0
        %1654 = vmatprep.subr.mxu0 0.0
        %1655 = vmatpush1.msra.mxu0 0.0
        %1656 = vmatprep.subr.mxu0 0.0
        %1657 = vmatpush1.msra.mxu0 0.0
        %1658 = vmatprep.subr.mxu0 0.0
        %1659 = vmatpush1.msra.mxu0 0.0
        %1660 = vmatprep.subr.mxu0 0.0
        %1661 = vmatpush1.msra.mxu0 0.0
        %1662 = vmatprep.subr.mxu0 0.0
        %1663 = vmatpush1.msra.mxu0 0.0
        %1664 = vmatprep.mubr.f32.mxu0 0.0
        %1665 = vmatmul.mubr.f32.gmra.mrb[0].mxu0 %v1410
        %v1666 = vpop.f32.mrb[0].mxu0
        %v1667 = vadd.f32 0.0, %v1666
        %v1668 = vpop.f32.mrb[0].mxu0
        %1669 = vmatprep.mubr.f32.mxu0 0.0
        %1670 = vmatmul.mubr.f32.gmra.mrb[0].mxu0 %v1415
        %v1671 = vpop.f32.mrb[0].mxu0
        %v1672 = vadd.f32 0.0, %v1671
        %v1673 = vpop.f32.mrb[0].mxu0
        %1674 = vmatprep.mubr.f32.mxu0 0.0
        %1675 = vmatmul.mubr.f32.gmra.mrb[0].mxu0 %v1420
        %v1676 = vpop.f32.mrb[0].mxu0
        %v1677 = vadd.f32 0.0, %v1676
        %v1678 = vpop.f32.mrb[0].mxu0
        %1679 = vmatprep.mubr.f32.mxu0 0.0
        %1680 = vmatmul.mubr.f32.gmra.mrb[0].mxu0 %v1425
        %v1681 = vpop.f32.mrb[0].mxu0
        %v1682 = vadd.f32 0.0, %v1681
        %v1683 = vpop.f32.mrb[0].mxu0
        %1684 = vmatprep.mubr.f32.mxu0 0.0
        %1685 = vmatmul.mubr.f32.gmra.mrb[0].mxu0 %v1430
        %v1686 = vpop.f32.mrb[0].mxu0
        %v1687 = vadd.f32 0.0, %v1686
        %v1688 = vpop.f32.mrb[0].mxu0
        %1689 = vmatprep.mubr.f32.mxu0 0.0
        %1690 = vmatmul.mubr.f32.gmra.mrb[0].mxu0 %v1435
        %v1691 = vpop.f32.mrb[0].mxu0
        %v1692 = vadd.f32 0.0, %v1691
        %v1693 = vpop.f32.mrb[0].mxu0
        %1694 = vmatprep.mubr.f32.mxu0 0.0
        %1695 = vmatmul.mubr.f32.gmra.mrb[0].mxu0 %v1440
        %v1696 = vpop.f32.mrb[0].mxu0
        %v1697 = vadd.f32 0.0, %v1696
        %v1698 = vpop.f32.mrb[0].mxu0
        %1699 = vmatprep.mubr.f32.mxu0 0.0
        %1700 = vmatmul.mubr.f32.gmra.mrb[0].mxu0 %v1445
        %v1701 = vpop.f32.mrb[0].mxu0
        %v1702 = vadd.f32 0.0, %v1701
        %v1703 = vpop.f32.mrb[0].mxu0
        %1704 = vmatprep.mubr.f32.mxu0 0.0
        %1705 = vmatmul.mubr.f32.gmra.mrb[0].mxu0 %v1450
        %v1706 = vpop.f32.mrb[0].mxu0
        %v1707 = vadd.f32 0.0, %v1706
        %v1708 = vpop.f32.mrb[0].mxu0
        %1709 = vmatprep.mubr.f32.mxu0 0.0
        %1710 = vmatmul.mubr.f32.gmra.mrb[0].mxu0 %v1455
        %v1711 = vpop.f32.mrb[0].mxu0
        %v1712 = vadd.f32 0.0, %v1711
        %v1713 = vpop.f32.mrb[0].mxu0
        %1714 = vmatprep.mubr.f32.mxu0 0.0
        %1715 = vmatmul.mubr.f32.gmra.mrb[0].mxu0 %v1460
        %v1716 = vpop.f32.mrb[0].mxu0
        %v1717 = vadd.f32 0.0, %v1716
        %v1718 = vpop.f32.mrb[0].mxu0
        %1719 = vmatprep.mubr.f32.mxu0 0.0
        %1720 = vmatmul.mubr.f32.gmra.mrb[0].mxu0 %v1465
        %v1721 = vpop.f32.mrb[0].mxu0
        %v1722 = vadd.f32 0.0, %v1721
        %v1723 = vpop.f32.mrb[0].mxu0
        %1724 = vmatprep.mubr.f32.mxu0 0.0
        %1725 = vmatmul.mubr.f32.gmra.mrb[0].mxu0 %v1470
        %v1726 = vpop.f32.mrb[0].mxu0
        %v1727 = vadd.f32 0.0, %v1726
        %v1728 = vpop.f32.mrb[0].mxu0
        %1729 = vmatprep.mubr.f32.mxu0 0.0
        %1730 = vmatmul.mubr.f32.gmra.mrb[0].mxu0 %v1475
        %v1731 = vpop.f32.mrb[0].mxu0
        %v1732 = vadd.f32 0.0, %v1731
        %v1733 = vpop.f32.mrb[0].mxu0
        %1734 = vmatprep.mubr.f32.mxu0 0.0
        %1735 = vmatmul.mubr.f32.gmra.mrb[0].mxu0 %v1480
        %v1736 = vpop.f32.mrb[0].mxu0
        %v1737 = vadd.f32 0.0, %v1736
        %v1738 = vpop.f32.mrb[0].mxu0
        %1739 = vmatprep.mubr.f32.mxu0 0.0
        %1740 = vmatmul.mubr.f32.gmra.mrb[0].mxu0 %v1485
        %v1741 = vpop.f32.mrb[0].mxu0
        %v1742 = vadd.f32 0.0, %v1741
        %v1743 = vpop.f32.mrb[0].mxu0
        %1744 = vmatprep.mubr.f32.mxu0 0.0
        %1745 = vmatmul.mubr.f32.gmra.mrb[0].mxu0 %v1490
        %v1746 = vpop.f32.mrb[0].mxu0
        %v1747 = vadd.f32 0.0, %v1746
        %v1748 = vpop.f32.mrb[0].mxu0
        %1749 = vmatprep.mubr.f32.mxu0 0.0
        %1750 = vmatmul.mubr.f32.gmra.mrb[0].mxu0 %v1495
        %v1751 = vpop.f32.mrb[0].mxu0
        %v1752 = vadd.f32 0.0, %v1751
        %v1753 = vpop.f32.mrb[0].mxu0
        %1754 = vmatprep.mubr.f32.mxu0 0.0
        %1755 = vmatmul.mubr.f32.gmra.mrb[0].mxu0 %v1500
        %v1756 = vpop.f32.mrb[0].mxu0
        %v1757 = vadd.f32 0.0, %v1756
        %v1758 = vpop.f32.mrb[0].mxu0
        %1759 = vmatprep.mubr.f32.mxu0 0.0
        %1760 = vmatmul.mubr.f32.gmra.mrb[0].mxu0 %v1505
        %v1761 = vpop.f32.mrb[0].mxu0
        %v1762 = vadd.f32 0.0, %v1761
        %v1763 = vpop.f32.mrb[0].mxu0
        %1764 = vmatprep.mubr.f32.mxu0 0.0
        %1765 = vmatmul.mubr.f32.gmra.mrb[0].mxu0 %v1510
        %v1766 = vpop.f32.mrb[0].mxu0
        %v1767 = vadd.f32 0.0, %v1766
        %v1768 = vpop.f32.mrb[0].mxu0
        %1769 = vmatprep.mubr.f32.mxu0 0.0
        %1770 = vmatmul.mubr.f32.gmra.mrb[0].mxu0 %v1515
        %v1771 = vpop.f32.mrb[0].mxu0
        %v1772 = vadd.f32 0.0, %v1771
        %v1773 = vpop.f32.mrb[0].mxu0
        %1774 = vmatprep.mubr.f32.mxu0 0.0
        %1775 = vmatmul.mubr.f32.gmra.mrb[0].mxu0 %v1520
        %v1776 = vpop.f32.mrb[0].mxu0
        %v1777 = vadd.f32 0.0, %v1776
        %v1778 = vpop.f32.mrb[0].mxu0
        %1779 = vmatprep.mubr.f32.mxu0 0.0
        %1780 = vmatmul.mubr.f32.gmra.mrb[0].mxu0 %v1525
        %v1781 = vpop.f32.mrb[0].mxu0
        %v1782 = vadd.f32 0.0, %v1781
        %v1783 = vpop.f32.mrb[0].mxu0
        %1784 = vmatprep.mubr.f32.mxu0 0.0
        %1785 = vmatmul.mubr.f32.gmra.mrb[0].mxu0 %v1530
        %v1786 = vpop.f32.mrb[0].mxu0
        %v1787 = vadd.f32 0.0, %v1786
        %v1788 = vpop.f32.mrb[0].mxu0
        %1789 = vmatprep.mubr.f32.mxu0 0.0
        %1790 = vmatmul.mubr.f32.gmra.mrb[0].mxu0 %v1535
        %v1791 = vpop.f32.mrb[0].mxu0
        %v1792 = vadd.f32 0.0, %v1791
        %v1793 = vpop.f32.mrb[0].mxu0
        %1794 = vmatprep.mubr.f32.mxu0 0.0
        %1795 = vmatmul.mubr.f32.gmra.mrb[0].mxu0 %v1540
        %v1796 = vpop.f32.mrb[0].mxu0
        %v1797 = vadd.f32 0.0, %v1796
        %v1798 = vpop.f32.mrb[0].mxu0
        %1799 = vmatprep.mubr.f32.mxu0 0.0
        %1800 = vmatmul.mubr.f32.gmra.mrb[0].mxu0 %v1545
        %v1801 = vpop.f32.mrb[0].mxu0
        %v1802 = vadd.f32 0.0, %v1801
        %v1803 = vpop.f32.mrb[0].mxu0
        %1804 = vmatprep.mubr.f32.mxu0 0.0
        %1805 = vmatmul.mubr.f32.gmra.mrb[0].mxu0 %v1550
        %v1806 = vpop.f32.mrb[0].mxu0
        %v1807 = vadd.f32 0.0, %v1806
        %v1808 = vpop.f32.mrb[0].mxu0
        %1809 = vmatprep.mubr.f32.mxu0 0.0
        %1810 = vmatmul.mubr.f32.gmra.mrb[0].mxu0 %v1555
        %v1811 = vpop.f32.mrb[0].mxu0
        %v1812 = vadd.f32 0.0, %v1811
        %v1813 = vpop.f32.mrb[0].mxu0
        %1814 = vmatprep.mubr.f32.mxu0 0.0
        %1815 = vmatmul.mubr.f32.gmra.mrb[0].mxu0 %v1560
        %v1816 = vpop.f32.mrb[0].mxu0
        %v1817 = vadd.f32 0.0, %v1816
        %v1818 = vpop.f32.mrb[0].mxu0
        %1819 = vmatprep.mubr.f32.mxu0 0.0
        %1820 = vmatmul.mubr.f32.gmra.mrb[0].mxu0 %v1565
        %v1821 = vpop.f32.mrb[0].mxu0
        %v1822 = vadd.f32 0.0, %v1821
        %v1823 = vpop.f32.mrb[0].mxu0
        %1824 = vdwg.mxu0
        %1825 = vmatprep.subr.mxu0 0.0
        %1826 = vmatpush1.msra.mxu0 %v1568
        %1827 = vmatprep.subr.mxu0 0.0
        %1828 = vmatpush1.msra.mxu0 %v1569
        %1829 = vmatprep.subr.mxu0 0.0
        %1830 = vmatpush1.msra.mxu0 %v1570
        %1831 = vmatprep.subr.mxu0 0.0
        %1832 = vmatpush1.msra.mxu0 %v1571
        %1833 = vmatprep.subr.mxu0 0.0
        %1834 = vmatpush1.msra.mxu0 %v1572
        %1835 = vmatprep.subr.mxu0 0.0
        %1836 = vmatpush1.msra.mxu0 %v1573
        %1837 = vmatprep.subr.mxu0 0.0
        %1838 = vmatpush1.msra.mxu0 %v1574
        %1839 = vmatprep.subr.mxu0 0.0
        %1840 = vmatpush1.msra.mxu0 %v1575
        %1841 = vmatprep.subr.mxu0 0.0
        %1842 = vmatpush1.msra.mxu0 %v1576
        %1843 = vmatprep.subr.mxu0 0.0
        %1844 = vmatpush1.msra.mxu0 %v1577
        %1845 = vmatprep.subr.mxu0 0.0
        %1846 = vmatpush1.msra.mxu0 %v1578
        %1847 = vmatprep.subr.mxu0 0.0
        %1848 = vmatpush1.msra.mxu0 %v1579
        %1849 = vmatprep.subr.mxu0 0.0
        %1850 = vmatpush1.msra.mxu0 %v1580
        %1851 = vmatprep.subr.mxu0 0.0
        %1852 = vmatpush1.msra.mxu0 %v1581
        %1853 = vmatprep.subr.mxu0 0.0
        %1854 = vmatpush1.msra.mxu0 %v1582
        %1855 = vmatprep.subr.mxu0 0.0
        %1856 = vmatpush1.msra.mxu0 %v1583
        %1857 = vmatprep.subr.mxu0 0.0
        %1858 = vmatpush1.msra.mxu0 0.0
        %1859 = vmatprep.subr.mxu0 0.0
        %1860 = vmatpush1.msra.mxu0 0.0
        %1861 = vmatprep.subr.mxu0 0.0
        %1862 = vmatpush1.msra.mxu0 0.0
        %1863 = vmatprep.subr.mxu0 0.0
        %1864 = vmatpush1.msra.mxu0 0.0
        %1865 = vmatprep.subr.mxu0 0.0
        %1866 = vmatpush1.msra.mxu0 0.0
        %1867 = vmatprep.subr.mxu0 0.0
        %1868 = vmatpush1.msra.mxu0 0.0
        %1869 = vmatprep.subr.mxu0 0.0
        %1870 = vmatpush1.msra.mxu0 0.0
        %1871 = vmatprep.subr.mxu0 0.0
        %1872 = vmatpush1.msra.mxu0 0.0
        %1873 = vmatprep.subr.mxu0 0.0
        %1874 = vmatpush1.msra.mxu0 0.0
        %1875 = vmatprep.subr.mxu0 0.0
        %1876 = vmatpush1.msra.mxu0 0.0
        %1877 = vmatprep.subr.mxu0 0.0
        %1878 = vmatpush1.msra.mxu0 0.0
        %1879 = vmatprep.subr.mxu0 0.0
        %1880 = vmatpush1.msra.mxu0 0.0
        %1881 = vmatprep.subr.mxu0 0.0
        %1882 = vmatpush1.msra.mxu0 0.0
        %1883 = vmatprep.subr.mxu0 0.0
        %1884 = vmatpush1.msra.mxu0 0.0
        %1885 = vmatprep.subr.mxu0 0.0
        %1886 = vmatpush1.msra.mxu0 0.0
        %1887 = vmatprep.subr.mxu0 0.0
        %1888 = vmatpush1.msra.mxu0 0.0
        %1889 = vmatprep.mubr.f32.mxu0 0.0
        %1890 = vmatmul.mubr.f32.gmra.mrb[0].mxu0 %v1185
        %v1891 = vpop.f32.mrb[0].mxu0
        %v1892 = vadd.f32 %v1667, %v1891
        %v1893 = vpop.f32.mrb[0].mxu0
        %1894 = vmatprep.mubr.f32.mxu0 0.0
        %1895 = vmatmul.mubr.f32.gmra.mrb[0].mxu0 %v1190
        %v1896 = vpop.f32.mrb[0].mxu0
        %v1897 = vadd.f32 %v1672, %v1896
        %v1898 = vpop.f32.mrb[0].mxu0
        %1899 = vmatprep.mubr.f32.mxu0 0.0
        %1900 = vmatmul.mubr.f32.gmra.mrb[0].mxu0 %v1195
        %v1901 = vpop.f32.mrb[0].mxu0
        %v1902 = vadd.f32 %v1677, %v1901
        %v1903 = vpop.f32.mrb[0].mxu0
        %1904 = vmatprep.mubr.f32.mxu0 0.0
        %1905 = vmatmul.mubr.f32.gmra.mrb[0].mxu0 %v1200
        %v1906 = vpop.f32.mrb[0].mxu0
        %v1907 = vadd.f32 %v1682, %v1906
        %v1908 = vpop.f32.mrb[0].mxu0
        %1909 = vmatprep.mubr.f32.mxu0 0.0
        %1910 = vmatmul.mubr.f32.gmra.mrb[0].mxu0 %v1205
        %v1911 = vpop.f32.mrb[0].mxu0
        %v1912 = vadd.f32 %v1687, %v1911
        %v1913 = vpop.f32.mrb[0].mxu0
        %1914 = vmatprep.mubr.f32.mxu0 0.0
        %1915 = vmatmul.mubr.f32.gmra.mrb[0].mxu0 %v1210
        %v1916 = vpop.f32.mrb[0].mxu0
        %v1917 = vadd.f32 %v1692, %v1916
        %v1918 = vpop.f32.mrb[0].mxu0
        %1919 = vmatprep.mubr.f32.mxu0 0.0
        %1920 = vmatmul.mubr.f32.gmra.mrb[0].mxu0 %v1215
        %v1921 = vpop.f32.mrb[0].mxu0
        %v1922 = vadd.f32 %v1697, %v1921
        %v1923 = vpop.f32.mrb[0].mxu0
        %1924 = vmatprep.mubr.f32.mxu0 0.0
        %1925 = vmatmul.mubr.f32.gmra.mrb[0].mxu0 %v1220
        %v1926 = vpop.f32.mrb[0].mxu0
        %v1927 = vadd.f32 %v1702, %v1926
        %v1928 = vpop.f32.mrb[0].mxu0
        %1929 = vmatprep.mubr.f32.mxu0 0.0
        %1930 = vmatmul.mubr.f32.gmra.mrb[0].mxu0 %v1225
        %v1931 = vpop.f32.mrb[0].mxu0
        %v1932 = vadd.f32 %v1707, %v1931
        %v1933 = vpop.f32.mrb[0].mxu0
        %1934 = vmatprep.mubr.f32.mxu0 0.0
        %1935 = vmatmul.mubr.f32.gmra.mrb[0].mxu0 %v1230
        %v1936 = vpop.f32.mrb[0].mxu0
        %v1937 = vadd.f32 %v1712, %v1936
        %v1938 = vpop.f32.mrb[0].mxu0
        %1939 = vmatprep.mubr.f32.mxu0 0.0
        %1940 = vmatmul.mubr.f32.gmra.mrb[0].mxu0 %v1235
        %v1941 = vpop.f32.mrb[0].mxu0
        %v1942 = vadd.f32 %v1717, %v1941
        %v1943 = vpop.f32.mrb[0].mxu0
        %1944 = vmatprep.mubr.f32.mxu0 0.0
        %1945 = vmatmul.mubr.f32.gmra.mrb[0].mxu0 %v1240
        %v1946 = vpop.f32.mrb[0].mxu0
        %v1947 = vadd.f32 %v1722, %v1946
        %v1948 = vpop.f32.mrb[0].mxu0
        %1949 = vmatprep.mubr.f32.mxu0 0.0
        %1950 = vmatmul.mubr.f32.gmra.mrb[0].mxu0 %v1245
        %v1951 = vpop.f32.mrb[0].mxu0
        %v1952 = vadd.f32 %v1727, %v1951
        %v1953 = vpop.f32.mrb[0].mxu0
        %1954 = vmatprep.mubr.f32.mxu0 0.0
        %1955 = vmatmul.mubr.f32.gmra.mrb[0].mxu0 %v1250
        %v1956 = vpop.f32.mrb[0].mxu0
        %v1957 = vadd.f32 %v1732, %v1956
        %v1958 = vpop.f32.mrb[0].mxu0
        %1959 = vmatprep.mubr.f32.mxu0 0.0
        %1960 = vmatmul.mubr.f32.gmra.mrb[0].mxu0 %v1255
        %v1961 = vpop.f32.mrb[0].mxu0
        %v1962 = vadd.f32 %v1737, %v1961
        %v1963 = vpop.f32.mrb[0].mxu0
        %1964 = vmatprep.mubr.f32.mxu0 0.0
        %1965 = vmatmul.mubr.f32.gmra.mrb[0].mxu0 %v1260
        %v1966 = vpop.f32.mrb[0].mxu0
        %v1967 = vadd.f32 %v1742, %v1966
        %v1968 = vpop.f32.mrb[0].mxu0
        %1969 = vmatprep.mubr.f32.mxu0 0.0
        %1970 = vmatmul.mubr.f32.gmra.mrb[0].mxu0 %v1265
        %v1971 = vpop.f32.mrb[0].mxu0
        %v1972 = vadd.f32 %v1747, %v1971
        %v1973 = vpop.f32.mrb[0].mxu0
        %1974 = vmatprep.mubr.f32.mxu0 0.0
        %1975 = vmatmul.mubr.f32.gmra.mrb[0].mxu0 %v1270
        %v1976 = vpop.f32.mrb[0].mxu0
        %v1977 = vadd.f32 %v1752, %v1976
        %v1978 = vpop.f32.mrb[0].mxu0
        %1979 = vmatprep.mubr.f32.mxu0 0.0
        %1980 = vmatmul.mubr.f32.gmra.mrb[0].mxu0 %v1275
        %v1981 = vpop.f32.mrb[0].mxu0
        %v1982 = vadd.f32 %v1757, %v1981
        %v1983 = vpop.f32.mrb[0].mxu0
        %1984 = vmatprep.mubr.f32.mxu0 0.0
        %1985 = vmatmul.mubr.f32.gmra.mrb[0].mxu0 %v1280
        %v1986 = vpop.f32.mrb[0].mxu0
        %v1987 = vadd.f32 %v1762, %v1986
        %v1988 = vpop.f32.mrb[0].mxu0
        %1989 = vmatprep.mubr.f32.mxu0 0.0
        %1990 = vmatmul.mubr.f32.gmra.mrb[0].mxu0 %v1285
        %v1991 = vpop.f32.mrb[0].mxu0
        %v1992 = vadd.f32 %v1767, %v1991
        %v1993 = vpop.f32.mrb[0].mxu0
        %1994 = vmatprep.mubr.f32.mxu0 0.0
        %1995 = vmatmul.mubr.f32.gmra.mrb[0].mxu0 %v1290
        %v1996 = vpop.f32.mrb[0].mxu0
        %v1997 = vadd.f32 %v1772, %v1996
        %v1998 = vpop.f32.mrb[0].mxu0
        %1999 = vmatprep.mubr.f32.mxu0 0.0
        %2000 = vmatmul.mubr.f32.gmra.mrb[0].mxu0 %v1295
        %v2001 = vpop.f32.mrb[0].mxu0
        %v2002 = vadd.f32 %v1777, %v2001
        %v2003 = vpop.f32.mrb[0].mxu0
        %2004 = vmatprep.mubr.f32.mxu0 0.0
        %2005 = vmatmul.mubr.f32.gmra.mrb[0].mxu0 %v1300
        %v2006 = vpop.f32.mrb[0].mxu0
        %v2007 = vadd.f32 %v1782, %v2006
        %v2008 = vpop.f32.mrb[0].mxu0
        %2009 = vmatprep.mubr.f32.mxu0 0.0
        %2010 = vmatmul.mubr.f32.gmra.mrb[0].mxu0 %v1305
        %v2011 = vpop.f32.mrb[0].mxu0
        %v2012 = vadd.f32 %v1787, %v2011
        %v2013 = vpop.f32.mrb[0].mxu0
        %2014 = vmatprep.mubr.f32.mxu0 0.0
        %2015 = vmatmul.mubr.f32.gmra.mrb[0].mxu0 %v1310
        %v2016 = vpop.f32.mrb[0].mxu0
        %v2017 = vadd.f32 %v1792, %v2016
        %v2018 = vpop.f32.mrb[0].mxu0
        %2019 = vmatprep.mubr.f32.mxu0 0.0
        %2020 = vmatmul.mubr.f32.gmra.mrb[0].mxu0 %v1315
        %v2021 = vpop.f32.mrb[0].mxu0
        %v2022 = vadd.f32 %v1797, %v2021
        %v2023 = vpop.f32.mrb[0].mxu0
        %2024 = vmatprep.mubr.f32.mxu0 0.0
        %2025 = vmatmul.mubr.f32.gmra.mrb[0].mxu0 %v1320
        %v2026 = vpop.f32.mrb[0].mxu0
        %v2027 = vadd.f32 %v1802, %v2026
        %v2028 = vpop.f32.mrb[0].mxu0
        %2029 = vmatprep.mubr.f32.mxu0 0.0
        %2030 = vmatmul.mubr.f32.gmra.mrb[0].mxu0 %v1325
        %v2031 = vpop.f32.mrb[0].mxu0
        %v2032 = vadd.f32 %v1807, %v2031
        %v2033 = vpop.f32.mrb[0].mxu0
        %2034 = vmatprep.mubr.f32.mxu0 0.0
        %2035 = vmatmul.mubr.f32.gmra.mrb[0].mxu0 %v1330
        %v2036 = vpop.f32.mrb[0].mxu0
        %v2037 = vadd.f32 %v1812, %v2036
        %v2038 = vpop.f32.mrb[0].mxu0
        %2039 = vmatprep.mubr.f32.mxu0 0.0
        %2040 = vmatmul.mubr.f32.gmra.mrb[0].mxu0 %v1335
        %v2041 = vpop.f32.mrb[0].mxu0
        %v2042 = vadd.f32 %v1817, %v2041
        %v2043 = vpop.f32.mrb[0].mxu0
        %2044 = vmatprep.mubr.f32.mxu0 0.0
        %2045 = vmatmul.mubr.f32.gmra.mrb[0].mxu0 %v1340
        %v2046 = vpop.f32.mrb[0].mxu0
        %v2047 = vadd.f32 %v1822, %v2046
        %v2048 = vpop.f32.mrb[0].mxu0
        %2049 = vdwg.mxu0
        %v2050 = vld [vmem:[%s514] sm:$0xff]
        %v2051 = vld [vmem:[%s514 + $0x8] sm:$0xff]
        %v2052 = vld [vmem:[%s514 + $0x10] sm:$0xff]
        %v2053 = vld [vmem:[%s514 + $0x18] sm:$0xff]
        %v2054 = vld [vmem:[%s514 + $0x20] sm:$0xff]
        %v2055 = vld [vmem:[%s514 + $0x28] sm:$0xff]
        %v2056 = vld [vmem:[%s514 + $0x30] sm:$0xff]
        %v2057 = vld [vmem:[%s514 + $0x38] sm:$0xff]
        %v2058 = vld [vmem:[%s514 + $0x40] sm:$0xff]
        %v2059 = vld [vmem:[%s514 + $0x48] sm:$0xff]
        %v2060 = vld [vmem:[%s514 + $0x50] sm:$0xff]
        %v2061 = vld [vmem:[%s514 + $0x58] sm:$0xff]
        %v2062 = vld [vmem:[%s514 + $0x60] sm:$0xff]
        %v2063 = vld [vmem:[%s514 + $0x68] sm:$0xff]
        %v2064 = vld [vmem:[%s514 + $0x70] sm:$0xff]
        %v2065 = vld [vmem:[%s514 + $0x78] sm:$0xff]
        %v2066 = vld [vmem:[%s514 + $0x80] sm:$0xff]
        %v2067 = vld [vmem:[%s514 + $0x88] sm:$0xff]
        %v2068 = vld [vmem:[%s514 + $0x90] sm:$0xff]
        %v2069 = vld [vmem:[%s514 + $0x98] sm:$0xff]
        %v2070 = vld [vmem:[%s514 + $0xa0] sm:$0xff]
        %v2071 = vld [vmem:[%s514 + $0xa8] sm:$0xff]
        %v2072 = vld [vmem:[%s514 + $0xb0] sm:$0xff]
        %v2073 = vld [vmem:[%s514 + $0xb8] sm:$0xff]
        %v2074 = vld [vmem:[%s514 + $0xc0] sm:$0xff]
        %v2075 = vld [vmem:[%s514 + $0xc8] sm:$0xff]
        %v2076 = vld [vmem:[%s514 + $0xd0] sm:$0xff]
        %v2077 = vld [vmem:[%s514 + $0xd8] sm:$0xff]
        %v2078 = vld [vmem:[%s514 + $0xe0] sm:$0xff]
        %v2079 = vld [vmem:[%s514 + $0xe8] sm:$0xff]
        %v2080 = vld [vmem:[%s514 + $0xf0] sm:$0xff]
        %v2081 = vld [vmem:[%s514 + $0xf8] sm:$0xff]
        %v2082 = vld [vmem:[%s7] sm:$0xff]
        %v2083 = vld [vmem:[%s7 + $0x8] sm:$0xff]
        %v2084 = vld [vmem:[%s7 + $0x10] sm:$0xff]
        %v2085 = vld [vmem:[%s7 + $0x18] sm:$0xff]
        %v2086 = vld [vmem:[%s7 + $0x20] sm:$0xff]
        %v2087 = vld [vmem:[%s7 + $0x28] sm:$0xff]
        %v2088 = vld [vmem:[%s7 + $0x30] sm:$0xff]
        %v2089 = vld [vmem:[%s7 + $0x38] sm:$0xff]
        %v2090 = vld [vmem:[%s7 + $0x40] sm:$0xff]
        %v2091 = vld [vmem:[%s7 + $0x48] sm:$0xff]
        %v2092 = vld [vmem:[%s7 + $0x50] sm:$0xff]
        %v2093 = vld [vmem:[%s7 + $0x58] sm:$0xff]
        %v2094 = vld [vmem:[%s7 + $0x60] sm:$0xff]
        %v2095 = vld [vmem:[%s7 + $0x68] sm:$0xff]
        %v2096 = vld [vmem:[%s7 + $0x70] sm:$0xff]
        %v2097 = vld [vmem:[%s7 + $0x78] sm:$0xff]
        %2098 = vmatprep.subr.mxu0 0.0
        %2099 = vmatpush1.msra.mxu0 %v2082
        %2100 = vmatprep.subr.mxu0 0.0
        %2101 = vmatpush1.msra.mxu0 %v2083
        %2102 = vmatprep.subr.mxu0 0.0
        %2103 = vmatpush1.msra.mxu0 %v2084
        %2104 = vmatprep.subr.mxu0 0.0
        %2105 = vmatpush1.msra.mxu0 %v2085
        %2106 = vmatprep.subr.mxu0 0.0
        %2107 = vmatpush1.msra.mxu0 %v2086
        %2108 = vmatprep.subr.mxu0 0.0
        %2109 = vmatpush1.msra.mxu0 %v2087
        %2110 = vmatprep.subr.mxu0 0.0
        %2111 = vmatpush1.msra.mxu0 %v2088
        %2112 = vmatprep.subr.mxu0 0.0
        %2113 = vmatpush1.msra.mxu0 %v2089
        %2114 = vmatprep.subr.mxu0 0.0
        %2115 = vmatpush1.msra.mxu0 %v2090
        %2116 = vmatprep.subr.mxu0 0.0
        %2117 = vmatpush1.msra.mxu0 %v2091
        %2118 = vmatprep.subr.mxu0 0.0
        %2119 = vmatpush1.msra.mxu0 %v2092
        %2120 = vmatprep.subr.mxu0 0.0
        %2121 = vmatpush1.msra.mxu0 %v2093
        %2122 = vmatprep.subr.mxu0 0.0
        %2123 = vmatpush1.msra.mxu0 %v2094
        %2124 = vmatprep.subr.mxu0 0.0
        %2125 = vmatpush1.msra.mxu0 %v2095
        %2126 = vmatprep.subr.mxu0 0.0
        %2127 = vmatpush1.msra.mxu0 %v2096
        %2128 = vmatprep.subr.mxu0 0.0
        %2129 = vmatpush1.msra.mxu0 %v2097
        %2130 = vmatprep.subr.mxu0 0.0
        %2131 = vmatpush1.msra.mxu0 0.0
        %2132 = vmatprep.subr.mxu0 0.0
        %2133 = vmatpush1.msra.mxu0 0.0
        %2134 = vmatprep.subr.mxu0 0.0
        %2135 = vmatpush1.msra.mxu0 0.0
        %2136 = vmatprep.subr.mxu0 0.0
        %2137 = vmatpush1.msra.mxu0 0.0
        %2138 = vmatprep.subr.mxu0 0.0
        %2139 = vmatpush1.msra.mxu0 0.0
        %2140 = vmatprep.subr.mxu0 0.0
        %2141 = vmatpush1.msra.mxu0 0.0
        %2142 = vmatprep.subr.mxu0 0.0
        %2143 = vmatpush1.msra.mxu0 0.0
        %2144 = vmatprep.subr.mxu0 0.0
        %2145 = vmatpush1.msra.mxu0 0.0
        %2146 = vmatprep.subr.mxu0 0.0
        %2147 = vmatpush1.msra.mxu0 0.0
        %2148 = vmatprep.subr.mxu0 0.0
        %2149 = vmatpush1.msra.mxu0 0.0
        %2150 = vmatprep.subr.mxu0 0.0
        %2151 = vmatpush1.msra.mxu0 0.0
        %2152 = vmatprep.subr.mxu0 0.0
        %2153 = vmatpush1.msra.mxu0 0.0
        %2154 = vmatprep.subr.mxu0 0.0
        %2155 = vmatpush1.msra.mxu0 0.0
        %2156 = vmatprep.subr.mxu0 0.0
        %2157 = vmatpush1.msra.mxu0 0.0
        %2158 = vmatprep.subr.mxu0 0.0
        %2159 = vmatpush1.msra.mxu0 0.0
        %2160 = vmatprep.subr.mxu0 0.0
        %2161 = vmatpush1.msra.mxu0 0.0
        %2162 = vmatprep.mubr.f32.mxu0 0.0
        %2163 = vmatmul.mubr.f32.gmra.mrb[0].mxu0 %v2050
        %v2164 = vpop.f32.mrb[0].mxu0
        %v2165 = vadd.f32 0.0, %v2164
        %v2166 = vpop.f32.mrb[0].mxu0
        %2167 = vmatprep.mubr.f32.mxu0 0.0
        %2168 = vmatmul.mubr.f32.gmra.mrb[0].mxu0 %v2051
        %v2169 = vpop.f32.mrb[0].mxu0
        %v2170 = vadd.f32 0.0, %v2169
        %v2171 = vpop.f32.mrb[0].mxu0
        %2172 = vmatprep.mubr.f32.mxu0 0.0
        %2173 = vmatmul.mubr.f32.gmra.mrb[0].mxu0 %v2052
        %v2174 = vpop.f32.mrb[0].mxu0
        %v2175 = vadd.f32 0.0, %v2174
        %v2176 = vpop.f32.mrb[0].mxu0
        %2177 = vmatprep.mubr.f32.mxu0 0.0
        %2178 = vmatmul.mubr.f32.gmra.mrb[0].mxu0 %v2053
        %v2179 = vpop.f32.mrb[0].mxu0
        %v2180 = vadd.f32 0.0, %v2179
        %v2181 = vpop.f32.mrb[0].mxu0
        %2182 = vmatprep.mubr.f32.mxu0 0.0
        %2183 = vmatmul.mubr.f32.gmra.mrb[0].mxu0 %v2054
        %v2184 = vpop.f32.mrb[0].mxu0
        %v2185 = vadd.f32 0.0, %v2184
        %v2186 = vpop.f32.mrb[0].mxu0
        %2187 = vmatprep.mubr.f32.mxu0 0.0
        %2188 = vmatmul.mubr.f32.gmra.mrb[0].mxu0 %v2055
        %v2189 = vpop.f32.mrb[0].mxu0
        %v2190 = vadd.f32 0.0, %v2189
        %v2191 = vpop.f32.mrb[0].mxu0
        %2192 = vmatprep.mubr.f32.mxu0 0.0
        %2193 = vmatmul.mubr.f32.gmra.mrb[0].mxu0 %v2056
        %v2194 = vpop.f32.mrb[0].mxu0
        %v2195 = vadd.f32 0.0, %v2194
        %v2196 = vpop.f32.mrb[0].mxu0
        %2197 = vmatprep.mubr.f32.mxu0 0.0
        %2198 = vmatmul.mubr.f32.gmra.mrb[0].mxu0 %v2057
        %v2199 = vpop.f32.mrb[0].mxu0
        %v2200 = vadd.f32 0.0, %v2199
        %v2201 = vpop.f32.mrb[0].mxu0
        %2202 = vmatprep.mubr.f32.mxu0 0.0
        %2203 = vmatmul.mubr.f32.gmra.mrb[0].mxu0 %v2058
        %v2204 = vpop.f32.mrb[0].mxu0
        %v2205 = vadd.f32 0.0, %v2204
        %v2206 = vpop.f32.mrb[0].mxu0
        %2207 = vmatprep.mubr.f32.mxu0 0.0
        %2208 = vmatmul.mubr.f32.gmra.mrb[0].mxu0 %v2059
        %v2209 = vpop.f32.mrb[0].mxu0
        %v2210 = vadd.f32 0.0, %v2209
        %v2211 = vpop.f32.mrb[0].mxu0
        %2212 = vmatprep.mubr.f32.mxu0 0.0
        %2213 = vmatmul.mubr.f32.gmra.mrb[0].mxu0 %v2060
        %v2214 = vpop.f32.mrb[0].mxu0
        %v2215 = vadd.f32 0.0, %v2214
        %v2216 = vpop.f32.mrb[0].mxu0
        %2217 = vmatprep.mubr.f32.mxu0 0.0
        %2218 = vmatmul.mubr.f32.gmra.mrb[0].mxu0 %v2061
        %v2219 = vpop.f32.mrb[0].mxu0
        %v2220 = vadd.f32 0.0, %v2219
        %v2221 = vpop.f32.mrb[0].mxu0
        %2222 = vmatprep.mubr.f32.mxu0 0.0
        %2223 = vmatmul.mubr.f32.gmra.mrb[0].mxu0 %v2062
        %v2224 = vpop.f32.mrb[0].mxu0
        %v2225 = vadd.f32 0.0, %v2224
        %v2226 = vpop.f32.mrb[0].mxu0
        %2227 = vmatprep.mubr.f32.mxu0 0.0
        %2228 = vmatmul.mubr.f32.gmra.mrb[0].mxu0 %v2063
        %v2229 = vpop.f32.mrb[0].mxu0
        %v2230 = vadd.f32 0.0, %v2229
        %v2231 = vpop.f32.mrb[0].mxu0
        %2232 = vmatprep.mubr.f32.mxu0 0.0
        %2233 = vmatmul.mubr.f32.gmra.mrb[0].mxu0 %v2064
        %v2234 = vpop.f32.mrb[0].mxu0
        %v2235 = vadd.f32 0.0, %v2234
        %v2236 = vpop.f32.mrb[0].mxu0
        %2237 = vmatprep.mubr.f32.mxu0 0.0
        %2238 = vmatmul.mubr.f32.gmra.mrb[0].mxu0 %v2065
        %v2239 = vpop.f32.mrb[0].mxu0
        %v2240 = vadd.f32 0.0, %v2239
        %v2241 = vpop.f32.mrb[0].mxu0
        %2242 = vmatprep.mubr.f32.mxu0 0.0
        %2243 = vmatmul.mubr.f32.gmra.mrb[0].mxu0 %v2066
        %v2244 = vpop.f32.mrb[0].mxu0
        %v2245 = vadd.f32 0.0, %v2244
        %v2246 = vpop.f32.mrb[0].mxu0
        %2247 = vmatprep.mubr.f32.mxu0 0.0
        %2248 = vmatmul.mubr.f32.gmra.mrb[0].mxu0 %v2067
        %v2249 = vpop.f32.mrb[0].mxu0
        %v2250 = vadd.f32 0.0, %v2249
        %v2251 = vpop.f32.mrb[0].mxu0
        %2252 = vmatprep.mubr.f32.mxu0 0.0
        %2253 = vmatmul.mubr.f32.gmra.mrb[0].mxu0 %v2068
        %v2254 = vpop.f32.mrb[0].mxu0
        %v2255 = vadd.f32 0.0, %v2254
        %v2256 = vpop.f32.mrb[0].mxu0
        %2257 = vmatprep.mubr.f32.mxu0 0.0
        %2258 = vmatmul.mubr.f32.gmra.mrb[0].mxu0 %v2069
        %v2259 = vpop.f32.mrb[0].mxu0
        %v2260 = vadd.f32 0.0, %v2259
        %v2261 = vpop.f32.mrb[0].mxu0
        %2262 = vmatprep.mubr.f32.mxu0 0.0
        %2263 = vmatmul.mubr.f32.gmra.mrb[0].mxu0 %v2070
        %v2264 = vpop.f32.mrb[0].mxu0
        %v2265 = vadd.f32 0.0, %v2264
        %v2266 = vpop.f32.mrb[0].mxu0
        %2267 = vmatprep.mubr.f32.mxu0 0.0
        %2268 = vmatmul.mubr.f32.gmra.mrb[0].mxu0 %v2071
        %v2269 = vpop.f32.mrb[0].mxu0
        %v2270 = vadd.f32 0.0, %v2269
        %v2271 = vpop.f32.mrb[0].mxu0
        %2272 = vmatprep.mubr.f32.mxu0 0.0
        %2273 = vmatmul.mubr.f32.gmra.mrb[0].mxu0 %v2072
        %v2274 = vpop.f32.mrb[0].mxu0
        %v2275 = vadd.f32 0.0, %v2274
        %v2276 = vpop.f32.mrb[0].mxu0
        %2277 = vmatprep.mubr.f32.mxu0 0.0
        %2278 = vmatmul.mubr.f32.gmra.mrb[0].mxu0 %v2073
        %v2279 = vpop.f32.mrb[0].mxu0
        %v2280 = vadd.f32 0.0, %v2279
        %v2281 = vpop.f32.mrb[0].mxu0
        %2282 = vmatprep.mubr.f32.mxu0 0.0
        %2283 = vmatmul.mubr.f32.gmra.mrb[0].mxu0 %v2074
        %v2284 = vpop.f32.mrb[0].mxu0
        %v2285 = vadd.f32 0.0, %v2284
        %v2286 = vpop.f32.mrb[0].mxu0
        %2287 = vmatprep.mubr.f32.mxu0 0.0
        %2288 = vmatmul.mubr.f32.gmra.mrb[0].mxu0 %v2075
        %v2289 = vpop.f32.mrb[0].mxu0
        %v2290 = vadd.f32 0.0, %v2289
        %v2291 = vpop.f32.mrb[0].mxu0
        %2292 = vmatprep.mubr.f32.mxu0 0.0
        %2293 = vmatmul.mubr.f32.gmra.mrb[0].mxu0 %v2076
        %v2294 = vpop.f32.mrb[0].mxu0
        %v2295 = vadd.f32 0.0, %v2294
        %v2296 = vpop.f32.mrb[0].mxu0
        %2297 = vmatprep.mubr.f32.mxu0 0.0
        %2298 = vmatmul.mubr.f32.gmra.mrb[0].mxu0 %v2077
        %v2299 = vpop.f32.mrb[0].mxu0
        %v2300 = vadd.f32 0.0, %v2299
        %v2301 = vpop.f32.mrb[0].mxu0
        %2302 = vmatprep.mubr.f32.mxu0 0.0
        %2303 = vmatmul.mubr.f32.gmra.mrb[0].mxu0 %v2078
        %v2304 = vpop.f32.mrb[0].mxu0
        %v2305 = vadd.f32 0.0, %v2304
        %v2306 = vpop.f32.mrb[0].mxu0
        %2307 = vmatprep.mubr.f32.mxu0 0.0
        %2308 = vmatmul.mubr.f32.gmra.mrb[0].mxu0 %v2079
        %v2309 = vpop.f32.mrb[0].mxu0
        %v2310 = vadd.f32 0.0, %v2309
        %v2311 = vpop.f32.mrb[0].mxu0
        %2312 = vmatprep.mubr.f32.mxu0 0.0
        %2313 = vmatmul.mubr.f32.gmra.mrb[0].mxu0 %v2080
        %v2314 = vpop.f32.mrb[0].mxu0
        %v2315 = vadd.f32 0.0, %v2314
        %v2316 = vpop.f32.mrb[0].mxu0
        %2317 = vmatprep.mubr.f32.mxu0 0.0
        %2318 = vmatmul.mubr.f32.gmra.mrb[0].mxu0 %v2081
        %v2319 = vpop.f32.mrb[0].mxu0
        %v2320 = vadd.f32 0.0, %v2319
        %v2321 = vpop.f32.mrb[0].mxu0
        %2322 = vdwg.mxu0
        %v2323 = vadd.f32 %v1892, %v2165
        %v2324 = vadd.f32 %v1897, %v2170
        %v2325 = vadd.f32 %v1902, %v2175
        %v2326 = vadd.f32 %v1907, %v2180
        %v2327 = vadd.f32 %v1912, %v2185
        %v2328 = vadd.f32 %v1917, %v2190
        %v2329 = vadd.f32 %v1922, %v2195
        %v2330 = vadd.f32 %v1927, %v2200
        %v2331 = vadd.f32 %v1932, %v2205
        %v2332 = vadd.f32 %v1937, %v2210
        %v2333 = vadd.f32 %v1942, %v2215
        %v2334 = vadd.f32 %v1947, %v2220
        %v2335 = vadd.f32 %v1952, %v2225
        %v2336 = vadd.f32 %v1957, %v2230
        %v2337 = vadd.f32 %v1962, %v2235
        %v2338 = vadd.f32 %v1967, %v2240
        %v2339 = vadd.f32 %v1972, %v2245
        %v2340 = vadd.f32 %v1977, %v2250
        %v2341 = vadd.f32 %v1982, %v2255
        %v2342 = vadd.f32 %v1987, %v2260
        %v2343 = vadd.f32 %v1992, %v2265
        %v2344 = vadd.f32 %v1997, %v2270
        %v2345 = vadd.f32 %v2002, %v2275
        %v2346 = vadd.f32 %v2007, %v2280
        %v2347 = vadd.f32 %v2012, %v2285
        %v2348 = vadd.f32 %v2017, %v2290
        %v2349 = vadd.f32 %v2022, %v2295
        %v2350 = vadd.f32 %v2027, %v2300
        %v2351 = vadd.f32 %v2032, %v2305
        %v2352 = vadd.f32 %v2037, %v2310
        %v2353 = vadd.f32 %v2042, %v2315
        %v2354 = vadd.f32 %v2047, %v2320
        %v2355 = vld [vmem:[%s8] sm:$0x1]
        %v2357 = vlaneseq
        %v2358 = vshrl.u32 %v2357, 7
        %v2359 = vsub.s32 0, %v2358
        %v2360 = vrot.slane %v2355, %v2359
        %v2362 = vadd.f32 %v2323, %v2360
        %v2363 = vadd.f32 %v2324, %v2360
        %v2364 = vadd.f32 %v2325, %v2360
        %v2365 = vadd.f32 %v2326, %v2360
        %v2366 = vadd.f32 %v2327, %v2360
        %v2367 = vadd.f32 %v2328, %v2360
        %v2368 = vadd.f32 %v2329, %v2360
        %v2369 = vadd.f32 %v2330, %v2360
        %v2370 = vadd.f32 %v2331, %v2360
        %v2371 = vadd.f32 %v2332, %v2360
        %v2372 = vadd.f32 %v2333, %v2360
        %v2373 = vadd.f32 %v2334, %v2360
        %v2374 = vadd.f32 %v2335, %v2360
        %v2375 = vadd.f32 %v2336, %v2360
        %v2376 = vadd.f32 %v2337, %v2360
        %v2377 = vadd.f32 %v2338, %v2360
        %v2378 = vadd.f32 %v2339, %v2360
        %v2379 = vadd.f32 %v2340, %v2360
        %v2380 = vadd.f32 %v2341, %v2360
        %v2381 = vadd.f32 %v2342, %v2360
        %v2382 = vadd.f32 %v2343, %v2360
        %v2383 = vadd.f32 %v2344, %v2360
        %v2384 = vadd.f32 %v2345, %v2360
        %v2385 = vadd.f32 %v2346, %v2360
        %v2386 = vadd.f32 %v2347, %v2360
        %v2387 = vadd.f32 %v2348, %v2360
        %v2388 = vadd.f32 %v2349, %v2360
        %v2389 = vadd.f32 %v2350, %v2360
        %v2390 = vadd.f32 %v2351, %v2360
        %v2391 = vadd.f32 %v2352, %v2360
        %v2392 = vadd.f32 %v2353, %v2360
        %v2393 = vadd.f32 %v2354, %v2360
        %v2394 = vxor.u32 %v2362, 2147483648
        %v2395 = vxor.u32 %v2363, 2147483648
        %v2396 = vxor.u32 %v2364, 2147483648
        %v2397 = vxor.u32 %v2365, 2147483648
        %v2398 = vxor.u32 %v2366, 2147483648
        %v2399 = vxor.u32 %v2367, 2147483648
        %v2400 = vxor.u32 %v2368, 2147483648
        %v2401 = vxor.u32 %v2369, 2147483648
        %v2402 = vxor.u32 %v2370, 2147483648
        %v2403 = vxor.u32 %v2371, 2147483648
        %v2404 = vxor.u32 %v2372, 2147483648
        %v2405 = vxor.u32 %v2373, 2147483648
        %v2406 = vxor.u32 %v2374, 2147483648
        %v2407 = vxor.u32 %v2375, 2147483648
        %v2408 = vxor.u32 %v2376, 2147483648
        %v2409 = vxor.u32 %v2377, 2147483648
        %v2410 = vxor.u32 %v2378, 2147483648
        %v2411 = vxor.u32 %v2379, 2147483648
        %v2412 = vxor.u32 %v2380, 2147483648
        %v2413 = vxor.u32 %v2381, 2147483648
        %v2414 = vxor.u32 %v2382, 2147483648
        %v2415 = vxor.u32 %v2383, 2147483648
        %v2416 = vxor.u32 %v2384, 2147483648
        %v2417 = vxor.u32 %v2385, 2147483648
        %v2418 = vxor.u32 %v2386, 2147483648
        %v2419 = vxor.u32 %v2387, 2147483648
        %v2420 = vxor.u32 %v2388, 2147483648
        %v2421 = vxor.u32 %v2389, 2147483648
        %v2422 = vxor.u32 %v2390, 2147483648
        %v2423 = vxor.u32 %v2391, 2147483648
        %v2424 = vxor.u32 %v2392, 2147483648
        %v2425 = vxor.u32 %v2393, 2147483648
        %v2426 = vmul.f32 %v2394, 1.442695
        %v2427 = vpow.pop %v2426
        %v2428 = vmul.f32 %v2395, 1.442695
        %v2429 = vpow.pop %v2428
        %v2430 = vmul.f32 %v2396, 1.442695
        %v2431 = vpow.pop %v2430
        %v2432 = vmul.f32 %v2397, 1.442695
        %v2433 = vpow.pop %v2432
        %v2434 = vmul.f32 %v2398, 1.442695
        %v2435 = vpow.pop %v2434
        %v2436 = vmul.f32 %v2399, 1.442695
        %v2437 = vpow.pop %v2436
        %v2438 = vmul.f32 %v2400, 1.442695
        %v2439 = vpow.pop %v2438
        %v2440 = vmul.f32 %v2401, 1.442695
        %v2441 = vpow.pop %v2440
        %v2442 = vmul.f32 %v2402, 1.442695
        %v2443 = vpow.pop %v2442
        %v2444 = vmul.f32 %v2403, 1.442695
        %v2445 = vpow.pop %v2444
        %v2446 = vmul.f32 %v2404, 1.442695
        %v2447 = vpow.pop %v2446
        %v2448 = vmul.f32 %v2405, 1.442695
        %v2449 = vpow.pop %v2448
        %v2450 = vmul.f32 %v2406, 1.442695
        %v2451 = vpow.pop %v2450
        %v2452 = vmul.f32 %v2407, 1.442695
        %v2453 = vpow.pop %v2452
        %v2454 = vmul.f32 %v2408, 1.442695
        %v2455 = vpow.pop %v2454
        %v2456 = vmul.f32 %v2409, 1.442695
        %v2457 = vpow.pop %v2456
        %v2458 = vmul.f32 %v2410, 1.442695
        %v2459 = vpow.pop %v2458
        %v2460 = vmul.f32 %v2411, 1.442695
        %v2461 = vpow.pop %v2460
        %v2462 = vmul.f32 %v2412, 1.442695
        %v2463 = vpow.pop %v2462
        %v2464 = vmul.f32 %v2413, 1.442695
        %v2465 = vpow.pop %v2464
        %v2466 = vmul.f32 %v2414, 1.442695
        %v2467 = vpow.pop %v2466
        %v2468 = vmul.f32 %v2415, 1.442695
        %v2469 = vpow.pop %v2468
        %v2470 = vmul.f32 %v2416, 1.442695
        %v2471 = vpow.pop %v2470
        %v2472 = vmul.f32 %v2417, 1.442695
        %v2473 = vpow.pop %v2472
        %v2474 = vmul.f32 %v2418, 1.442695
        %v2475 = vpow.pop %v2474
        %v2476 = vmul.f32 %v2419, 1.442695
        %v2477 = vpow.pop %v2476
        %v2478 = vmul.f32 %v2420, 1.442695
        %v2479 = vpow.pop %v2478
        %v2480 = vmul.f32 %v2421, 1.442695
        %v2481 = vpow.pop %v2480
        %v2482 = vmul.f32 %v2422, 1.442695
        %v2483 = vpow.pop %v2482
        %v2484 = vmul.f32 %v2423, 1.442695
        %v2485 = vpow.pop %v2484
        %v2486 = vmul.f32 %v2424, 1.442695
        %v2487 = vpow.pop %v2486
        %v2488 = vmul.f32 %v2425, 1.442695
        %v2489 = vpow.pop %v2488
        %v2490 = vadd.f32 %v2427, 1.0
        %v2491 = vadd.f32 %v2429, 1.0
        %v2492 = vadd.f32 %v2431, 1.0
        %v2493 = vadd.f32 %v2433, 1.0
        %v2494 = vadd.f32 %v2435, 1.0
        %v2495 = vadd.f32 %v2437, 1.0
        %v2496 = vadd.f32 %v2439, 1.0
        %v2497 = vadd.f32 %v2441, 1.0
        %v2498 = vadd.f32 %v2443, 1.0
        %v2499 = vadd.f32 %v2445, 1.0
        %v2500 = vadd.f32 %v2447, 1.0
        %v2501 = vadd.f32 %v2449, 1.0
        %v2502 = vadd.f32 %v2451, 1.0
        %v2503 = vadd.f32 %v2453, 1.0
        %v2504 = vadd.f32 %v2455, 1.0
        %v2505 = vadd.f32 %v2457, 1.0
        %v2506 = vadd.f32 %v2459, 1.0
        %v2507 = vadd.f32 %v2461, 1.0
        %v2508 = vadd.f32 %v2463, 1.0
        %v2509 = vadd.f32 %v2465, 1.0
        %v2510 = vadd.f32 %v2467, 1.0
        %v2511 = vadd.f32 %v2469, 1.0
        %v2512 = vadd.f32 %v2471, 1.0
        %v2513 = vadd.f32 %v2473, 1.0
        %v2514 = vadd.f32 %v2475, 1.0
        %v2515 = vadd.f32 %v2477, 1.0
        %v2516 = vadd.f32 %v2479, 1.0
        %v2517 = vadd.f32 %v2481, 1.0
        %v2518 = vadd.f32 %v2483, 1.0
        %v2519 = vadd.f32 %v2485, 1.0
        %v2520 = vadd.f32 %v2487, 1.0
        %v2521 = vadd.f32 %v2489, 1.0
        %v2522 = vrcp.pop %v2490
        %v2523 = vmul.f32 1.0, %v2522
        %v2524 = vrcp.pop %v2491
        %v2525 = vmul.f32 1.0, %v2524
        %v2526 = vrcp.pop %v2492
        %v2527 = vmul.f32 1.0, %v2526
        %v2528 = vrcp.pop %v2493
        %v2529 = vmul.f32 1.0, %v2528
        %v2530 = vrcp.pop %v2494
        %v2531 = vmul.f32 1.0, %v2530
        %v2532 = vrcp.pop %v2495
        %v2533 = vmul.f32 1.0, %v2532
        %v2534 = vrcp.pop %v2496
        %v2535 = vmul.f32 1.0, %v2534
        %v2536 = vrcp.pop %v2497
        %v2537 = vmul.f32 1.0, %v2536
        %v2538 = vrcp.pop %v2498
        %v2539 = vmul.f32 1.0, %v2538
        %v2540 = vrcp.pop %v2499
        %v2541 = vmul.f32 1.0, %v2540
        %v2542 = vrcp.pop %v2500
        %v2543 = vmul.f32 1.0, %v2542
        %v2544 = vrcp.pop %v2501
        %v2545 = vmul.f32 1.0, %v2544
        %v2546 = vrcp.pop %v2502
        %v2547 = vmul.f32 1.0, %v2546
        %v2548 = vrcp.pop %v2503
        %v2549 = vmul.f32 1.0, %v2548
        %v2550 = vrcp.pop %v2504
        %v2551 = vmul.f32 1.0, %v2550
        %v2552 = vrcp.pop %v2505
        %v2553 = vmul.f32 1.0, %v2552
        %v2554 = vrcp.pop %v2506
        %v2555 = vmul.f32 1.0, %v2554
        %v2556 = vrcp.pop %v2507
        %v2557 = vmul.f32 1.0, %v2556
        %v2558 = vrcp.pop %v2508
        %v2559 = vmul.f32 1.0, %v2558
        %v2560 = vrcp.pop %v2509
        %v2561 = vmul.f32 1.0, %v2560
        %v2562 = vrcp.pop %v2510
        %v2563 = vmul.f32 1.0, %v2562
        %v2564 = vrcp.pop %v2511
        %v2565 = vmul.f32 1.0, %v2564
        %v2566 = vrcp.pop %v2512
        %v2567 = vmul.f32 1.0, %v2566
        %v2568 = vrcp.pop %v2513
        %v2569 = vmul.f32 1.0, %v2568
        %v2570 = vrcp.pop %v2514
        %v2571 = vmul.f32 1.0, %v2570
        %v2572 = vrcp.pop %v2515
        %v2573 = vmul.f32 1.0, %v2572
        %v2574 = vrcp.pop %v2516
        %v2575 = vmul.f32 1.0, %v2574
        %v2576 = vrcp.pop %v2517
        %v2577 = vmul.f32 1.0, %v2576
        %v2578 = vrcp.pop %v2518
        %v2579 = vmul.f32 1.0, %v2578
        %v2580 = vrcp.pop %v2519
        %v2581 = vmul.f32 1.0, %v2580
        %v2582 = vrcp.pop %v2520
        %v2583 = vmul.f32 1.0, %v2582
        %v2584 = vrcp.pop %v2521
        %v2585 = vmul.f32 1.0, %v2584
        %v2586 = vmul.f32 %v2362, %v2523
        %v2587 = vmul.f32 %v2363, %v2525
        %v2588 = vmul.f32 %v2364, %v2527
        %v2589 = vmul.f32 %v2365, %v2529
        %v2590 = vmul.f32 %v2366, %v2531
        %v2591 = vmul.f32 %v2367, %v2533
        %v2592 = vmul.f32 %v2368, %v2535
        %v2593 = vmul.f32 %v2369, %v2537
        %v2594 = vmul.f32 %v2370, %v2539
        %v2595 = vmul.f32 %v2371, %v2541
        %v2596 = vmul.f32 %v2372, %v2543
        %v2597 = vmul.f32 %v2373, %v2545
        %v2598 = vmul.f32 %v2374, %v2547
        %v2599 = vmul.f32 %v2375, %v2549
        %v2600 = vmul.f32 %v2376, %v2551
        %v2601 = vmul.f32 %v2377, %v2553
        %v2602 = vmul.f32 %v2378, %v2555
        %v2603 = vmul.f32 %v2379, %v2557
        %v2604 = vmul.f32 %v2380, %v2559
        %v2605 = vmul.f32 %v2381, %v2561
        %v2606 = vmul.f32 %v2382, %v2563
        %v2607 = vmul.f32 %v2383, %v2565
        %v2608 = vmul.f32 %v2384, %v2567
        %v2609 = vmul.f32 %v2385, %v2569
        %v2610 = vmul.f32 %v2386, %v2571
        %v2611 = vmul.f32 %v2387, %v2573
        %v2612 = vmul.f32 %v2388, %v2575
        %v2613 = vmul.f32 %v2389, %v2577
        %v2614 = vmul.f32 %v2390, %v2579
        %v2615 = vmul.f32 %v2391, %v2581
        %v2616 = vmul.f32 %v2392, %v2583
        %v2617 = vmul.f32 %v2393, %v2585
        %v2618 = vld [vmem:[%s9] sm:$0xff]
        %v2619 = vld [vmem:[%s9 + $0x8] sm:$0xff]
        %v2620 = vld [vmem:[%s9 + $0x10] sm:$0xff]
        %v2621 = vld [vmem:[%s9 + $0x18] sm:$0xff]
        %v2622 = vld [vmem:[%s9 + $0x20] sm:$0xff]
        %v2623 = vld [vmem:[%s9 + $0x28] sm:$0xff]
        %v2624 = vld [vmem:[%s9 + $0x30] sm:$0xff]
        %v2625 = vld [vmem:[%s9 + $0x38] sm:$0xff]
        %v2626 = vld [vmem:[%s9 + $0x40] sm:$0xff]
        %v2627 = vld [vmem:[%s9 + $0x48] sm:$0xff]
        %v2628 = vld [vmem:[%s9 + $0x50] sm:$0xff]
        %v2629 = vld [vmem:[%s9 + $0x58] sm:$0xff]
        %v2630 = vld [vmem:[%s9 + $0x60] sm:$0xff]
        %v2631 = vld [vmem:[%s9 + $0x68] sm:$0xff]
        %v2632 = vld [vmem:[%s9 + $0x70] sm:$0xff]
        %v2633 = vld [vmem:[%s9 + $0x78] sm:$0xff]
        %v2634 = vld [vmem:[%s10] sm:$0x1]
        %v2636 = vlaneseq
        %v2637 = vshrl.u32 %v2636, 7
        %v2638 = vsub.s32 0, %v2637
        %v2639 = vrot.slane %v2634, %v2638
        %2641 = vmatprep.subr.mxu0 0.0
        %2642 = vmatpush1.msra.mxu0 %v2618
        %2643 = vmatprep.subr.mxu0 0.0
        %2644 = vmatpush1.msra.mxu0 %v2619
        %2645 = vmatprep.subr.mxu0 0.0
        %2646 = vmatpush1.msra.mxu0 %v2620
        %2647 = vmatprep.subr.mxu0 0.0
        %2648 = vmatpush1.msra.mxu0 %v2621
        %2649 = vmatprep.subr.mxu0 0.0
        %2650 = vmatpush1.msra.mxu0 %v2622
        %2651 = vmatprep.subr.mxu0 0.0
        %2652 = vmatpush1.msra.mxu0 %v2623
        %2653 = vmatprep.subr.mxu0 0.0
        %2654 = vmatpush1.msra.mxu0 %v2624
        %2655 = vmatprep.subr.mxu0 0.0
        %2656 = vmatpush1.msra.mxu0 %v2625
        %2657 = vmatprep.subr.mxu0 0.0
        %2658 = vmatpush1.msra.mxu0 %v2626
        %2659 = vmatprep.subr.mxu0 0.0
        %2660 = vmatpush1.msra.mxu0 %v2627
        %2661 = vmatprep.subr.mxu0 0.0
        %2662 = vmatpush1.msra.mxu0 %v2628
        %2663 = vmatprep.subr.mxu0 0.0
        %2664 = vmatpush1.msra.mxu0 %v2629
        %2665 = vmatprep.subr.mxu0 0.0
        %2666 = vmatpush1.msra.mxu0 %v2630
        %2667 = vmatprep.subr.mxu0 0.0
        %2668 = vmatpush1.msra.mxu0 %v2631
        %2669 = vmatprep.subr.mxu0 0.0
        %2670 = vmatpush1.msra.mxu0 %v2632
        %2671 = vmatprep.subr.mxu0 0.0
        %2672 = vmatpush1.msra.mxu0 %v2633
        %2673 = vmatprep.subr.mxu0 0.0
        %2674 = vmatpush1.msra.mxu0 0.0
        %2675 = vmatprep.subr.mxu0 0.0
        %2676 = vmatpush1.msra.mxu0 0.0
        %2677 = vmatprep.subr.mxu0 0.0
        %2678 = vmatpush1.msra.mxu0 0.0
        %2679 = vmatprep.subr.mxu0 0.0
        %2680 = vmatpush1.msra.mxu0 0.0
        %2681 = vmatprep.subr.mxu0 0.0
        %2682 = vmatpush1.msra.mxu0 0.0
        %2683 = vmatprep.subr.mxu0 0.0
        %2684 = vmatpush1.msra.mxu0 0.0
        %2685 = vmatprep.subr.mxu0 0.0
        %2686 = vmatpush1.msra.mxu0 0.0
        %2687 = vmatprep.subr.mxu0 0.0
        %2688 = vmatpush1.msra.mxu0 0.0
        %2689 = vmatprep.subr.mxu0 0.0
        %2690 = vmatpush1.msra.mxu0 0.0
        %2691 = vmatprep.subr.mxu0 0.0
        %2692 = vmatpush1.msra.mxu0 0.0
        %2693 = vmatprep.subr.mxu0 0.0
        %2694 = vmatpush1.msra.mxu0 0.0
        %2695 = vmatprep.subr.mxu0 0.0
        %2696 = vmatpush1.msra.mxu0 0.0
        %2697 = vmatprep.subr.mxu0 0.0
        %2698 = vmatpush1.msra.mxu0 0.0
        %2699 = vmatprep.subr.mxu0 0.0
        %2700 = vmatpush1.msra.mxu0 0.0
        %2701 = vmatprep.subr.mxu0 0.0
        %2702 = vmatpush1.msra.mxu0 0.0
        %2703 = vmatprep.subr.mxu0 0.0
        %2704 = vmatpush1.msra.mxu0 0.0
        %2705 = vmatprep.mubr.f32.mxu0 0.0
        %2706 = vmatmul.mubr.f32.gmra.mrb[0].mxu0 %v2586
        %v2707 = vpop.f32.mrb[0].mxu0
        %v2708 = vadd.f32 %v2639, %v2707
        %v2709 = vpop.f32.mrb[0].mxu0
        %2710 = vmatprep.mubr.f32.mxu0 0.0
        %2711 = vmatmul.mubr.f32.gmra.mrb[0].mxu0 %v2587
        %v2712 = vpop.f32.mrb[0].mxu0
        %v2713 = vadd.f32 %v2639, %v2712
        %v2714 = vpop.f32.mrb[0].mxu0
        %2715 = vmatprep.mubr.f32.mxu0 0.0
        %2716 = vmatmul.mubr.f32.gmra.mrb[0].mxu0 %v2588
        %v2717 = vpop.f32.mrb[0].mxu0
        %v2718 = vadd.f32 %v2639, %v2717
        %v2719 = vpop.f32.mrb[0].mxu0
        %2720 = vmatprep.mubr.f32.mxu0 0.0
        %2721 = vmatmul.mubr.f32.gmra.mrb[0].mxu0 %v2589
        %v2722 = vpop.f32.mrb[0].mxu0
        %v2723 = vadd.f32 %v2639, %v2722
        %v2724 = vpop.f32.mrb[0].mxu0
        %2725 = vmatprep.mubr.f32.mxu0 0.0
        %2726 = vmatmul.mubr.f32.gmra.mrb[0].mxu0 %v2590
        %v2727 = vpop.f32.mrb[0].mxu0
        %v2728 = vadd.f32 %v2639, %v2727
        %v2729 = vpop.f32.mrb[0].mxu0
        %2730 = vmatprep.mubr.f32.mxu0 0.0
        %2731 = vmatmul.mubr.f32.gmra.mrb[0].mxu0 %v2591
        %v2732 = vpop.f32.mrb[0].mxu0
        %v2733 = vadd.f32 %v2639, %v2732
        %v2734 = vpop.f32.mrb[0].mxu0
        %2735 = vmatprep.mubr.f32.mxu0 0.0
        %2736 = vmatmul.mubr.f32.gmra.mrb[0].mxu0 %v2592
        %v2737 = vpop.f32.mrb[0].mxu0
        %v2738 = vadd.f32 %v2639, %v2737
        %v2739 = vpop.f32.mrb[0].mxu0
        %2740 = vmatprep.mubr.f32.mxu0 0.0
        %2741 = vmatmul.mubr.f32.gmra.mrb[0].mxu0 %v2593
        %v2742 = vpop.f32.mrb[0].mxu0
        %v2743 = vadd.f32 %v2639, %v2742
        %v2744 = vpop.f32.mrb[0].mxu0
        %2745 = vmatprep.mubr.f32.mxu0 0.0
        %2746 = vmatmul.mubr.f32.gmra.mrb[0].mxu0 %v2594
        %v2747 = vpop.f32.mrb[0].mxu0
        %v2748 = vadd.f32 %v2639, %v2747
        %v2749 = vpop.f32.mrb[0].mxu0
        %2750 = vmatprep.mubr.f32.mxu0 0.0
        %2751 = vmatmul.mubr.f32.gmra.mrb[0].mxu0 %v2595
        %v2752 = vpop.f32.mrb[0].mxu0
        %v2753 = vadd.f32 %v2639, %v2752
        %v2754 = vpop.f32.mrb[0].mxu0
        %2755 = vmatprep.mubr.f32.mxu0 0.0
        %2756 = vmatmul.mubr.f32.gmra.mrb[0].mxu0 %v2596
        %v2757 = vpop.f32.mrb[0].mxu0
        %v2758 = vadd.f32 %v2639, %v2757
        %v2759 = vpop.f32.mrb[0].mxu0
        %2760 = vmatprep.mubr.f32.mxu0 0.0
        %2761 = vmatmul.mubr.f32.gmra.mrb[0].mxu0 %v2597
        %v2762 = vpop.f32.mrb[0].mxu0
        %v2763 = vadd.f32 %v2639, %v2762
        %v2764 = vpop.f32.mrb[0].mxu0
        %2765 = vmatprep.mubr.f32.mxu0 0.0
        %2766 = vmatmul.mubr.f32.gmra.mrb[0].mxu0 %v2598
        %v2767 = vpop.f32.mrb[0].mxu0
        %v2768 = vadd.f32 %v2639, %v2767
        %v2769 = vpop.f32.mrb[0].mxu0
        %2770 = vmatprep.mubr.f32.mxu0 0.0
        %2771 = vmatmul.mubr.f32.gmra.mrb[0].mxu0 %v2599
        %v2772 = vpop.f32.mrb[0].mxu0
        %v2773 = vadd.f32 %v2639, %v2772
        %v2774 = vpop.f32.mrb[0].mxu0
        %2775 = vmatprep.mubr.f32.mxu0 0.0
        %2776 = vmatmul.mubr.f32.gmra.mrb[0].mxu0 %v2600
        %v2777 = vpop.f32.mrb[0].mxu0
        %v2778 = vadd.f32 %v2639, %v2777
        %v2779 = vpop.f32.mrb[0].mxu0
        %2780 = vmatprep.mubr.f32.mxu0 0.0
        %2781 = vmatmul.mubr.f32.gmra.mrb[0].mxu0 %v2601
        %v2782 = vpop.f32.mrb[0].mxu0
        %v2783 = vadd.f32 %v2639, %v2782
        %v2784 = vpop.f32.mrb[0].mxu0
        %2785 = vmatprep.mubr.f32.mxu0 0.0
        %2786 = vmatmul.mubr.f32.gmra.mrb[0].mxu0 %v2602
        %v2787 = vpop.f32.mrb[0].mxu0
        %v2788 = vadd.f32 %v2639, %v2787
        %v2789 = vpop.f32.mrb[0].mxu0
        %2790 = vmatprep.mubr.f32.mxu0 0.0
        %2791 = vmatmul.mubr.f32.gmra.mrb[0].mxu0 %v2603
        %v2792 = vpop.f32.mrb[0].mxu0
        %v2793 = vadd.f32 %v2639, %v2792
        %v2794 = vpop.f32.mrb[0].mxu0
        %2795 = vmatprep.mubr.f32.mxu0 0.0
        %2796 = vmatmul.mubr.f32.gmra.mrb[0].mxu0 %v2604
        %v2797 = vpop.f32.mrb[0].mxu0
        %v2798 = vadd.f32 %v2639, %v2797
        %v2799 = vpop.f32.mrb[0].mxu0
        %2800 = vmatprep.mubr.f32.mxu0 0.0
        %2801 = vmatmul.mubr.f32.gmra.mrb[0].mxu0 %v2605
        %v2802 = vpop.f32.mrb[0].mxu0
        %v2803 = vadd.f32 %v2639, %v2802
        %v2804 = vpop.f32.mrb[0].mxu0
        %2805 = vmatprep.mubr.f32.mxu0 0.0
        %2806 = vmatmul.mubr.f32.gmra.mrb[0].mxu0 %v2606
        %v2807 = vpop.f32.mrb[0].mxu0
        %v2808 = vadd.f32 %v2639, %v2807
        %v2809 = vpop.f32.mrb[0].mxu0
        %2810 = vmatprep.mubr.f32.mxu0 0.0
        %2811 = vmatmul.mubr.f32.gmra.mrb[0].mxu0 %v2607
        %v2812 = vpop.f32.mrb[0].mxu0
        %v2813 = vadd.f32 %v2639, %v2812
        %v2814 = vpop.f32.mrb[0].mxu0
        %2815 = vmatprep.mubr.f32.mxu0 0.0
        %2816 = vmatmul.mubr.f32.gmra.mrb[0].mxu0 %v2608
        %v2817 = vpop.f32.mrb[0].mxu0
        %v2818 = vadd.f32 %v2639, %v2817
        %v2819 = vpop.f32.mrb[0].mxu0
        %2820 = vmatprep.mubr.f32.mxu0 0.0
        %2821 = vmatmul.mubr.f32.gmra.mrb[0].mxu0 %v2609
        %v2822 = vpop.f32.mrb[0].mxu0
        %v2823 = vadd.f32 %v2639, %v2822
        %v2824 = vpop.f32.mrb[0].mxu0
        %2825 = vmatprep.mubr.f32.mxu0 0.0
        %2826 = vmatmul.mubr.f32.gmra.mrb[0].mxu0 %v2610
        %v2827 = vpop.f32.mrb[0].mxu0
        %v2828 = vadd.f32 %v2639, %v2827
        %v2829 = vpop.f32.mrb[0].mxu0
        %2830 = vmatprep.mubr.f32.mxu0 0.0
        %2831 = vmatmul.mubr.f32.gmra.mrb[0].mxu0 %v2611
        %v2832 = vpop.f32.mrb[0].mxu0
        %v2833 = vadd.f32 %v2639, %v2832
        %v2834 = vpop.f32.mrb[0].mxu0
        %2835 = vmatprep.mubr.f32.mxu0 0.0
        %2836 = vmatmul.mubr.f32.gmra.mrb[0].mxu0 %v2612
        %v2837 = vpop.f32.mrb[0].mxu0
        %v2838 = vadd.f32 %v2639, %v2837
        %v2839 = vpop.f32.mrb[0].mxu0
        %2840 = vmatprep.mubr.f32.mxu0 0.0
        %2841 = vmatmul.mubr.f32.gmra.mrb[0].mxu0 %v2613
        %v2842 = vpop.f32.mrb[0].mxu0
        %v2843 = vadd.f32 %v2639, %v2842
        %v2844 = vpop.f32.mrb[0].mxu0
        %2845 = vmatprep.mubr.f32.mxu0 0.0
        %2846 = vmatmul.mubr.f32.gmra.mrb[0].mxu0 %v2614
        %v2847 = vpop.f32.mrb[0].mxu0
        %v2848 = vadd.f32 %v2639, %v2847
        %v2849 = vpop.f32.mrb[0].mxu0
        %2850 = vmatprep.mubr.f32.mxu0 0.0
        %2851 = vmatmul.mubr.f32.gmra.mrb[0].mxu0 %v2615
        %v2852 = vpop.f32.mrb[0].mxu0
        %v2853 = vadd.f32 %v2639, %v2852
        %v2854 = vpop.f32.mrb[0].mxu0
        %2855 = vmatprep.mubr.f32.mxu0 0.0
        %2856 = vmatmul.mubr.f32.gmra.mrb[0].mxu0 %v2616
        %v2857 = vpop.f32.mrb[0].mxu0
        %v2858 = vadd.f32 %v2639, %v2857
        %v2859 = vpop.f32.mrb[0].mxu0
        %2860 = vmatprep.mubr.f32.mxu0 0.0
        %2861 = vmatmul.mubr.f32.gmra.mrb[0].mxu0 %v2617
        %v2862 = vpop.f32.mrb[0].mxu0
        %v2863 = vadd.f32 %v2639, %v2862
        %v2864 = vpop.f32.mrb[0].mxu0
        %2865 = vdwg.mxu0
        %v2866 = vxor.u32 %v2708, 2147483648
        %v2867 = vxor.u32 %v2713, 2147483648
        %v2868 = vxor.u32 %v2718, 2147483648
        %v2869 = vxor.u32 %v2723, 2147483648
        %v2870 = vxor.u32 %v2728, 2147483648
        %v2871 = vxor.u32 %v2733, 2147483648
        %v2872 = vxor.u32 %v2738, 2147483648
        %v2873 = vxor.u32 %v2743, 2147483648
        %v2874 = vxor.u32 %v2748, 2147483648
        %v2875 = vxor.u32 %v2753, 2147483648
        %v2876 = vxor.u32 %v2758, 2147483648
        %v2877 = vxor.u32 %v2763, 2147483648
        %v2878 = vxor.u32 %v2768, 2147483648
        %v2879 = vxor.u32 %v2773, 2147483648
        %v2880 = vxor.u32 %v2778, 2147483648
        %v2881 = vxor.u32 %v2783, 2147483648
        %v2882 = vxor.u32 %v2788, 2147483648
        %v2883 = vxor.u32 %v2793, 2147483648
        %v2884 = vxor.u32 %v2798, 2147483648
        %v2885 = vxor.u32 %v2803, 2147483648
        %v2886 = vxor.u32 %v2808, 2147483648
        %v2887 = vxor.u32 %v2813, 2147483648
        %v2888 = vxor.u32 %v2818, 2147483648
        %v2889 = vxor.u32 %v2823, 2147483648
        %v2890 = vxor.u32 %v2828, 2147483648
        %v2891 = vxor.u32 %v2833, 2147483648
        %v2892 = vxor.u32 %v2838, 2147483648
        %v2893 = vxor.u32 %v2843, 2147483648
        %v2894 = vxor.u32 %v2848, 2147483648
        %v2895 = vxor.u32 %v2853, 2147483648
        %v2896 = vxor.u32 %v2858, 2147483648
        %v2897 = vxor.u32 %v2863, 2147483648
        %v2898 = vmul.f32 %v2866, 1.442695
        %v2899 = vpow.pop %v2898
        %v2900 = vmul.f32 %v2867, 1.442695
        %v2901 = vpow.pop %v2900
        %v2902 = vmul.f32 %v2868, 1.442695
        %v2903 = vpow.pop %v2902
        %v2904 = vmul.f32 %v2869, 1.442695
        %v2905 = vpow.pop %v2904
        %v2906 = vmul.f32 %v2870, 1.442695
        %v2907 = vpow.pop %v2906
        %v2908 = vmul.f32 %v2871, 1.442695
        %v2909 = vpow.pop %v2908
        %v2910 = vmul.f32 %v2872, 1.442695
        %v2911 = vpow.pop %v2910
        %v2912 = vmul.f32 %v2873, 1.442695
        %v2913 = vpow.pop %v2912
        %v2914 = vmul.f32 %v2874, 1.442695
        %v2915 = vpow.pop %v2914
        %v2916 = vmul.f32 %v2875, 1.442695
        %v2917 = vpow.pop %v2916
        %v2918 = vmul.f32 %v2876, 1.442695
        %v2919 = vpow.pop %v2918
        %v2920 = vmul.f32 %v2877, 1.442695
        %v2921 = vpow.pop %v2920
        %v2922 = vmul.f32 %v2878, 1.442695
        %v2923 = vpow.pop %v2922
        %v2924 = vmul.f32 %v2879, 1.442695
        %v2925 = vpow.pop %v2924
        %v2926 = vmul.f32 %v2880, 1.442695
        %v2927 = vpow.pop %v2926
        %v2928 = vmul.f32 %v2881, 1.442695
        %v2929 = vpow.pop %v2928
        %v2930 = vmul.f32 %v2882, 1.442695
        %v2931 = vpow.pop %v2930
        %v2932 = vmul.f32 %v2883, 1.442695
        %v2933 = vpow.pop %v2932
        %v2934 = vmul.f32 %v2884, 1.442695
        %v2935 = vpow.pop %v2934
        %v2936 = vmul.f32 %v2885, 1.442695
        %v2937 = vpow.pop %v2936
        %v2938 = vmul.f32 %v2886, 1.442695
        %v2939 = vpow.pop %v2938
        %v2940 = vmul.f32 %v2887, 1.442695
        %v2941 = vpow.pop %v2940
        %v2942 = vmul.f32 %v2888, 1.442695
        %v2943 = vpow.pop %v2942
        %v2944 = vmul.f32 %v2889, 1.442695
        %v2945 = vpow.pop %v2944
        %v2946 = vmul.f32 %v2890, 1.442695
        %v2947 = vpow.pop %v2946
        %v2948 = vmul.f32 %v2891, 1.442695
        %v2949 = vpow.pop %v2948
        %v2950 = vmul.f32 %v2892, 1.442695
        %v2951 = vpow.pop %v2950
        %v2952 = vmul.f32 %v2893, 1.442695
        %v2953 = vpow.pop %v2952
        %v2954 = vmul.f32 %v2894, 1.442695
        %v2955 = vpow.pop %v2954
        %v2956 = vmul.f32 %v2895, 1.442695
        %v2957 = vpow.pop %v2956
        %v2958 = vmul.f32 %v2896, 1.442695
        %v2959 = vpow.pop %v2958
        %v2960 = vmul.f32 %v2897, 1.442695
        %v2961 = vpow.pop %v2960
        %v2962 = vadd.f32 %v2899, 1.0
        %v2963 = vadd.f32 %v2901, 1.0
        %v2964 = vadd.f32 %v2903, 1.0
        %v2965 = vadd.f32 %v2905, 1.0
        %v2966 = vadd.f32 %v2907, 1.0
        %v2967 = vadd.f32 %v2909, 1.0
        %v2968 = vadd.f32 %v2911, 1.0
        %v2969 = vadd.f32 %v2913, 1.0
        %v2970 = vadd.f32 %v2915, 1.0
        %v2971 = vadd.f32 %v2917, 1.0
        %v2972 = vadd.f32 %v2919, 1.0
        %v2973 = vadd.f32 %v2921, 1.0
        %v2974 = vadd.f32 %v2923, 1.0
        %v2975 = vadd.f32 %v2925, 1.0
        %v2976 = vadd.f32 %v2927, 1.0
        %v2977 = vadd.f32 %v2929, 1.0
        %v2978 = vadd.f32 %v2931, 1.0
        %v2979 = vadd.f32 %v2933, 1.0
        %v2980 = vadd.f32 %v2935, 1.0
        %v2981 = vadd.f32 %v2937, 1.0
        %v2982 = vadd.f32 %v2939, 1.0
        %v2983 = vadd.f32 %v2941, 1.0
        %v2984 = vadd.f32 %v2943, 1.0
        %v2985 = vadd.f32 %v2945, 1.0
        %v2986 = vadd.f32 %v2947, 1.0
        %v2987 = vadd.f32 %v2949, 1.0
        %v2988 = vadd.f32 %v2951, 1.0
        %v2989 = vadd.f32 %v2953, 1.0
        %v2990 = vadd.f32 %v2955, 1.0
        %v2991 = vadd.f32 %v2957, 1.0
        %v2992 = vadd.f32 %v2959, 1.0
        %v2993 = vadd.f32 %v2961, 1.0
        %v2994 = vrcp.pop %v2962
        %v2995 = vmul.f32 1.0, %v2994
        %v2996 = vrcp.pop %v2963
        %v2997 = vmul.f32 1.0, %v2996
        %v2998 = vrcp.pop %v2964
        %v2999 = vmul.f32 1.0, %v2998
        %v3000 = vrcp.pop %v2965
        %v3001 = vmul.f32 1.0, %v3000
        %v3002 = vrcp.pop %v2966
        %v3003 = vmul.f32 1.0, %v3002
        %v3004 = vrcp.pop %v2967
        %v3005 = vmul.f32 1.0, %v3004
        %v3006 = vrcp.pop %v2968
        %v3007 = vmul.f32 1.0, %v3006
        %v3008 = vrcp.pop %v2969
        %v3009 = vmul.f32 1.0, %v3008
        %v3010 = vrcp.pop %v2970
        %v3011 = vmul.f32 1.0, %v3010
        %v3012 = vrcp.pop %v2971
        %v3013 = vmul.f32 1.0, %v3012
        %v3014 = vrcp.pop %v2972
        %v3015 = vmul.f32 1.0, %v3014
        %v3016 = vrcp.pop %v2973
        %v3017 = vmul.f32 1.0, %v3016
        %v3018 = vrcp.pop %v2974
        %v3019 = vmul.f32 1.0, %v3018
        %v3020 = vrcp.pop %v2975
        %v3021 = vmul.f32 1.0, %v3020
        %v3022 = vrcp.pop %v2976
        %v3023 = vmul.f32 1.0, %v3022
        %v3024 = vrcp.pop %v2977
        %v3025 = vmul.f32 1.0, %v3024
        %v3026 = vrcp.pop %v2978
        %v3027 = vmul.f32 1.0, %v3026
        %v3028 = vrcp.pop %v2979
        %v3029 = vmul.f32 1.0, %v3028
        %v3030 = vrcp.pop %v2980
        %v3031 = vmul.f32 1.0, %v3030
        %v3032 = vrcp.pop %v2981
        %v3033 = vmul.f32 1.0, %v3032
        %v3034 = vrcp.pop %v2982
        %v3035 = vmul.f32 1.0, %v3034
        %v3036 = vrcp.pop %v2983
        %v3037 = vmul.f32 1.0, %v3036
        %v3038 = vrcp.pop %v2984
        %v3039 = vmul.f32 1.0, %v3038
        %v3040 = vrcp.pop %v2985
        %v3041 = vmul.f32 1.0, %v3040
        %v3042 = vrcp.pop %v2986
        %v3043 = vmul.f32 1.0, %v3042
        %v3044 = vrcp.pop %v2987
        %v3045 = vmul.f32 1.0, %v3044
        %v3046 = vrcp.pop %v2988
        %v3047 = vmul.f32 1.0, %v3046
        %v3048 = vrcp.pop %v2989
        %v3049 = vmul.f32 1.0, %v3048
        %v3050 = vrcp.pop %v2990
        %v3051 = vmul.f32 1.0, %v3050
        %v3052 = vrcp.pop %v2991
        %v3053 = vmul.f32 1.0, %v3052
        %v3054 = vrcp.pop %v2992
        %v3055 = vmul.f32 1.0, %v3054
        %v3056 = vrcp.pop %v2993
        %v3057 = vmul.f32 1.0, %v3056
        %v3058 = vmul.f32 %v2708, %v2995
        %v3059 = vmul.f32 %v2713, %v2997
        %v3060 = vmul.f32 %v2718, %v2999
        %v3061 = vmul.f32 %v2723, %v3001
        %v3062 = vmul.f32 %v2728, %v3003
        %v3063 = vmul.f32 %v2733, %v3005
        %v3064 = vmul.f32 %v2738, %v3007
        %v3065 = vmul.f32 %v2743, %v3009
        %v3066 = vmul.f32 %v2748, %v3011
        %v3067 = vmul.f32 %v2753, %v3013
        %v3068 = vmul.f32 %v2758, %v3015
        %v3069 = vmul.f32 %v2763, %v3017
        %v3070 = vmul.f32 %v2768, %v3019
        %v3071 = vmul.f32 %v2773, %v3021
        %v3072 = vmul.f32 %v2778, %v3023
        %v3073 = vmul.f32 %v2783, %v3025
        %v3074 = vmul.f32 %v2788, %v3027
        %v3075 = vmul.f32 %v2793, %v3029
        %v3076 = vmul.f32 %v2798, %v3031
        %v3077 = vmul.f32 %v2803, %v3033
        %v3078 = vmul.f32 %v2808, %v3035
        %v3079 = vmul.f32 %v2813, %v3037
        %v3080 = vmul.f32 %v2818, %v3039
        %v3081 = vmul.f32 %v2823, %v3041
        %v3082 = vmul.f32 %v2828, %v3043
        %v3083 = vmul.f32 %v2833, %v3045
        %v3084 = vmul.f32 %v2838, %v3047
        %v3085 = vmul.f32 %v2843, %v3049
        %v3086 = vmul.f32 %v2848, %v3051
        %v3087 = vmul.f32 %v2853, %v3053
        %v3088 = vmul.f32 %v2858, %v3055
        %v3089 = vmul.f32 %v2863, %v3057
        %v3090 = vld [vmem:[#allocation3] sm:$0xff]
        %v3091 = vld [vmem:[#allocation3 + $0x8] sm:$0xff]
        %v3092 = vld [vmem:[#allocation3 + $0x10] sm:$0xff]
        %v3093 = vld [vmem:[#allocation3 + $0x18] sm:$0xff]
        %v3094 = vld [vmem:[#allocation3 + $0x20] sm:$0xff]
        %v3095 = vld [vmem:[#allocation3 + $0x28] sm:$0xff]
        %v3096 = vld [vmem:[#allocation3 + $0x30] sm:$0xff]
        %v3097 = vld [vmem:[#allocation3 + $0x38] sm:$0xff]
        %v3098 = vld [vmem:[#allocation3 + $0x40] sm:$0xff]
        %v3099 = vld [vmem:[#allocation3 + $0x48] sm:$0xff]
        %v3100 = vld [vmem:[#allocation3 + $0x50] sm:$0xff]
        %v3101 = vld [vmem:[#allocation3 + $0x58] sm:$0xff]
        %v3102 = vld [vmem:[#allocation3 + $0x60] sm:$0xff]
        %v3103 = vld [vmem:[#allocation3 + $0x68] sm:$0xff]
        %v3104 = vld [vmem:[#allocation3 + $0x70] sm:$0xff]
        %v3105 = vld [vmem:[#allocation3 + $0x78] sm:$0xff]
        %v3106 = vld [vmem:[#allocation3 + $0x80] sm:$0xff]
        %v3107 = vld [vmem:[#allocation3 + $0x88] sm:$0xff]
        %v3108 = vld [vmem:[#allocation3 + $0x90] sm:$0xff]
        %v3109 = vld [vmem:[#allocation3 + $0x98] sm:$0xff]
        %v3110 = vld [vmem:[#allocation3 + $0xa0] sm:$0xff]
        %v3111 = vld [vmem:[#allocation3 + $0xa8] sm:$0xff]
        %v3112 = vld [vmem:[#allocation3 + $0xb0] sm:$0xff]
        %v3113 = vld [vmem:[#allocation3 + $0xb8] sm:$0xff]
        %v3114 = vld [vmem:[#allocation3 + $0xc0] sm:$0xff]
        %v3115 = vld [vmem:[#allocation3 + $0xc8] sm:$0xff]
        %v3116 = vld [vmem:[#allocation3 + $0xd0] sm:$0xff]
        %v3117 = vld [vmem:[#allocation3 + $0xd8] sm:$0xff]
        %v3118 = vld [vmem:[#allocation3 + $0xe0] sm:$0xff]
        %v3119 = vld [vmem:[#allocation3 + $0xe8] sm:$0xff]
        %v3120 = vld [vmem:[#allocation3 + $0xf0] sm:$0xff]
        %v3121 = vld [vmem:[#allocation3 + $0xf8] sm:$0xff]
        %v3122 = vld [vmem:[%s484] sm:$0x3]
        %v3123 = vlaneseq
        %v3124 = vshrl.u32 %v3123, 7
        %v3125 = vsub.s32 0, %v3124
        %v3126 = vrot.slane %v3122, %v3125
        %v3127 = vlaneseq
        %v3128 = vshrl.u32 %v3127, 7
        %v3129 = vsub.s32 1, %v3128
        %v3130 = vrot.slane %v3122, %v3129
        %vm3131 = vcmp.eq.s32.totalorder %v3090, %v3126
        %vm3132 = vcmp.eq.s32.totalorder %v3091, %v3130
        %vm3133 = vcmp.eq.s32.totalorder %v3092, %v3126
        %vm3134 = vcmp.eq.s32.totalorder %v3093, %v3130
        %vm3135 = vcmp.eq.s32.totalorder %v3094, %v3126
        %vm3136 = vcmp.eq.s32.totalorder %v3095, %v3130
        %vm3137 = vcmp.eq.s32.totalorder %v3096, %v3126
        %vm3138 = vcmp.eq.s32.totalorder %v3097, %v3130
        %vm3139 = vcmp.eq.s32.totalorder %v3098, %v3126
        %vm3140 = vcmp.eq.s32.totalorder %v3099, %v3130
        %vm3141 = vcmp.eq.s32.totalorder %v3100, %v3126
        %vm3142 = vcmp.eq.s32.totalorder %v3101, %v3130
        %vm3143 = vcmp.eq.s32.totalorder %v3102, %v3126
        %vm3144 = vcmp.eq.s32.totalorder %v3103, %v3130
        %vm3145 = vcmp.eq.s32.totalorder %v3104, %v3126
        %vm3146 = vcmp.eq.s32.totalorder %v3105, %v3130
        %vm3147 = vcmp.eq.s32.totalorder %v3106, %v3126
        %vm3148 = vcmp.eq.s32.totalorder %v3107, %v3130
        %vm3149 = vcmp.eq.s32.totalorder %v3108, %v3126
        %vm3150 = vcmp.eq.s32.totalorder %v3109, %v3130
        %vm3151 = vcmp.eq.s32.totalorder %v3110, %v3126
        %vm3152 = vcmp.eq.s32.totalorder %v3111, %v3130
        %vm3153 = vcmp.eq.s32.totalorder %v3112, %v3126
        %vm3154 = vcmp.eq.s32.totalorder %v3113, %v3130
        %vm3155 = vcmp.eq.s32.totalorder %v3114, %v3126
        %vm3156 = vcmp.eq.s32.totalorder %v3115, %v3130
        %vm3157 = vcmp.eq.s32.totalorder %v3116, %v3126
        %vm3158 = vcmp.eq.s32.totalorder %v3117, %v3130
        %vm3159 = vcmp.eq.s32.totalorder %v3118, %v3126
        %vm3160 = vcmp.eq.s32.totalorder %v3119, %v3130
        %vm3161 = vcmp.eq.s32.totalorder %v3120, %v3126
        %vm3162 = vcmp.eq.s32.totalorder %v3121, %v3130
        %v3163 = vsel %vm3131, 1, 0
        %v3164 = vsel %vm3132, 1, 0
        %v3165 = vsel %vm3133, 1, 0
        %v3166 = vsel %vm3134, 1, 0
        %v3167 = vsel %vm3135, 1, 0
        %v3168 = vsel %vm3136, 1, 0
        %v3169 = vsel %vm3137, 1, 0
        %v3170 = vsel %vm3138, 1, 0
        %v3171 = vsel %vm3139, 1, 0
        %v3172 = vsel %vm3140, 1, 0
        %v3173 = vsel %vm3141, 1, 0
        %v3174 = vsel %vm3142, 1, 0
        %v3175 = vsel %vm3143, 1, 0
        %v3176 = vsel %vm3144, 1, 0
        %v3177 = vsel %vm3145, 1, 0
        %v3178 = vsel %vm3146, 1, 0
        %v3179 = vsel %vm3147, 1, 0
        %v3180 = vsel %vm3148, 1, 0
        %v3181 = vsel %vm3149, 1, 0
        %v3182 = vsel %vm3150, 1, 0
        %v3183 = vsel %vm3151, 1, 0
        %v3184 = vsel %vm3152, 1, 0
        %v3185 = vsel %vm3153, 1, 0
        %v3186 = vsel %vm3154, 1, 0
        %v3187 = vsel %vm3155, 1, 0
        %v3188 = vsel %vm3156, 1, 0
        %v3189 = vsel %vm3157, 1, 0
        %v3190 = vsel %vm3158, 1, 0
        %v3191 = vsel %vm3159, 1, 0
        %v3192 = vsel %vm3160, 1, 0
        %v3193 = vsel %vm3161, 1, 0
        %v3194 = vsel %vm3162, 1, 0
        %v3195 = vcvt.s32.f32 %v3163
        %v3196 = vcvt.s32.f32 %v3164
        %v3197 = vcvt.s32.f32 %v3165
        %v3198 = vcvt.s32.f32 %v3166
        %v3199 = vcvt.s32.f32 %v3167
        %v3200 = vcvt.s32.f32 %v3168
        %v3201 = vcvt.s32.f32 %v3169
        %v3202 = vcvt.s32.f32 %v3170
        %v3203 = vcvt.s32.f32 %v3171
        %v3204 = vcvt.s32.f32 %v3172
        %v3205 = vcvt.s32.f32 %v3173
        %v3206 = vcvt.s32.f32 %v3174
        %v3207 = vcvt.s32.f32 %v3175
        %v3208 = vcvt.s32.f32 %v3176
        %v3209 = vcvt.s32.f32 %v3177
        %v3210 = vcvt.s32.f32 %v3178
        %v3211 = vcvt.s32.f32 %v3179
        %v3212 = vcvt.s32.f32 %v3180
        %v3213 = vcvt.s32.f32 %v3181
        %v3214 = vcvt.s32.f32 %v3182
        %v3215 = vcvt.s32.f32 %v3183
        %v3216 = vcvt.s32.f32 %v3184
        %v3217 = vcvt.s32.f32 %v3185
        %v3218 = vcvt.s32.f32 %v3186
        %v3219 = vcvt.s32.f32 %v3187
        %v3220 = vcvt.s32.f32 %v3188
        %v3221 = vcvt.s32.f32 %v3189
        %v3222 = vcvt.s32.f32 %v3190
        %v3223 = vcvt.s32.f32 %v3191
        %v3224 = vcvt.s32.f32 %v3192
        %v3225 = vcvt.s32.f32 %v3193
        %v3226 = vcvt.s32.f32 %v3194
        %v3227 = vld [vmem:[#allocation4] sm:$0xff]
        %v3228 = vld [vmem:[#allocation4 + $0x8] sm:$0xff]
        %v3229 = vld [vmem:[#allocation4 + $0x10] sm:$0xff]
        %v3230 = vld [vmem:[#allocation4 + $0x18] sm:$0xff]
        %v3231 = vld [vmem:[#allocation4 + $0x20] sm:$0xff]
        %v3232 = vld [vmem:[#allocation4 + $0x28] sm:$0xff]
        %v3233 = vld [vmem:[#allocation4 + $0x30] sm:$0xff]
        %v3234 = vld [vmem:[#allocation4 + $0x38] sm:$0xff]
        %v3235 = vld [vmem:[#allocation4 + $0x40] sm:$0xff]
        %v3236 = vld [vmem:[#allocation4 + $0x48] sm:$0xff]
        %v3237 = vld [vmem:[#allocation4 + $0x50] sm:$0xff]
        %v3238 = vld [vmem:[#allocation4 + $0x58] sm:$0xff]
        %v3239 = vld [vmem:[#allocation4 + $0x60] sm:$0xff]
        %v3240 = vld [vmem:[#allocation4 + $0x68] sm:$0xff]
        %v3241 = vld [vmem:[#allocation4 + $0x70] sm:$0xff]
        %v3242 = vld [vmem:[#allocation4 + $0x78] sm:$0xff]
        %3243 = vmatprep.subr.mxu0 0.0
        %3244 = vmatpush1.msra.mxu0 %v3058
        %3245 = vmatprep.subr.mxu0 0.0
        %3246 = vmatpush1.msra.mxu0 %v3059
        %3247 = vmatprep.subr.mxu0 0.0
        %3248 = vmatpush1.msra.mxu0 %v3060
        %3249 = vmatprep.subr.mxu0 0.0
        %3250 = vmatpush1.msra.mxu0 %v3061
        %3251 = vmatprep.subr.mxu0 0.0
        %3252 = vmatpush1.msra.mxu0 %v3062
        %3253 = vmatprep.subr.mxu0 0.0
        %3254 = vmatpush1.msra.mxu0 %v3063
        %3255 = vmatprep.subr.mxu0 0.0
        %3256 = vmatpush1.msra.mxu0 %v3064
        %3257 = vmatprep.subr.mxu0 0.0
        %3258 = vmatpush1.msra.mxu0 %v3065
        %3259 = vmatprep.subr.mxu0 0.0
        %3260 = vmatpush1.msra.mxu0 %v3066
        %3261 = vmatprep.subr.mxu0 0.0
        %3262 = vmatpush1.msra.mxu0 %v3067
        %3263 = vmatprep.subr.mxu0 0.0
        %3264 = vmatpush1.msra.mxu0 %v3068
        %3265 = vmatprep.subr.mxu0 0.0
        %3266 = vmatpush1.msra.mxu0 %v3069
        %3267 = vmatprep.subr.mxu0 0.0
        %3268 = vmatpush1.msra.mxu0 %v3070
        %3269 = vmatprep.subr.mxu0 0.0
        %3270 = vmatpush1.msra.mxu0 %v3071
        %3271 = vmatprep.subr.mxu0 0.0
        %3272 = vmatpush1.msra.mxu0 %v3072
        %3273 = vmatprep.subr.mxu0 0.0
        %3274 = vmatpush1.msra.mxu0 %v3073
        %3275 = vmatprep.subr.mxu0 0.0
        %3276 = vmatpush1.msra.mxu0 %v3074
        %3277 = vmatprep.subr.mxu0 0.0
        %3278 = vmatpush1.msra.mxu0 %v3075
        %3279 = vmatprep.subr.mxu0 0.0
        %3280 = vmatpush1.msra.mxu0 %v3076
        %3281 = vmatprep.subr.mxu0 0.0
        %3282 = vmatpush1.msra.mxu0 %v3077
        %3283 = vmatprep.subr.mxu0 0.0
        %3284 = vmatpush1.msra.mxu0 %v3078
        %3285 = vmatprep.subr.mxu0 0.0
        %3286 = vmatpush1.msra.mxu0 %v3079
        %3287 = vmatprep.subr.mxu0 0.0
        %3288 = vmatpush1.msra.mxu0 %v3080
        %3289 = vmatprep.subr.mxu0 0.0
        %3290 = vmatpush1.msra.mxu0 %v3081
        %3291 = vmatprep.subr.mxu0 0.0
        %3292 = vmatpush1.msra.mxu0 %v3082
        %3293 = vmatprep.subr.mxu0 0.0
        %3294 = vmatpush1.msra.mxu0 %v3083
        %3295 = vmatprep.subr.mxu0 0.0
        %3296 = vmatpush1.msra.mxu0 %v3084
        %3297 = vmatprep.subr.mxu0 0.0
        %3298 = vmatpush1.msra.mxu0 %v3085
        %3299 = vmatprep.subr.mxu0 0.0
        %3300 = vmatpush1.msra.mxu0 %v3086
        %3301 = vmatprep.subr.mxu0 0.0
        %3302 = vmatpush1.msra.mxu0 %v3087
        %3303 = vmatprep.subr.mxu0 0.0
        %3304 = vmatpush1.msra.mxu0 %v3088
        %3305 = vmatprep.subr.mxu0 0.0
        %3306 = vmatpush1.msra.mxu0 %v3089
        %3307 = vmatprep.mubr.f32.mxu0 %v3196
        %3308 = vmatmul.mubr.f32.gmra.mrb[0].mxu0 %v3195
        %v3309 = vpop.f32.mrb[0].mxu0
        %v3310 = vadd.f32 0.0, %v3309
        %v3311 = vpop.f32.mrb[0].mxu0
        %3312 = vmatprep.mubr.f32.mxu0 %v3198
        %3313 = vmatmul.mubr.f32.gmra.mrb[0].mxu0 %v3197
        %v3314 = vpop.f32.mrb[0].mxu0
        %v3315 = vadd.f32 0.0, %v3314
        %v3316 = vpop.f32.mrb[0].mxu0
        %3317 = vmatprep.mubr.f32.mxu0 %v3200
        %3318 = vmatmul.mubr.f32.gmra.mrb[0].mxu0 %v3199
        %v3319 = vpop.f32.mrb[0].mxu0
        %v3320 = vadd.f32 0.0, %v3319
        %v3321 = vpop.f32.mrb[0].mxu0
        %3322 = vmatprep.mubr.f32.mxu0 %v3202
        %3323 = vmatmul.mubr.f32.gmra.mrb[0].mxu0 %v3201
        %v3324 = vpop.f32.mrb[0].mxu0
        %v3325 = vadd.f32 0.0, %v3324
        %v3326 = vpop.f32.mrb[0].mxu0
        %3327 = vmatprep.mubr.f32.mxu0 %v3204
        %3328 = vmatmul.mubr.f32.gmra.mrb[0].mxu0 %v3203
        %v3329 = vpop.f32.mrb[0].mxu0
        %v3330 = vadd.f32 0.0, %v3329
        %v3331 = vpop.f32.mrb[0].mxu0
        %3332 = vmatprep.mubr.f32.mxu0 %v3206
        %3333 = vmatmul.mubr.f32.gmra.mrb[0].mxu0 %v3205
        %v3334 = vpop.f32.mrb[0].mxu0
        %v3335 = vadd.f32 0.0, %v3334
        %v3336 = vpop.f32.mrb[0].mxu0
        %3337 = vmatprep.mubr.f32.mxu0 %v3208
        %3338 = vmatmul.mubr.f32.gmra.mrb[0].mxu0 %v3207
        %v3339 = vpop.f32.mrb[0].mxu0
        %v3340 = vadd.f32 0.0, %v3339
        %v3341 = vpop.f32.mrb[0].mxu0
        %3342 = vmatprep.mubr.f32.mxu0 %v3210
        %3343 = vmatmul.mubr.f32.gmra.mrb[0].mxu0 %v3209
        %v3344 = vpop.f32.mrb[0].mxu0
        %v3345 = vadd.f32 0.0, %v3344
        %v3346 = vpop.f32.mrb[0].mxu0
        %3347 = vmatprep.mubr.f32.mxu0 %v3212
        %3348 = vmatmul.mubr.f32.gmra.mrb[0].mxu0 %v3211
        %v3349 = vpop.f32.mrb[0].mxu0
        %v3350 = vadd.f32 0.0, %v3349
        %v3351 = vpop.f32.mrb[0].mxu0
        %3352 = vmatprep.mubr.f32.mxu0 %v3214
        %3353 = vmatmul.mubr.f32.gmra.mrb[0].mxu0 %v3213
        %v3354 = vpop.f32.mrb[0].mxu0
        %v3355 = vadd.f32 0.0, %v3354
        %v3356 = vpop.f32.mrb[0].mxu0
        %3357 = vmatprep.mubr.f32.mxu0 %v3216
        %3358 = vmatmul.mubr.f32.gmra.mrb[0].mxu0 %v3215
        %v3359 = vpop.f32.mrb[0].mxu0
        %v3360 = vadd.f32 0.0, %v3359
        %v3361 = vpop.f32.mrb[0].mxu0
        %3362 = vmatprep.mubr.f32.mxu0 %v3218
        %3363 = vmatmul.mubr.f32.gmra.mrb[0].mxu0 %v3217
        %v3364 = vpop.f32.mrb[0].mxu0
        %v3365 = vadd.f32 0.0, %v3364
        %v3366 = vpop.f32.mrb[0].mxu0
        %3367 = vmatprep.mubr.f32.mxu0 %v3220
        %3368 = vmatmul.mubr.f32.gmra.mrb[0].mxu0 %v3219
        %v3369 = vpop.f32.mrb[0].mxu0
        %v3370 = vadd.f32 0.0, %v3369
        %v3371 = vpop.f32.mrb[0].mxu0
        %3372 = vmatprep.mubr.f32.mxu0 %v3222
        %3373 = vmatmul.mubr.f32.gmra.mrb[0].mxu0 %v3221
        %v3374 = vpop.f32.mrb[0].mxu0
        %v3375 = vadd.f32 0.0, %v3374
        %v3376 = vpop.f32.mrb[0].mxu0
        %3377 = vmatprep.mubr.f32.mxu0 %v3224
        %3378 = vmatmul.mubr.f32.gmra.mrb[0].mxu0 %v3223
        %v3379 = vpop.f32.mrb[0].mxu0
        %v3380 = vadd.f32 0.0, %v3379
        %v3381 = vpop.f32.mrb[0].mxu0
        %3382 = vmatprep.mubr.f32.mxu0 %v3226
        %3383 = vmatmul.mubr.f32.gmra.mrb[0].mxu0 %v3225
        %v3384 = vpop.f32.mrb[0].mxu0
        %v3385 = vadd.f32 0.0, %v3384
        %v3386 = vpop.f32.mrb[0].mxu0
        %3387 = vdwg.mxu0
        %v3388 = vadd.f32 %v3227, %v3310
        %v3389 = vadd.f32 %v3228, %v3315
        %v3390 = vadd.f32 %v3229, %v3320
        %v3391 = vadd.f32 %v3230, %v3325
        %v3392 = vadd.f32 %v3231, %v3330
        %v3393 = vadd.f32 %v3232, %v3335
        %v3394 = vadd.f32 %v3233, %v3340
        %v3395 = vadd.f32 %v3234, %v3345
        %v3396 = vadd.f32 %v3235, %v3350
        %v3397 = vadd.f32 %v3236, %v3355
        %v3398 = vadd.f32 %v3237, %v3360
        %v3399 = vadd.f32 %v3238, %v3365
        %v3400 = vadd.f32 %v3239, %v3370
        %v3401 = vadd.f32 %v3240, %v3375
        %v3402 = vadd.f32 %v3241, %v3380
        %v3403 = vadd.f32 %v3242, %v3385
        %3404 = vst [vmem:[#allocation4] sm:$0xff] %v3388
        %3405 = vst [vmem:[#allocation4 + $0x8] sm:$0xff] %v3389
        %3406 = vst [vmem:[#allocation4 + $0x10] sm:$0xff] %v3390
        %3407 = vst [vmem:[#allocation4 + $0x18] sm:$0xff] %v3391
        %3408 = vst [vmem:[#allocation4 + $0x20] sm:$0xff] %v3392
        %3409 = vst [vmem:[#allocation4 + $0x28] sm:$0xff] %v3393
        %3410 = vst [vmem:[#allocation4 + $0x30] sm:$0xff] %v3394
        %3411 = vst [vmem:[#allocation4 + $0x38] sm:$0xff] %v3395
        %3412 = vst [vmem:[#allocation4 + $0x40] sm:$0xff] %v3396
        %3413 = vst [vmem:[#allocation4 + $0x48] sm:$0xff] %v3397
        %3414 = vst [vmem:[#allocation4 + $0x50] sm:$0xff] %v3398
        %3415 = vst [vmem:[#allocation4 + $0x58] sm:$0xff] %v3399
        %3416 = vst [vmem:[#allocation4 + $0x60] sm:$0xff] %v3400
        %3417 = vst [vmem:[#allocation4 + $0x68] sm:$0xff] %v3401
        %3418 = vst [vmem:[#allocation4 + $0x70] sm:$0xff] %v3402
        %3419 = vst [vmem:[#allocation4 + $0x78] sm:$0xff] %v3403
        %p3420 = scmp.eq.s32.totalorder %s30, 1
        // Predicated region
        $region69: #{tpu_custom_call.1} parent=63 // pred_check
          %p3421 = pneg %p3420
        $region70: #{tpu_custom_call.1} parent=63 // pred_check_branch
          %3423 = sbr.rel (%p3421) target = $region72
        $region71: #{tpu_custom_call.1} parent=63 // pred_region
          %v3424 = vld [vmem:[#allocation4] sm:$0xff]
          %v3425 = vld [vmem:[#allocation4 + $0x8] sm:$0xff]
          %v3426 = vld [vmem:[#allocation4 + $0x10] sm:$0xff]
          %v3427 = vld [vmem:[#allocation4 + $0x18] sm:$0xff]
          %v3428 = vld [vmem:[#allocation4 + $0x20] sm:$0xff]
          %v3429 = vld [vmem:[#allocation4 + $0x28] sm:$0xff]
          %v3430 = vld [vmem:[#allocation4 + $0x30] sm:$0xff]
          %v3431 = vld [vmem:[#allocation4 + $0x38] sm:$0xff]
          %v3432 = vld [vmem:[#allocation4 + $0x40] sm:$0xff]
          %v3433 = vld [vmem:[#allocation4 + $0x48] sm:$0xff]
          %v3434 = vld [vmem:[#allocation4 + $0x50] sm:$0xff]
          %v3435 = vld [vmem:[#allocation4 + $0x58] sm:$0xff]
          %v3436 = vld [vmem:[#allocation4 + $0x60] sm:$0xff]
          %v3437 = vld [vmem:[#allocation4 + $0x68] sm:$0xff]
          %v3438 = vld [vmem:[#allocation4 + $0x70] sm:$0xff]
          %v3439 = vld [vmem:[#allocation4 + $0x78] sm:$0xff]
          %3440 = vst [vmem:[%s478] sm:$0xff] %v3424
          %3441 = vst [vmem:[%s478 + $0x8] sm:$0xff] %v3425
          %3442 = vst [vmem:[%s478 + $0x10] sm:$0xff] %v3426
          %3443 = vst [vmem:[%s478 + $0x18] sm:$0xff] %v3427
          %3444 = vst [vmem:[%s478 + $0x20] sm:$0xff] %v3428
          %3445 = vst [vmem:[%s478 + $0x28] sm:$0xff] %v3429
          %3446 = vst [vmem:[%s478 + $0x30] sm:$0xff] %v3430
          %3447 = vst [vmem:[%s478 + $0x38] sm:$0xff] %v3431
          %3448 = vst [vmem:[%s478 + $0x40] sm:$0xff] %v3432
          %3449 = vst [vmem:[%s478 + $0x48] sm:$0xff] %v3433
          %3450 = vst [vmem:[%s478 + $0x50] sm:$0xff] %v3434
          %3451 = vst [vmem:[%s478 + $0x58] sm:$0xff] %v3435
          %3452 = vst [vmem:[%s478 + $0x60] sm:$0xff] %v3436
          %3453 = vst [vmem:[%s478 + $0x68] sm:$0xff] %v3437
          %3454 = vst [vmem:[%s478 + $0x70] sm:$0xff] %v3438
          %3455 = vst [vmem:[%s478 + $0x78] sm:$0xff] %v3439
        $region72: #{tpu_custom_call.1} parent=63 // pred_fallthru
          _
        %s3456 = sand.u32 %s312, 1
        %s3457 = scalar_lea.sflag [#allocation6], %s3456
        %s3458 = sand.u32 %s312, 1
        %s3459 = smul.addr %s3458, 128
        %s3460 = scalar_lea.vmem [#allocation5], %s3459
        // Predicated region
        $region73: #{tpu_custom_call.1} parent=63 // pred_check
          %p3461 = pneg %p322
        $region74: #{tpu_custom_call.1} parent=63 // pred_check_branch
          %3463 = sbr.rel (%p3461) target = $region76
        $region75: #{tpu_custom_call.1} parent=63 // pred_region
          %s3464 = smul.u32 16, %s29
          %s3466 = ssub.s32 2048, 2048
          %3467 = vsyncadd %s3457, %s3466
          %s3468 = smul.addr %s3464, 128
          %s3469 = scalar_lea.hbm %s11, %s3468
          %s3470 = sshll.u32 %s3460, 4
          %s3471 = int_to_ptr.vmem [resolvable:$true] %s3470
          %3476 = dma.vmem_to_hbm [thread:$0]  %s3471, 2048, %s3469, %s3457, 128, 128, 8
        $region76: #{tpu_custom_call.1} parent=63 // pred_fallthru
          _
      $region64: #{tpu_custom_call.1} parent=5 // pred_fallthru
        _
      %p3477 = scmp.le.s32.totalorder 2, %s20
      // Predicated region
      $region77: #{tpu_custom_call.1} parent=5 // pred_check
        %p3478 = pneg %p3477
      $region78: #{tpu_custom_call.1} parent=5 // pred_check_branch
        %3480 = sbr.rel (%p3478) target = $region80
      $region79: #{tpu_custom_call.1} parent=5 // pred_region
        %s3481 = ssub.s32 %s20, 2
        // Predicated region
        $region81: #{tpu_custom_call.1} parent=79 // pred_check
          %p3482 = pneg %p328
        $region82: #{tpu_custom_call.1} parent=79 // pred_check_branch
          %3484 = sbr.rel (%p3482) target = $region84
        $region83: #{tpu_custom_call.1} parent=79 // pred_region
          %s3485 = sand.u32 %s313, 1
          %s3486 = scalar_lea.sflag [#allocation6], %s3485
          %s3487 = sand.u32 %s313, 1
          %s3488 = smul.addr %s3487, 128
          %s3489 = scalar_lea.vmem [#allocation5], %s3488
          %3490 = dma.done %s3486, 2048
        $region84: #{tpu_custom_call.1} parent=79 // pred_fallthru
          _
      $region80: #{tpu_custom_call.1} parent=5 // pred_fallthru
        _
    $region6: #{tpu_custom_call.1} parent=1 // loop_footer
      %s24 = sadd.s32 1, %s20
    $region7: #{tpu_custom_call.1} parent=1 // loop_footer_branch
      %19 = sbr.rel target = $region3
    $region8: #{tpu_custom_call.1} parent=1 // loop_exit
      _
    %3491 = vsyncpa [#allocation6], 1
    %s3492 = scalar_lea.sflag [#allocation6], 1
    %3493 = vsyncpa %s3492, 1

</llo_original>
